<compile_context>
chip_gen: v7x
topology: tpu7x:2x2x1
jax: 0.10.0
libtpu: 0.0.40
codegen_flags: <defaults>
</compile_context>

<pallas_src>
import jax
import jax.numpy as jnp
from jax.experimental import pallas as pl
from jax.experimental.pallas import tpu as pltpu


def _regression_kernel(ids_ref, emb_ref, w12_ref, b12_ref, w3_ref, b3_ref,
                       o_ref, x_scr):
    TB, LE = x_scr.shape                    # (8, L*E)
    E = emb_ref.shape[1]
    L = LE // E
    GROUP = 128 // E                        # embedding rows per 128-lane store
    row0 = pl.program_id(0) * TB            # first batch row of this tile

    # ---- fused embedding gather, lane-aligned stores ------------------------
    # For each batch row, gather GROUP consecutive positions (GROUP*E = 128
    # lanes), concatenate the (1, E) rows into one (1, 128) value and issue a
    # single unmasked full-lane store.  The loop is Python-unrolled
    # (TB * L/GROUP = 32 iterations) so every store offset stays static; only
    # the embedding-table row index (from SMEM) is dynamic.
    for b in range(TB):
        for g in range(L // GROUP):
            rows = [emb_ref[pl.ds(ids_ref[row0 + b, g * GROUP + j], 1), :]
                    for j in range(GROUP)]
            x_scr[b:b + 1, g * 128:(g + 1) * 128] = jnp.concatenate(rows, axis=-1)

    # ---- fused fc1∘fc2 (+ bias) and ReLU: one MXU pass, K = L*E -------------
    h = jnp.dot(x_scr[...], w12_ref[...], preferred_element_type=jnp.float32)
    h = jnp.maximum(h + b12_ref[...], 0.0)          # (TB, 128), lane-dense

    # ---- fc3 as VPU multiply + XLU cross-lane reduce (no N=1 MXU pass) ------
    out = jnp.sum(h * w3_ref[...], axis=-1, keepdims=True) + b3_ref[0, 0]

    # Lane-dense store: broadcast each row's scalar across the 128 lanes so
    # the store is an unmasked full-lane vst; the wrapper slices column 0.
    o_ref[...] = jnp.broadcast_to(out, o_ref.shape).astype(o_ref.dtype)


def fold_params(params):
    """One-time algebraic preprocessing — run once, outside the hot path."""
    lane = 128
    emb = params["embeddings"].astype(jnp.float32)            # (V, E)
    V, E = emb.shape
    Vp = ((V + 7) // 8) * 8                                    # 251 -> 256
    emb_p = jnp.zeros((Vp, E), jnp.float32).at[:V].set(emb)

    # Fold fc1 into fc2 (exact: there is no nonlinearity between them).
    w12 = params["w1"] @ params["w2"]                          # (L*E, 100)
    b12 = params["b1"] @ params["w2"] + params["b2"]           # (1, 100)
    H = w12.shape[1]
    Hp = ((H + lane - 1) // lane) * lane                       # 100 -> 128
    # Zero padding of b12 / w3 columns keeps the padded hidden lanes exactly 0
    # through the ReLU and contributes nothing to fc3 — do not change this.
    w12_p = jnp.zeros((w12.shape[0], Hp), jnp.float32).at[:, :H].set(w12)
    b12_p = jnp.zeros((1, Hp), jnp.float32).at[:, :H].set(b12)
    w3_p = jnp.zeros((1, Hp), jnp.float32).at[:, :H].set(
        params["w3"].reshape(1, H))
    b3 = params["b3"].reshape(1, 1).astype(jnp.float32)
    return dict(emb=emb_p, w12=w12_p, b12=b12_p, w3=w3_p, b3=b3)


def regression_forward(data_ids, fp):
    """data_ids: (B, L) int32 token ids in [0, 251); returns (B, 1) float32."""
    B, L = data_ids.shape
    V = fp["emb"].shape[0]
    E = fp["emb"].shape[1]
    Hp = fp["w12"].shape[1]
    assert fp["w12"].shape[0] == L * E
    # Lane-aligned gather grouping requires E | 128 and (128 // E) | L.
    assert 128 % E == 0 and L % (128 // E) == 0, \
        "gather grouping needs E to divide 128 and (128 // E) to divide L"

    TB = 8                                        # batch rows per grid step
    Bp = ((B + TB - 1) // TB) * TB                # pad rows to full (8,·) tiles
    ids = jnp.zeros((Bp, L), jnp.int32).at[:B].set(
        jnp.clip(data_ids.astype(jnp.int32), 0, V - 1))

    # Constant block index across the grid -> weight tiles fetched once and
    # kept VMEM-resident while id/output tiles pipeline.
    const = lambda a: pl.BlockSpec(a.shape, lambda i, ids_ref: (0,) * a.ndim)
    smem = pl.BlockSpec(memory_space=pltpu.MemorySpace.SMEM)

    out = pl.pallas_call(
        _regression_kernel,
        out_shape=jax.ShapeDtypeStruct((Bp, Hp), jnp.float32),
        grid_spec=pltpu.PrefetchScalarGridSpec(
            num_scalar_prefetch=1,                # ids -> SMEM, visible to all steps
            grid=(Bp // TB,),
            in_specs=[const(fp["emb"]),           # emb  -> VMEM (256, E), resident
                      const(fp["w12"]),           # W12  -> VMEM (L*E, 128), resident
                      const(fp["b12"]),           # b12  -> VMEM (1, 128)
                      const(fp["w3"]),            # w3   -> VMEM (1, 128)
                      smem],                      # b3   -> SMEM scalar
            out_specs=pl.BlockSpec((TB, Hp), lambda i, ids_ref: (i, 0)),
            scratch_shapes=[pltpu.VMEM((TB, L * E), jnp.float32)]),
        compiler_params=pltpu.CompilerParams(
            dimension_semantics=("parallel",)),   # v7x: split batch over 2 TCs
    )(ids, fp["emb"], fp["w12"], fp["b12"], fp["w3"], fp["b3"])
    return out[:B, :1]                            # (B, 1), matches PyTorch module


def init_params(key, embedding_dim, max_length):
    """Deterministic synthetic parameter init (shapes match the PyTorch module)."""
    character_size = 251
    in1 = max_length * embedding_dim
    ks = jax.random.split(key, 7)

    def lin(kw, kb, fan_in, fan_out):
        bound = 1.0 / jnp.sqrt(fan_in)
        # stored pre-transposed: (in, out)
        w = jax.random.uniform(kw, (fan_in, fan_out), jnp.float32, -bound, bound)
        b = jax.random.uniform(kb, (1, fan_out), jnp.float32, -bound, bound)
        return w, b

    emb = jax.random.normal(ks[0], (character_size, embedding_dim), jnp.float32)
    w1, b1 = lin(ks[1], ks[2], in1, 200)
    w2, b2 = lin(ks[3], ks[4], 200, 100)
    w3, b3 = lin(ks[5], ks[6], 100, 1)
    return dict(embeddings=emb, w1=w1, b1=b1, w2=w2, b2=b2, w3=w3, b3=b3)


if __name__ == "__main__":
    embedding_dim = 16
    max_length = 32
    batch = 12          # pads to 16 rows -> 2 grid steps (exercises pipeline)

    key = jax.random.PRNGKey(0)
    kp, kd = jax.random.split(key)
    params = init_params(kp, embedding_dim, max_length)
    folded = fold_params(params)          # once, outside the hot path

    # synthetic "data": batch of token-id sequences (what the PyTorch forward
    # builds via np.array(data) -> LongTensor)
    data_ids = jax.random.randint(kd, (batch, max_length), 0, 251,
                                  dtype=jnp.int32)

    fwd = jax.jit(regression_forward)
    out = fwd(data_ids, folded)
    jax.block_until_ready(out)

    assert out.shape == (batch, 1)
    assert out.dtype == jnp.float32

    # Reference with the ORIGINAL (unfolded) parameters, mirroring PyTorch.
    embeds = jnp.take(params["embeddings"], data_ids, axis=0).reshape(batch, -1)
    h1 = embeds @ params["w1"] + params["b1"]
    h2 = jnp.maximum(h1 @ params["w2"] + params["b2"], 0.0)
    ref = h2 @ params["w3"] + params["b3"]
    assert jnp.allclose(out, ref, atol=1e-4, rtol=1e-4)

    print("KERNEL_OK")
</pallas_src>

<mosaic_0001>
module attributes {stable_mosaic.version = 11 : i64} {
  func.func @_regression_kernel(%arg0: i32, %arg1: memref<16x32xi32, #tpu.memory_space<smem>>, %arg2: memref<256x16xf32, #tpu.memory_space<vmem>>, %arg3: memref<512x128xf32, #tpu.memory_space<vmem>>, %arg4: memref<1x128xf32, #tpu.memory_space<vmem>>, %arg5: memref<1x128xf32, #tpu.memory_space<vmem>>, %arg6: memref<1x1xf32, #tpu.memory_space<smem>>, %arg7: memref<8x128xf32, #tpu.memory_space<vmem>>, %arg8: memref<8x512xf32, #tpu.memory_space<vmem>>) attributes {dimension_semantics = [#tpu.dimension_semantics<parallel>], iteration_bounds = array<i64: 2>, scalar_prefetch = 1 : i64, scratch_operands = 1 : i64, tpu.core_type = #tpu.core_type<tc>, window_params = [{pipeline_mode = #tpu.pipeline_mode<synchronous>, transform_indices = @transform_0, window_bounds = array<i64: 256, 16>}, {pipeline_mode = #tpu.pipeline_mode<synchronous>, transform_indices = @transform_1, window_bounds = array<i64: 512, 128>}, {pipeline_mode = #tpu.pipeline_mode<synchronous>, transform_indices = @transform_2, window_bounds = array<i64: 1, 128>}, {pipeline_mode = #tpu.pipeline_mode<synchronous>, transform_indices = @transform_3, window_bounds = array<i64: 1, 128>}, {transform_indices = @transform_4, window_bounds = array<i64: 1, 1>}, {transform_indices = @transform_5, window_bounds = array<i64: 8, 128>}]} {
    %c8_i32 = arith.constant 8 : i32
    %0 = arith.muli %arg0, %c8_i32 : i32
    %c0_i32 = arith.constant 0 : i32
    %1 = arith.addi %0, %c0_i32 : i32
    %2 = arith.index_cast %1 : i32 to index
    %c0 = arith.constant 0 : index
    %3 = memref.load %arg1[%2, %c0] : memref<16x32xi32, #tpu.memory_space<smem>>
    %4 = arith.index_cast %3 : i32 to index
    %c0_0 = arith.constant 0 : index
    %5 = vector.load %arg2[%4, %c0_0] : memref<256x16xf32, #tpu.memory_space<vmem>>, vector<1x16xf32>
    %c0_i32_1 = arith.constant 0 : i32
    %6 = arith.addi %0, %c0_i32_1 : i32
    %7 = arith.index_cast %6 : i32 to index
    %c1 = arith.constant 1 : index
    %8 = memref.load %arg1[%7, %c1] : memref<16x32xi32, #tpu.memory_space<smem>>
    %9 = arith.index_cast %8 : i32 to index
    %c0_2 = arith.constant 0 : index
    %10 = vector.load %arg2[%9, %c0_2] : memref<256x16xf32, #tpu.memory_space<vmem>>, vector<1x16xf32>
    %c0_i32_3 = arith.constant 0 : i32
    %11 = arith.addi %0, %c0_i32_3 : i32
    %12 = arith.index_cast %11 : i32 to index
    %c2 = arith.constant 2 : index
    %13 = memref.load %arg1[%12, %c2] : memref<16x32xi32, #tpu.memory_space<smem>>
    %14 = arith.index_cast %13 : i32 to index
    %c0_4 = arith.constant 0 : index
    %15 = vector.load %arg2[%14, %c0_4] : memref<256x16xf32, #tpu.memory_space<vmem>>, vector<1x16xf32>
    %c0_i32_5 = arith.constant 0 : i32
    %16 = arith.addi %0, %c0_i32_5 : i32
    %17 = arith.index_cast %16 : i32 to index
    %c3 = arith.constant 3 : index
    %18 = memref.load %arg1[%17, %c3] : memref<16x32xi32, #tpu.memory_space<smem>>
    %19 = arith.index_cast %18 : i32 to index
    %c0_6 = arith.constant 0 : index
    %20 = vector.load %arg2[%19, %c0_6] : memref<256x16xf32, #tpu.memory_space<vmem>>, vector<1x16xf32>
    %c0_i32_7 = arith.constant 0 : i32
    %21 = arith.addi %0, %c0_i32_7 : i32
    %22 = arith.index_cast %21 : i32 to index
    %c4 = arith.constant 4 : index
    %23 = memref.load %arg1[%22, %c4] : memref<16x32xi32, #tpu.memory_space<smem>>
    %24 = arith.index_cast %23 : i32 to index
    %c0_8 = arith.constant 0 : index
    %25 = vector.load %arg2[%24, %c0_8] : memref<256x16xf32, #tpu.memory_space<vmem>>, vector<1x16xf32>
    %c0_i32_9 = arith.constant 0 : i32
    %26 = arith.addi %0, %c0_i32_9 : i32
    %27 = arith.index_cast %26 : i32 to index
    %c5 = arith.constant 5 : index
    %28 = memref.load %arg1[%27, %c5] : memref<16x32xi32, #tpu.memory_space<smem>>
    %29 = arith.index_cast %28 : i32 to index
    %c0_10 = arith.constant 0 : index
    %30 = vector.load %arg2[%29, %c0_10] : memref<256x16xf32, #tpu.memory_space<vmem>>, vector<1x16xf32>
    %c0_i32_11 = arith.constant 0 : i32
    %31 = arith.addi %0, %c0_i32_11 : i32
    %32 = arith.index_cast %31 : i32 to index
    %c6 = arith.constant 6 : index
    %33 = memref.load %arg1[%32, %c6] : memref<16x32xi32, #tpu.memory_space<smem>>
    %34 = arith.index_cast %33 : i32 to index
    %c0_12 = arith.constant 0 : index
    %35 = vector.load %arg2[%34, %c0_12] : memref<256x16xf32, #tpu.memory_space<vmem>>, vector<1x16xf32>
    %c0_i32_13 = arith.constant 0 : i32
    %36 = arith.addi %0, %c0_i32_13 : i32
    %37 = arith.index_cast %36 : i32 to index
    %c7 = arith.constant 7 : index
    %38 = memref.load %arg1[%37, %c7] : memref<16x32xi32, #tpu.memory_space<smem>>
    %39 = arith.index_cast %38 : i32 to index
    %c0_14 = arith.constant 0 : index
    %40 = vector.load %arg2[%39, %c0_14] : memref<256x16xf32, #tpu.memory_space<vmem>>, vector<1x16xf32>
    %41 = tpu.concatenate %5, %10, %15, %20, %25, %30, %35, %40 in 1 : vector<1x16xf32>, vector<1x16xf32>, vector<1x16xf32>, vector<1x16xf32>, vector<1x16xf32>, vector<1x16xf32>, vector<1x16xf32>, vector<1x16xf32> -> vector<1x128xf32>
    %c0_15 = arith.constant 0 : index
    %c0_16 = arith.constant 0 : index
    %42 = vector.load %arg8[%c0_15, %c0_16] : memref<8x512xf32, #tpu.memory_space<vmem>>, vector<1x128xf32>
    tpu.vector_store %arg8[%c0_15, %c0_16], %41 {strides = array<i32>} : memref<8x512xf32, #tpu.memory_space<vmem>>, vector<1x128xf32>,
    %c0_i32_17 = arith.constant 0 : i32
    %43 = arith.addi %0, %c0_i32_17 : i32
    %44 = arith.index_cast %43 : i32 to index
    %c8 = arith.constant 8 : index
    %45 = memref.load %arg1[%44, %c8] : memref<16x32xi32, #tpu.memory_space<smem>>
    %46 = arith.index_cast %45 : i32 to index
    %c0_18 = arith.constant 0 : index
    %47 = vector.load %arg2[%46, %c0_18] : memref<256x16xf32, #tpu.memory_space<vmem>>, vector<1x16xf32>
    %c0_i32_19 = arith.constant 0 : i32
    %48 = arith.addi %0, %c0_i32_19 : i32
    %49 = arith.index_cast %48 : i32 to index
    %c9 = arith.constant 9 : index
    %50 = memref.load %arg1[%49, %c9] : memref<16x32xi32, #tpu.memory_space<smem>>
    %51 = arith.index_cast %50 : i32 to index
    %c0_20 = arith.constant 0 : index
    %52 = vector.load %arg2[%51, %c0_20] : memref<256x16xf32, #tpu.memory_space<vmem>>, vector<1x16xf32>
    %c0_i32_21 = arith.constant 0 : i32
    %53 = arith.addi %0, %c0_i32_21 : i32
    %54 = arith.index_cast %53 : i32 to index
    %c10 = arith.constant 10 : index
    %55 = memref.load %arg1[%54, %c10] : memref<16x32xi32, #tpu.memory_space<smem>>
    %56 = arith.index_cast %55 : i32 to index
    %c0_22 = arith.constant 0 : index
    %57 = vector.load %arg2[%56, %c0_22] : memref<256x16xf32, #tpu.memory_space<vmem>>, vector<1x16xf32>
    %c0_i32_23 = arith.constant 0 : i32
    %58 = arith.addi %0, %c0_i32_23 : i32
    %59 = arith.index_cast %58 : i32 to index
    %c11 = arith.constant 11 : index
    %60 = memref.load %arg1[%59, %c11] : memref<16x32xi32, #tpu.memory_space<smem>>
    %61 = arith.index_cast %60 : i32 to index
    %c0_24 = arith.constant 0 : index
    %62 = vector.load %arg2[%61, %c0_24] : memref<256x16xf32, #tpu.memory_space<vmem>>, vector<1x16xf32>
    %c0_i32_25 = arith.constant 0 : i32
    %63 = arith.addi %0, %c0_i32_25 : i32
    %64 = arith.index_cast %63 : i32 to index
    %c12 = arith.constant 12 : index
    %65 = memref.load %arg1[%64, %c12] : memref<16x32xi32, #tpu.memory_space<smem>>
    %66 = arith.index_cast %65 : i32 to index
    %c0_26 = arith.constant 0 : index
    %67 = vector.load %arg2[%66, %c0_26] : memref<256x16xf32, #tpu.memory_space<vmem>>, vector<1x16xf32>
    %c0_i32_27 = arith.constant 0 : i32
    %68 = arith.addi %0, %c0_i32_27 : i32
    %69 = arith.index_cast %68 : i32 to index
    %c13 = arith.constant 13 : index
    %70 = memref.load %arg1[%69, %c13] : memref<16x32xi32, #tpu.memory_space<smem>>
    %71 = arith.index_cast %70 : i32 to index
    %c0_28 = arith.constant 0 : index
    %72 = vector.load %arg2[%71, %c0_28] : memref<256x16xf32, #tpu.memory_space<vmem>>, vector<1x16xf32>
    %c0_i32_29 = arith.constant 0 : i32
    %73 = arith.addi %0, %c0_i32_29 : i32
    %74 = arith.index_cast %73 : i32 to index
    %c14 = arith.constant 14 : index
    %75 = memref.load %arg1[%74, %c14] : memref<16x32xi32, #tpu.memory_space<smem>>
    %76 = arith.index_cast %75 : i32 to index
    %c0_30 = arith.constant 0 : index
    %77 = vector.load %arg2[%76, %c0_30] : memref<256x16xf32, #tpu.memory_space<vmem>>, vector<1x16xf32>
    %c0_i32_31 = arith.constant 0 : i32
    %78 = arith.addi %0, %c0_i32_31 : i32
    %79 = arith.index_cast %78 : i32 to index
    %c15 = arith.constant 15 : index
    %80 = memref.load %arg1[%79, %c15] : memref<16x32xi32, #tpu.memory_space<smem>>
    %81 = arith.index_cast %80 : i32 to index
    %c0_32 = arith.constant 0 : index
    %82 = vector.load %arg2[%81, %c0_32] : memref<256x16xf32, #tpu.memory_space<vmem>>, vector<1x16xf32>
    %83 = tpu.concatenate %47, %52, %57, %62, %67, %72, %77, %82 in 1 : vector<1x16xf32>, vector<1x16xf32>, vector<1x16xf32>, vector<1x16xf32>, vector<1x16xf32>, vector<1x16xf32>, vector<1x16xf32>, vector<1x16xf32> -> vector<1x128xf32>
    %c0_33 = arith.constant 0 : index
    %c128 = arith.constant 128 : index
    %84 = vector.load %arg8[%c0_33, %c128] : memref<8x512xf32, #tpu.memory_space<vmem>>, vector<1x128xf32>
    tpu.vector_store %arg8[%c0_33, %c128], %83 {strides = array<i32>} : memref<8x512xf32, #tpu.memory_space<vmem>>, vector<1x128xf32>,
    %c0_i32_34 = arith.constant 0 : i32
    %85 = arith.addi %0, %c0_i32_34 : i32
    %86 = arith.index_cast %85 : i32 to index
    %c16 = arith.constant 16 : index
    %87 = memref.load %arg1[%86, %c16] : memref<16x32xi32, #tpu.memory_space<smem>>
    %88 = arith.index_cast %87 : i32 to index
    %c0_35 = arith.constant 0 : index
    %89 = vector.load %arg2[%88, %c0_35] : memref<256x16xf32, #tpu.memory_space<vmem>>, vector<1x16xf32>
    %c0_i32_36 = arith.constant 0 : i32
    %90 = arith.addi %0, %c0_i32_36 : i32
    %91 = arith.index_cast %90 : i32 to index
    %c17 = arith.constant 17 : index
    %92 = memref.load %arg1[%91, %c17] : memref<16x32xi32, #tpu.memory_space<smem>>
    %93 = arith.index_cast %92 : i32 to index
    %c0_37 = arith.constant 0 : index
    %94 = vector.load %arg2[%93, %c0_37] : memref<256x16xf32, #tpu.memory_space<vmem>>, vector<1x16xf32>
    %c0_i32_38 = arith.constant 0 : i32
    %95 = arith.addi %0, %c0_i32_38 : i32
    %96 = arith.index_cast %95 : i32 to index
    %c18 = arith.constant 18 : index
    %97 = memref.load %arg1[%96, %c18] : memref<16x32xi32, #tpu.memory_space<smem>>
    %98 = arith.index_cast %97 : i32 to index
    %c0_39 = arith.constant 0 : index
    %99 = vector.load %arg2[%98, %c0_39] : memref<256x16xf32, #tpu.memory_space<vmem>>, vector<1x16xf32>
    %c0_i32_40 = arith.constant 0 : i32
    %100 = arith.addi %0, %c0_i32_40 : i32
    %101 = arith.index_cast %100 : i32 to index
    %c19 = arith.constant 19 : index
    %102 = memref.load %arg1[%101, %c19] : memref<16x32xi32, #tpu.memory_space<smem>>
    %103 = arith.index_cast %102 : i32 to index
    %c0_41 = arith.constant 0 : index
    %104 = vector.load %arg2[%103, %c0_41] : memref<256x16xf32, #tpu.memory_space<vmem>>, vector<1x16xf32>
    %c0_i32_42 = arith.constant 0 : i32
    %105 = arith.addi %0, %c0_i32_42 : i32
    %106 = arith.index_cast %105 : i32 to index
    %c20 = arith.constant 20 : index
    %107 = memref.load %arg1[%106, %c20] : memref<16x32xi32, #tpu.memory_space<smem>>
    %108 = arith.index_cast %107 : i32 to index
    %c0_43 = arith.constant 0 : index
    %109 = vector.load %arg2[%108, %c0_43] : memref<256x16xf32, #tpu.memory_space<vmem>>, vector<1x16xf32>
    %c0_i32_44 = arith.constant 0 : i32
    %110 = arith.addi %0, %c0_i32_44 : i32
    %111 = arith.index_cast %110 : i32 to index
    %c21 = arith.constant 21 : index
    %112 = memref.load %arg1[%111, %c21] : memref<16x32xi32, #tpu.memory_space<smem>>
    %113 = arith.index_cast %112 : i32 to index
    %c0_45 = arith.constant 0 : index
    %114 = vector.load %arg2[%113, %c0_45] : memref<256x16xf32, #tpu.memory_space<vmem>>, vector<1x16xf32>
    %c0_i32_46 = arith.constant 0 : i32
    %115 = arith.addi %0, %c0_i32_46 : i32
    %116 = arith.index_cast %115 : i32 to index
    %c22 = arith.constant 22 : index
    %117 = memref.load %arg1[%116, %c22] : memref<16x32xi32, #tpu.memory_space<smem>>
    %118 = arith.index_cast %117 : i32 to index
    %c0_47 = arith.constant 0 : index
    %119 = vector.load %arg2[%118, %c0_47] : memref<256x16xf32, #tpu.memory_space<vmem>>, vector<1x16xf32>
    %c0_i32_48 = arith.constant 0 : i32
    %120 = arith.addi %0, %c0_i32_48 : i32
    %121 = arith.index_cast %120 : i32 to index
    %c23 = arith.constant 23 : index
    %122 = memref.load %arg1[%121, %c23] : memref<16x32xi32, #tpu.memory_space<smem>>
    %123 = arith.index_cast %122 : i32 to index
    %c0_49 = arith.constant 0 : index
    %124 = vector.load %arg2[%123, %c0_49] : memref<256x16xf32, #tpu.memory_space<vmem>>, vector<1x16xf32>
    %125 = tpu.concatenate %89, %94, %99, %104, %109, %114, %119, %124 in 1 : vector<1x16xf32>, vector<1x16xf32>, vector<1x16xf32>, vector<1x16xf32>, vector<1x16xf32>, vector<1x16xf32>, vector<1x16xf32>, vector<1x16xf32> -> vector<1x128xf32>
    %c0_50 = arith.constant 0 : index
    %c256 = arith.constant 256 : index
    %126 = vector.load %arg8[%c0_50, %c256] : memref<8x512xf32, #tpu.memory_space<vmem>>, vector<1x128xf32>
    tpu.vector_store %arg8[%c0_50, %c256], %125 {strides = array<i32>} : memref<8x512xf32, #tpu.memory_space<vmem>>, vector<1x128xf32>,
    %c0_i32_51 = arith.constant 0 : i32
    %127 = arith.addi %0, %c0_i32_51 : i32
    %128 = arith.index_cast %127 : i32 to index
    %c24 = arith.constant 24 : index
    %129 = memref.load %arg1[%128, %c24] : memref<16x32xi32, #tpu.memory_space<smem>>
    %130 = arith.index_cast %129 : i32 to index
    %c0_52 = arith.constant 0 : index
    %131 = vector.load %arg2[%130, %c0_52] : memref<256x16xf32, #tpu.memory_space<vmem>>, vector<1x16xf32>
    %c0_i32_53 = arith.constant 0 : i32
    %132 = arith.addi %0, %c0_i32_53 : i32
    %133 = arith.index_cast %132 : i32 to index
    %c25 = arith.constant 25 : index
    %134 = memref.load %arg1[%133, %c25] : memref<16x32xi32, #tpu.memory_space<smem>>
    %135 = arith.index_cast %134 : i32 to index
    %c0_54 = arith.constant 0 : index
    %136 = vector.load %arg2[%135, %c0_54] : memref<256x16xf32, #tpu.memory_space<vmem>>, vector<1x16xf32>
    %c0_i32_55 = arith.constant 0 : i32
    %137 = arith.addi %0, %c0_i32_55 : i32
    %138 = arith.index_cast %137 : i32 to index
    %c26 = arith.constant 26 : index
    %139 = memref.load %arg1[%138, %c26] : memref<16x32xi32, #tpu.memory_space<smem>>
    %140 = arith.index_cast %139 : i32 to index
    %c0_56 = arith.constant 0 : index
    %141 = vector.load %arg2[%140, %c0_56] : memref<256x16xf32, #tpu.memory_space<vmem>>, vector<1x16xf32>
    %c0_i32_57 = arith.constant 0 : i32
    %142 = arith.addi %0, %c0_i32_57 : i32
    %143 = arith.index_cast %142 : i32 to index
    %c27 = arith.constant 27 : index
    %144 = memref.load %arg1[%143, %c27] : memref<16x32xi32, #tpu.memory_space<smem>>
    %145 = arith.index_cast %144 : i32 to index
    %c0_58 = arith.constant 0 : index
    %146 = vector.load %arg2[%145, %c0_58] : memref<256x16xf32, #tpu.memory_space<vmem>>, vector<1x16xf32>
    %c0_i32_59 = arith.constant 0 : i32
    %147 = arith.addi %0, %c0_i32_59 : i32
    %148 = arith.index_cast %147 : i32 to index
    %c28 = arith.constant 28 : index
    %149 = memref.load %arg1[%148, %c28] : memref<16x32xi32, #tpu.memory_space<smem>>
    %150 = arith.index_cast %149 : i32 to index
    %c0_60 = arith.constant 0 : index
    %151 = vector.load %arg2[%150, %c0_60] : memref<256x16xf32, #tpu.memory_space<vmem>>, vector<1x16xf32>
    %c0_i32_61 = arith.constant 0 : i32
    %152 = arith.addi %0, %c0_i32_61 : i32
    %153 = arith.index_cast %152 : i32 to index
    %c29 = arith.constant 29 : index
    %154 = memref.load %arg1[%153, %c29] : memref<16x32xi32, #tpu.memory_space<smem>>
    %155 = arith.index_cast %154 : i32 to index
    %c0_62 = arith.constant 0 : index
    %156 = vector.load %arg2[%155, %c0_62] : memref<256x16xf32, #tpu.memory_space<vmem>>, vector<1x16xf32>
    %c0_i32_63 = arith.constant 0 : i32
    %157 = arith.addi %0, %c0_i32_63 : i32
    %158 = arith.index_cast %157 : i32 to index
    %c30 = arith.constant 30 : index
    %159 = memref.load %arg1[%158, %c30] : memref<16x32xi32, #tpu.memory_space<smem>>
    %160 = arith.index_cast %159 : i32 to index
    %c0_64 = arith.constant 0 : index
    %161 = vector.load %arg2[%160, %c0_64] : memref<256x16xf32, #tpu.memory_space<vmem>>, vector<1x16xf32>
    %c0_i32_65 = arith.constant 0 : i32
    %162 = arith.addi %0, %c0_i32_65 : i32
    %163 = arith.index_cast %162 : i32 to index
    %c31 = arith.constant 31 : index
    %164 = memref.load %arg1[%163, %c31] : memref<16x32xi32, #tpu.memory_space<smem>>
    %165 = arith.index_cast %164 : i32 to index
    %c0_66 = arith.constant 0 : index
    %166 = vector.load %arg2[%165, %c0_66] : memref<256x16xf32, #tpu.memory_space<vmem>>, vector<1x16xf32>
    %167 = tpu.concatenate %131, %136, %141, %146, %151, %156, %161, %166 in 1 : vector<1x16xf32>, vector<1x16xf32>, vector<1x16xf32>, vector<1x16xf32>, vector<1x16xf32>, vector<1x16xf32>, vector<1x16xf32>, vector<1x16xf32> -> vector<1x128xf32>
    %c0_67 = arith.constant 0 : index
    %c384 = arith.constant 384 : index
    %168 = vector.load %arg8[%c0_67, %c384] : memref<8x512xf32, #tpu.memory_space<vmem>>, vector<1x128xf32>
    tpu.vector_store %arg8[%c0_67, %c384], %167 {strides = array<i32>} : memref<8x512xf32, #tpu.memory_space<vmem>>, vector<1x128xf32>,
    %c1_i32 = arith.constant 1 : i32
    %169 = arith.addi %0, %c1_i32 : i32
    %170 = arith.index_cast %169 : i32 to index
    %c0_68 = arith.constant 0 : index
    %171 = memref.load %arg1[%170, %c0_68] : memref<16x32xi32, #tpu.memory_space<smem>>
    %172 = arith.index_cast %171 : i32 to index
    %c0_69 = arith.constant 0 : index
    %173 = vector.load %arg2[%172, %c0_69] : memref<256x16xf32, #tpu.memory_space<vmem>>, vector<1x16xf32>
    %c1_i32_70 = arith.constant 1 : i32
    %174 = arith.addi %0, %c1_i32_70 : i32
    %175 = arith.index_cast %174 : i32 to index
    %c1_71 = arith.constant 1 : index
    %176 = memref.load %arg1[%175, %c1_71] : memref<16x32xi32, #tpu.memory_space<smem>>
    %177 = arith.index_cast %176 : i32 to index
    %c0_72 = arith.constant 0 : index
    %178 = vector.load %arg2[%177, %c0_72] : memref<256x16xf32, #tpu.memory_space<vmem>>, vector<1x16xf32>
    %c1_i32_73 = arith.constant 1 : i32
    %179 = arith.addi %0, %c1_i32_73 : i32
    %180 = arith.index_cast %179 : i32 to index
    %c2_74 = arith.constant 2 : index
    %181 = memref.load %arg1[%180, %c2_74] : memref<16x32xi32, #tpu.memory_space<smem>>
    %182 = arith.index_cast %181 : i32 to index
    %c0_75 = arith.constant 0 : index
    %183 = vector.load %arg2[%182, %c0_75] : memref<256x16xf32, #tpu.memory_space<vmem>>, vector<1x16xf32>
    %c1_i32_76 = arith.constant 1 : i32
    %184 = arith.addi %0, %c1_i32_76 : i32
    %185 = arith.index_cast %184 : i32 to index
    %c3_77 = arith.constant 3 : index
    %186 = memref.load %arg1[%185, %c3_77] : memref<16x32xi32, #tpu.memory_space<smem>>
    %187 = arith.index_cast %186 : i32 to index
    %c0_78 = arith.constant 0 : index
    %188 = vector.load %arg2[%187, %c0_78] : memref<256x16xf32, #tpu.memory_space<vmem>>, vector<1x16xf32>
    %c1_i32_79 = arith.constant 1 : i32
    %189 = arith.addi %0, %c1_i32_79 : i32
    %190 = arith.index_cast %189 : i32 to index
    %c4_80 = arith.constant 4 : index
    %191 = memref.load %arg1[%190, %c4_80] : memref<16x32xi32, #tpu.memory_space<smem>>
    %192 = arith.index_cast %191 : i32 to index
    %c0_81 = arith.constant 0 : index
    %193 = vector.load %arg2[%192, %c0_81] : memref<256x16xf32, #tpu.memory_space<vmem>>, vector<1x16xf32>
    %c1_i32_82 = arith.constant 1 : i32
    %194 = arith.addi %0, %c1_i32_82 : i32
    %195 = arith.index_cast %194 : i32 to index
    %c5_83 = arith.constant 5 : index
    %196 = memref.load %arg1[%195, %c5_83] : memref<16x32xi32, #tpu.memory_space<smem>>
    %197 = arith.index_cast %196 : i32 to index
    %c0_84 = arith.constant 0 : index
    %198 = vector.load %arg2[%197, %c0_84] : memref<256x16xf32, #tpu.memory_space<vmem>>, vector<1x16xf32>
    %c1_i32_85 = arith.constant 1 : i32
    %199 = arith.addi %0, %c1_i32_85 : i32
    %200 = arith.index_cast %199 : i32 to index
    %c6_86 = arith.constant 6 : index
    %201 = memref.load %arg1[%200, %c6_86] : memref<16x32xi32, #tpu.memory_space<smem>>
    %202 = arith.index_cast %201 : i32 to index
    %c0_87 = arith.constant 0 : index
    %203 = vector.load %arg2[%202, %c0_87] : memref<256x16xf32, #tpu.memory_space<vmem>>, vector<1x16xf32>
    %c1_i32_88 = arith.constant 1 : i32
    %204 = arith.addi %0, %c1_i32_88 : i32
    %205 = arith.index_cast %204 : i32 to index
    %c7_89 = arith.constant 7 : index
    %206 = memref.load %arg1[%205, %c7_89] : memref<16x32xi32, #tpu.memory_space<smem>>
    %207 = arith.index_cast %206 : i32 to index
    %c0_90 = arith.constant 0 : index
    %208 = vector.load %arg2[%207, %c0_90] : memref<256x16xf32, #tpu.memory_space<vmem>>, vector<1x16xf32>
    %209 = tpu.concatenate %173, %178, %183, %188, %193, %198, %203, %208 in 1 : vector<1x16xf32>, vector<1x16xf32>, vector<1x16xf32>, vector<1x16xf32>, vector<1x16xf32>, vector<1x16xf32>, vector<1x16xf32>, vector<1x16xf32> -> vector<1x128xf32>
    %c1_91 = arith.constant 1 : index
    %c0_92 = arith.constant 0 : index
    %210 = vector.load %arg8[%c1_91, %c0_92] : memref<8x512xf32, #tpu.memory_space<vmem>>, vector<1x128xf32>
    tpu.vector_store %arg8[%c1_91, %c0_92], %209 {strides = array<i32>} : memref<8x512xf32, #tpu.memory_space<vmem>>, vector<1x128xf32>,
    %c1_i32_93 = arith.constant 1 : i32
    %211 = arith.addi %0, %c1_i32_93 : i32
    %212 = arith.index_cast %211 : i32 to index
    %c8_94 = arith.constant 8 : index
    %213 = memref.load %arg1[%212, %c8_94] : memref<16x32xi32, #tpu.memory_space<smem>>
    %214 = arith.index_cast %213 : i32 to index
    %c0_95 = arith.constant 0 : index
    %215 = vector.load %arg2[%214, %c0_95] : memref<256x16xf32, #tpu.memory_space<vmem>>, vector<1x16xf32>
    %c1_i32_96 = arith.constant 1 : i32
    %216 = arith.addi %0, %c1_i32_96 : i32
    %217 = arith.index_cast %216 : i32 to index
    %c9_97 = arith.constant 9 : index
    %218 = memref.load %arg1[%217, %c9_97] : memref<16x32xi32, #tpu.memory_space<smem>>
    %219 = arith.index_cast %218 : i32 to index
    %c0_98 = arith.constant 0 : index
    %220 = vector.load %arg2[%219, %c0_98] : memref<256x16xf32, #tpu.memory_space<vmem>>, vector<1x16xf32>
    %c1_i32_99 = arith.constant 1 : i32
    %221 = arith.addi %0, %c1_i32_99 : i32
    %222 = arith.index_cast %221 : i32 to index
    %c10_100 = arith.constant 10 : index
    %223 = memref.load %arg1[%222, %c10_100] : memref<16x32xi32, #tpu.memory_space<smem>>
    %224 = arith.index_cast %223 : i32 to index
    %c0_101 = arith.constant 0 : index
    %225 = vector.load %arg2[%224, %c0_101] : memref<256x16xf32, #tpu.memory_space<vmem>>, vector<1x16xf32>
    %c1_i32_102 = arith.constant 1 : i32
    %226 = arith.addi %0, %c1_i32_102 : i32
    %227 = arith.index_cast %226 : i32 to index
    %c11_103 = arith.constant 11 : index
    %228 = memref.load %arg1[%227, %c11_103] : memref<16x32xi32, #tpu.memory_space<smem>>
    %229 = arith.index_cast %228 : i32 to index
    %c0_104 = arith.constant 0 : index
    %230 = vector.load %arg2[%229, %c0_104] : memref<256x16xf32, #tpu.memory_space<vmem>>, vector<1x16xf32>
    %c1_i32_105 = arith.constant 1 : i32
    %231 = arith.addi %0, %c1_i32_105 : i32
    %232 = arith.index_cast %231 : i32 to index
    %c12_106 = arith.constant 12 : index
    %233 = memref.load %arg1[%232, %c12_106] : memref<16x32xi32, #tpu.memory_space<smem>>
    %234 = arith.index_cast %233 : i32 to index
    %c0_107 = arith.constant 0 : index
    %235 = vector.load %arg2[%234, %c0_107] : memref<256x16xf32, #tpu.memory_space<vmem>>, vector<1x16xf32>
    %c1_i32_108 = arith.constant 1 : i32
    %236 = arith.addi %0, %c1_i32_108 : i32
    %237 = arith.index_cast %236 : i32 to index
    %c13_109 = arith.constant 13 : index
    %238 = memref.load %arg1[%237, %c13_109] : memref<16x32xi32, #tpu.memory_space<smem>>
    %239 = arith.index_cast %238 : i32 to index
    %c0_110 = arith.constant 0 : index
    %240 = vector.load %arg2[%239, %c0_110] : memref<256x16xf32, #tpu.memory_space<vmem>>, vector<1x16xf32>
    %c1_i32_111 = arith.constant 1 : i32
    %241 = arith.addi %0, %c1_i32_111 : i32
    %242 = arith.index_cast %241 : i32 to index
    %c14_112 = arith.constant 14 : index
    %243 = memref.load %arg1[%242, %c14_112] : memref<16x32xi32, #tpu.memory_space<smem>>
    %244 = arith.index_cast %243 : i32 to index
    %c0_113 = arith.constant 0 : index
    %245 = vector.load %arg2[%244, %c0_113] : memref<256x16xf32, #tpu.memory_space<vmem>>, vector<1x16xf32>
    %c1_i32_114 = arith.constant 1 : i32
    %246 = arith.addi %0, %c1_i32_114 : i32
    %247 = arith.index_cast %246 : i32 to index
    %c15_115 = arith.constant 15 : index
    %248 = memref.load %arg1[%247, %c15_115] : memref<16x32xi32, #tpu.memory_space<smem>>
    %249 = arith.index_cast %248 : i32 to index
    %c0_116 = arith.constant 0 : index
    %250 = vector.load %arg2[%249, %c0_116] : memref<256x16xf32, #tpu.memory_space<vmem>>, vector<1x16xf32>
    %251 = tpu.concatenate %215, %220, %225, %230, %235, %240, %245, %250 in 1 : vector<1x16xf32>, vector<1x16xf32>, vector<1x16xf32>, vector<1x16xf32>, vector<1x16xf32>, vector<1x16xf32>, vector<1x16xf32>, vector<1x16xf32> -> vector<1x128xf32>
    %c1_117 = arith.constant 1 : index
    %c128_118 = arith.constant 128 : index
    %252 = vector.load %arg8[%c1_117, %c128_118] : memref<8x512xf32, #tpu.memory_space<vmem>>, vector<1x128xf32>
    tpu.vector_store %arg8[%c1_117, %c128_118], %251 {strides = array<i32>} : memref<8x512xf32, #tpu.memory_space<vmem>>, vector<1x128xf32>,
    %c1_i32_119 = arith.constant 1 : i32
    %253 = arith.addi %0, %c1_i32_119 : i32
    %254 = arith.index_cast %253 : i32 to index
    %c16_120 = arith.constant 16 : index
    %255 = memref.load %arg1[%254, %c16_120] : memref<16x32xi32, #tpu.memory_space<smem>>
    %256 = arith.index_cast %255 : i32 to index
    %c0_121 = arith.constant 0 : index
    %257 = vector.load %arg2[%256, %c0_121] : memref<256x16xf32, #tpu.memory_space<vmem>>, vector<1x16xf32>
    %c1_i32_122 = arith.constant 1 : i32
    %258 = arith.addi %0, %c1_i32_122 : i32
    %259 = arith.index_cast %258 : i32 to index
    %c17_123 = arith.constant 17 : index
    %260 = memref.load %arg1[%259, %c17_123] : memref<16x32xi32, #tpu.memory_space<smem>>
    %261 = arith.index_cast %260 : i32 to index
    %c0_124 = arith.constant 0 : index
    %262 = vector.load %arg2[%261, %c0_124] : memref<256x16xf32, #tpu.memory_space<vmem>>, vector<1x16xf32>
    %c1_i32_125 = arith.constant 1 : i32
    %263 = arith.addi %0, %c1_i32_125 : i32
    %264 = arith.index_cast %263 : i32 to index
    %c18_126 = arith.constant 18 : index
    %265 = memref.load %arg1[%264, %c18_126] : memref<16x32xi32, #tpu.memory_space<smem>>
    %266 = arith.index_cast %265 : i32 to index
    %c0_127 = arith.constant 0 : index
    %267 = vector.load %arg2[%266, %c0_127] : memref<256x16xf32, #tpu.memory_space<vmem>>, vector<1x16xf32>
    %c1_i32_128 = arith.constant 1 : i32
    %268 = arith.addi %0, %c1_i32_128 : i32
    %269 = arith.index_cast %268 : i32 to index
    %c19_129 = arith.constant 19 : index
    %270 = memref.load %arg1[%269, %c19_129] : memref<16x32xi32, #tpu.memory_space<smem>>
    %271 = arith.index_cast %270 : i32 to index
    %c0_130 = arith.constant 0 : index
    %272 = vector.load %arg2[%271, %c0_130] : memref<256x16xf32, #tpu.memory_space<vmem>>, vector<1x16xf32>
    %c1_i32_131 = arith.constant 1 : i32
    %273 = arith.addi %0, %c1_i32_131 : i32
    %274 = arith.index_cast %273 : i32 to index
    %c20_132 = arith.constant 20 : index
    %275 = memref.load %arg1[%274, %c20_132] : memref<16x32xi32, #tpu.memory_space<smem>>
    %276 = arith.index_cast %275 : i32 to index
    %c0_133 = arith.constant 0 : index
    %277 = vector.load %arg2[%276, %c0_133] : memref<256x16xf32, #tpu.memory_space<vmem>>, vector<1x16xf32>
    %c1_i32_134 = arith.constant 1 : i32
    %278 = arith.addi %0, %c1_i32_134 : i32
    %279 = arith.index_cast %278 : i32 to index
    %c21_135 = arith.constant 21 : index
    %280 = memref.load %arg1[%279, %c21_135] : memref<16x32xi32, #tpu.memory_space<smem>>
    %281 = arith.index_cast %280 : i32 to index
    %c0_136 = arith.constant 0 : index
    %282 = vector.load %arg2[%281, %c0_136] : memref<256x16xf32, #tpu.memory_space<vmem>>, vector<1x16xf32>
    %c1_i32_137 = arith.constant 1 : i32
    %283 = arith.addi %0, %c1_i32_137 : i32
    %284 = arith.index_cast %283 : i32 to index
    %c22_138 = arith.constant 22 : index
    %285 = memref.load %arg1[%284, %c22_138] : memref<16x32xi32, #tpu.memory_space<smem>>
    %286 = arith.index_cast %285 : i32 to index
    %c0_139 = arith.constant 0 : index
    %287 = vector.load %arg2[%286, %c0_139] : memref<256x16xf32, #tpu.memory_space<vmem>>, vector<1x16xf32>
    %c1_i32_140 = arith.constant 1 : i32
    %288 = arith.addi %0, %c1_i32_140 : i32
    %289 = arith.index_cast %288 : i32 to index
    %c23_141 = arith.constant 23 : index
    %290 = memref.load %arg1[%289, %c23_141] : memref<16x32xi32, #tpu.memory_space<smem>>
    %291 = arith.index_cast %290 : i32 to index
    %c0_142 = arith.constant 0 : index
    %292 = vector.load %arg2[%291, %c0_142] : memref<256x16xf32, #tpu.memory_space<vmem>>, vector<1x16xf32>
    %293 = tpu.concatenate %257, %262, %267, %272, %277, %282, %287, %292 in 1 : vector<1x16xf32>, vector<1x16xf32>, vector<1x16xf32>, vector<1x16xf32>, vector<1x16xf32>, vector<1x16xf32>, vector<1x16xf32>, vector<1x16xf32> -> vector<1x128xf32>
    %c1_143 = arith.constant 1 : index
    %c256_144 = arith.constant 256 : index
    %294 = vector.load %arg8[%c1_143, %c256_144] : memref<8x512xf32, #tpu.memory_space<vmem>>, vector<1x128xf32>
    tpu.vector_store %arg8[%c1_143, %c256_144], %293 {strides = array<i32>} : memref<8x512xf32, #tpu.memory_space<vmem>>, vector<1x128xf32>,
    %c1_i32_145 = arith.constant 1 : i32
    %295 = arith.addi %0, %c1_i32_145 : i32
    %296 = arith.index_cast %295 : i32 to index
    %c24_146 = arith.constant 24 : index
    %297 = memref.load %arg1[%296, %c24_146] : memref<16x32xi32, #tpu.memory_space<smem>>
    %298 = arith.index_cast %297 : i32 to index
    %c0_147 = arith.constant 0 : index
    %299 = vector.load %arg2[%298, %c0_147] : memref<256x16xf32, #tpu.memory_space<vmem>>, vector<1x16xf32>
    %c1_i32_148 = arith.constant 1 : i32
    %300 = arith.addi %0, %c1_i32_148 : i32
    %301 = arith.index_cast %300 : i32 to index
    %c25_149 = arith.constant 25 : index
    %302 = memref.load %arg1[%301, %c25_149] : memref<16x32xi32, #tpu.memory_space<smem>>
    %303 = arith.index_cast %302 : i32 to index
    %c0_150 = arith.constant 0 : index
    %304 = vector.load %arg2[%303, %c0_150] : memref<256x16xf32, #tpu.memory_space<vmem>>, vector<1x16xf32>
    %c1_i32_151 = arith.constant 1 : i32
    %305 = arith.addi %0, %c1_i32_151 : i32
    %306 = arith.index_cast %305 : i32 to index
    %c26_152 = arith.constant 26 : index
    %307 = memref.load %arg1[%306, %c26_152] : memref<16x32xi32, #tpu.memory_space<smem>>
    %308 = arith.index_cast %307 : i32 to index
    %c0_153 = arith.constant 0 : index
    %309 = vector.load %arg2[%308, %c0_153] : memref<256x16xf32, #tpu.memory_space<vmem>>, vector<1x16xf32>
    %c1_i32_154 = arith.constant 1 : i32
    %310 = arith.addi %0, %c1_i32_154 : i32
    %311 = arith.index_cast %310 : i32 to index
    %c27_155 = arith.constant 27 : index
    %312 = memref.load %arg1[%311, %c27_155] : memref<16x32xi32, #tpu.memory_space<smem>>
    %313 = arith.index_cast %312 : i32 to index
    %c0_156 = arith.constant 0 : index
    %314 = vector.load %arg2[%313, %c0_156] : memref<256x16xf32, #tpu.memory_space<vmem>>, vector<1x16xf32>
    %c1_i32_157 = arith.constant 1 : i32
    %315 = arith.addi %0, %c1_i32_157 : i32
    %316 = arith.index_cast %315 : i32 to index
    %c28_158 = arith.constant 28 : index
    %317 = memref.load %arg1[%316, %c28_158] : memref<16x32xi32, #tpu.memory_space<smem>>
    %318 = arith.index_cast %317 : i32 to index
    %c0_159 = arith.constant 0 : index
    %319 = vector.load %arg2[%318, %c0_159] : memref<256x16xf32, #tpu.memory_space<vmem>>, vector<1x16xf32>
    %c1_i32_160 = arith.constant 1 : i32
    %320 = arith.addi %0, %c1_i32_160 : i32
    %321 = arith.index_cast %320 : i32 to index
    %c29_161 = arith.constant 29 : index
    %322 = memref.load %arg1[%321, %c29_161] : memref<16x32xi32, #tpu.memory_space<smem>>
    %323 = arith.index_cast %322 : i32 to index
    %c0_162 = arith.constant 0 : index
    %324 = vector.load %arg2[%323, %c0_162] : memref<256x16xf32, #tpu.memory_space<vmem>>, vector<1x16xf32>
    %c1_i32_163 = arith.constant 1 : i32
    %325 = arith.addi %0, %c1_i32_163 : i32
    %326 = arith.index_cast %325 : i32 to index
    %c30_164 = arith.constant 30 : index
    %327 = memref.load %arg1[%326, %c30_164] : memref<16x32xi32, #tpu.memory_space<smem>>
    %328 = arith.index_cast %327 : i32 to index
    %c0_165 = arith.constant 0 : index
    %329 = vector.load %arg2[%328, %c0_165] : memref<256x16xf32, #tpu.memory_space<vmem>>, vector<1x16xf32>
    %c1_i32_166 = arith.constant 1 : i32
    %330 = arith.addi %0, %c1_i32_166 : i32
    %331 = arith.index_cast %330 : i32 to index
    %c31_167 = arith.constant 31 : index
    %332 = memref.load %arg1[%331, %c31_167] : memref<16x32xi32, #tpu.memory_space<smem>>
    %333 = arith.index_cast %332 : i32 to index
    %c0_168 = arith.constant 0 : index
    %334 = vector.load %arg2[%333, %c0_168] : memref<256x16xf32, #tpu.memory_space<vmem>>, vector<1x16xf32>
    %335 = tpu.concatenate %299, %304, %309, %314, %319, %324, %329, %334 in 1 : vector<1x16xf32>, vector<1x16xf32>, vector<1x16xf32>, vector<1x16xf32>, vector<1x16xf32>, vector<1x16xf32>, vector<1x16xf32>, vector<1x16xf32> -> vector<1x128xf32>
    %c1_169 = arith.constant 1 : index
    %c384_170 = arith.constant 384 : index
    %336 = vector.load %arg8[%c1_169, %c384_170] : memref<8x512xf32, #tpu.memory_space<vmem>>, vector<1x128xf32>
    tpu.vector_store %arg8[%c1_169, %c384_170], %335 {strides = array<i32>} : memref<8x512xf32, #tpu.memory_space<vmem>>, vector<1x128xf32>,
    %c2_i32 = arith.constant 2 : i32
    %337 = arith.addi %0, %c2_i32 : i32
    %338 = arith.index_cast %337 : i32 to index
    %c0_171 = arith.constant 0 : index
    %339 = memref.load %arg1[%338, %c0_171] : memref<16x32xi32, #tpu.memory_space<smem>>
    %340 = arith.index_cast %339 : i32 to index
    %c0_172 = arith.constant 0 : index
    %341 = vector.load %arg2[%340, %c0_172] : memref<256x16xf32, #tpu.memory_space<vmem>>, vector<1x16xf32>
    %c2_i32_173 = arith.constant 2 : i32
    %342 = arith.addi %0, %c2_i32_173 : i32
    %343 = arith.index_cast %342 : i32 to index
    %c1_174 = arith.constant 1 : index
    %344 = memref.load %arg1[%343, %c1_174] : memref<16x32xi32, #tpu.memory_space<smem>>
    %345 = arith.index_cast %344 : i32 to index
    %c0_175 = arith.constant 0 : index
    %346 = vector.load %arg2[%345, %c0_175] : memref<256x16xf32, #tpu.memory_space<vmem>>, vector<1x16xf32>
    %c2_i32_176 = arith.constant 2 : i32
    %347 = arith.addi %0, %c2_i32_176 : i32
    %348 = arith.index_cast %347 : i32 to index
    %c2_177 = arith.constant 2 : index
    %349 = memref.load %arg1[%348, %c2_177] : memref<16x32xi32, #tpu.memory_space<smem>>
    %350 = arith.index_cast %349 : i32 to index
    %c0_178 = arith.constant 0 : index
    %351 = vector.load %arg2[%350, %c0_178] : memref<256x16xf32, #tpu.memory_space<vmem>>, vector<1x16xf32>
    %c2_i32_179 = arith.constant 2 : i32
    %352 = arith.addi %0, %c2_i32_179 : i32
    %353 = arith.index_cast %352 : i32 to index
    %c3_180 = arith.constant 3 : index
    %354 = memref.load %arg1[%353, %c3_180] : memref<16x32xi32, #tpu.memory_space<smem>>
    %355 = arith.index_cast %354 : i32 to index
    %c0_181 = arith.constant 0 : index
    %356 = vector.load %arg2[%355, %c0_181] : memref<256x16xf32, #tpu.memory_space<vmem>>, vector<1x16xf32>
    %c2_i32_182 = arith.constant 2 : i32
    %357 = arith.addi %0, %c2_i32_182 : i32
    %358 = arith.index_cast %357 : i32 to index
    %c4_183 = arith.constant 4 : index
    %359 = memref.load %arg1[%358, %c4_183] : memref<16x32xi32, #tpu.memory_space<smem>>
    %360 = arith.index_cast %359 : i32 to index
    %c0_184 = arith.constant 0 : index
    %361 = vector.load %arg2[%360, %c0_184] : memref<256x16xf32, #tpu.memory_space<vmem>>, vector<1x16xf32>
    %c2_i32_185 = arith.constant 2 : i32
    %362 = arith.addi %0, %c2_i32_185 : i32
    %363 = arith.index_cast %362 : i32 to index
    %c5_186 = arith.constant 5 : index
    %364 = memref.load %arg1[%363, %c5_186] : memref<16x32xi32, #tpu.memory_space<smem>>
    %365 = arith.index_cast %364 : i32 to index
    %c0_187 = arith.constant 0 : index
    %366 = vector.load %arg2[%365, %c0_187] : memref<256x16xf32, #tpu.memory_space<vmem>>, vector<1x16xf32>
    %c2_i32_188 = arith.constant 2 : i32
    %367 = arith.addi %0, %c2_i32_188 : i32
    %368 = arith.index_cast %367 : i32 to index
    %c6_189 = arith.constant 6 : index
    %369 = memref.load %arg1[%368, %c6_189] : memref<16x32xi32, #tpu.memory_space<smem>>
    %370 = arith.index_cast %369 : i32 to index
    %c0_190 = arith.constant 0 : index
    %371 = vector.load %arg2[%370, %c0_190] : memref<256x16xf32, #tpu.memory_space<vmem>>, vector<1x16xf32>
    %c2_i32_191 = arith.constant 2 : i32
    %372 = arith.addi %0, %c2_i32_191 : i32
    %373 = arith.index_cast %372 : i32 to index
    %c7_192 = arith.constant 7 : index
    %374 = memref.load %arg1[%373, %c7_192] : memref<16x32xi32, #tpu.memory_space<smem>>
    %375 = arith.index_cast %374 : i32 to index
    %c0_193 = arith.constant 0 : index
    %376 = vector.load %arg2[%375, %c0_193] : memref<256x16xf32, #tpu.memory_space<vmem>>, vector<1x16xf32>
    %377 = tpu.concatenate %341, %346, %351, %356, %361, %366, %371, %376 in 1 : vector<1x16xf32>, vector<1x16xf32>, vector<1x16xf32>, vector<1x16xf32>, vector<1x16xf32>, vector<1x16xf32>, vector<1x16xf32>, vector<1x16xf32> -> vector<1x128xf32>
    %c2_194 = arith.constant 2 : index
    %c0_195 = arith.constant 0 : index
    %378 = vector.load %arg8[%c2_194, %c0_195] : memref<8x512xf32, #tpu.memory_space<vmem>>, vector<1x128xf32>
    tpu.vector_store %arg8[%c2_194, %c0_195], %377 {strides = array<i32>} : memref<8x512xf32, #tpu.memory_space<vmem>>, vector<1x128xf32>,
    %c2_i32_196 = arith.constant 2 : i32
    %379 = arith.addi %0, %c2_i32_196 : i32
    %380 = arith.index_cast %379 : i32 to index
    %c8_197 = arith.constant 8 : index
    %381 = memref.load %arg1[%380, %c8_197] : memref<16x32xi32, #tpu.memory_space<smem>>
    %382 = arith.index_cast %381 : i32 to index
    %c0_198 = arith.constant 0 : index
    %383 = vector.load %arg2[%382, %c0_198] : memref<256x16xf32, #tpu.memory_space<vmem>>, vector<1x16xf32>
    %c2_i32_199 = arith.constant 2 : i32
    %384 = arith.addi %0, %c2_i32_199 : i32
    %385 = arith.index_cast %384 : i32 to index
    %c9_200 = arith.constant 9 : index
    %386 = memref.load %arg1[%385, %c9_200] : memref<16x32xi32, #tpu.memory_space<smem>>
    %387 = arith.index_cast %386 : i32 to index
    %c0_201 = arith.constant 0 : index
    %388 = vector.load %arg2[%387, %c0_201] : memref<256x16xf32, #tpu.memory_space<vmem>>, vector<1x16xf32>
    %c2_i32_202 = arith.constant 2 : i32
    %389 = arith.addi %0, %c2_i32_202 : i32
    %390 = arith.index_cast %389 : i32 to index
    %c10_203 = arith.constant 10 : index
    %391 = memref.load %arg1[%390, %c10_203] : memref<16x32xi32, #tpu.memory_space<smem>>
    %392 = arith.index_cast %391 : i32 to index
    %c0_204 = arith.constant 0 : index
    %393 = vector.load %arg2[%392, %c0_204] : memref<256x16xf32, #tpu.memory_space<vmem>>, vector<1x16xf32>
    %c2_i32_205 = arith.constant 2 : i32
    %394 = arith.addi %0, %c2_i32_205 : i32
    %395 = arith.index_cast %394 : i32 to index
    %c11_206 = arith.constant 11 : index
    %396 = memref.load %arg1[%395, %c11_206] : memref<16x32xi32, #tpu.memory_space<smem>>
    %397 = arith.index_cast %396 : i32 to index
    %c0_207 = arith.constant 0 : index
    %398 = vector.load %arg2[%397, %c0_207] : memref<256x16xf32, #tpu.memory_space<vmem>>, vector<1x16xf32>
    %c2_i32_208 = arith.constant 2 : i32
    %399 = arith.addi %0, %c2_i32_208 : i32
    %400 = arith.index_cast %399 : i32 to index
    %c12_209 = arith.constant 12 : index
    %401 = memref.load %arg1[%400, %c12_209] : memref<16x32xi32, #tpu.memory_space<smem>>
    %402 = arith.index_cast %401 : i32 to index
    %c0_210 = arith.constant 0 : index
    %403 = vector.load %arg2[%402, %c0_210] : memref<256x16xf32, #tpu.memory_space<vmem>>, vector<1x16xf32>
    %c2_i32_211 = arith.constant 2 : i32
    %404 = arith.addi %0, %c2_i32_211 : i32
    %405 = arith.index_cast %404 : i32 to index
    %c13_212 = arith.constant 13 : index
    %406 = memref.load %arg1[%405, %c13_212] : memref<16x32xi32, #tpu.memory_space<smem>>
    %407 = arith.index_cast %406 : i32 to index
    %c0_213 = arith.constant 0 : index
    %408 = vector.load %arg2[%407, %c0_213] : memref<256x16xf32, #tpu.memory_space<vmem>>, vector<1x16xf32>
    %c2_i32_214 = arith.constant 2 : i32
    %409 = arith.addi %0, %c2_i32_214 : i32
    %410 = arith.index_cast %409 : i32 to index
    %c14_215 = arith.constant 14 : index
    %411 = memref.load %arg1[%410, %c14_215] : memref<16x32xi32, #tpu.memory_space<smem>>
    %412 = arith.index_cast %411 : i32 to index
    %c0_216 = arith.constant 0 : index
    %413 = vector.load %arg2[%412, %c0_216] : memref<256x16xf32, #tpu.memory_space<vmem>>, vector<1x16xf32>
    %c2_i32_217 = arith.constant 2 : i32
    %414 = arith.addi %0, %c2_i32_217 : i32
    %415 = arith.index_cast %414 : i32 to index
    %c15_218 = arith.constant 15 : index
    %416 = memref.load %arg1[%415, %c15_218] : memref<16x32xi32, #tpu.memory_space<smem>>
    %417 = arith.index_cast %416 : i32 to index
    %c0_219 = arith.constant 0 : index
    %418 = vector.load %arg2[%417, %c0_219] : memref<256x16xf32, #tpu.memory_space<vmem>>, vector<1x16xf32>
    %419 = tpu.concatenate %383, %388, %393, %398, %403, %408, %413, %418 in 1 : vector<1x16xf32>, vector<1x16xf32>, vector<1x16xf32>, vector<1x16xf32>, vector<1x16xf32>, vector<1x16xf32>, vector<1x16xf32>, vector<1x16xf32> -> vector<1x128xf32>
    %c2_220 = arith.constant 2 : index
    %c128_221 = arith.constant 128 : index
    %420 = vector.load %arg8[%c2_220, %c128_221] : memref<8x512xf32, #tpu.memory_space<vmem>>, vector<1x128xf32>
    tpu.vector_store %arg8[%c2_220, %c128_221], %419 {strides = array<i32>} : memref<8x512xf32, #tpu.memory_space<vmem>>, vector<1x128xf32>,
    %c2_i32_222 = arith.constant 2 : i32
    %421 = arith.addi %0, %c2_i32_222 : i32
    %422 = arith.index_cast %421 : i32 to index
    %c16_223 = arith.constant 16 : index
    %423 = memref.load %arg1[%422, %c16_223] : memref<16x32xi32, #tpu.memory_space<smem>>
    %424 = arith.index_cast %423 : i32 to index
    %c0_224 = arith.constant 0 : index
    %425 = vector.load %arg2[%424, %c0_224] : memref<256x16xf32, #tpu.memory_space<vmem>>, vector<1x16xf32>
    %c2_i32_225 = arith.constant 2 : i32
    %426 = arith.addi %0, %c2_i32_225 : i32
    %427 = arith.index_cast %426 : i32 to index
    %c17_226 = arith.constant 17 : index
    %428 = memref.load %arg1[%427, %c17_226] : memref<16x32xi32, #tpu.memory_space<smem>>
    %429 = arith.index_cast %428 : i32 to index
    %c0_227 = arith.constant 0 : index
    %430 = vector.load %arg2[%429, %c0_227] : memref<256x16xf32, #tpu.memory_space<vmem>>, vector<1x16xf32>
    %c2_i32_228 = arith.constant 2 : i32
    %431 = arith.addi %0, %c2_i32_228 : i32
    %432 = arith.index_cast %431 : i32 to index
    %c18_229 = arith.constant 18 : index
    %433 = memref.load %arg1[%432, %c18_229] : memref<16x32xi32, #tpu.memory_space<smem>>
    %434 = arith.index_cast %433 : i32 to index
    %c0_230 = arith.constant 0 : index
    %435 = vector.load %arg2[%434, %c0_230] : memref<256x16xf32, #tpu.memory_space<vmem>>, vector<1x16xf32>
    %c2_i32_231 = arith.constant 2 : i32
    %436 = arith.addi %0, %c2_i32_231 : i32
    %437 = arith.index_cast %436 : i32 to index
    %c19_232 = arith.constant 19 : index
    %438 = memref.load %arg1[%437, %c19_232] : memref<16x32xi32, #tpu.memory_space<smem>>
    %439 = arith.index_cast %438 : i32 to index
    %c0_233 = arith.constant 0 : index
    %440 = vector.load %arg2[%439, %c0_233] : memref<256x16xf32, #tpu.memory_space<vmem>>, vector<1x16xf32>
    %c2_i32_234 = arith.constant 2 : i32
    %441 = arith.addi %0, %c2_i32_234 : i32
    %442 = arith.index_cast %441 : i32 to index
    %c20_235 = arith.constant 20 : index
    %443 = memref.load %arg1[%442, %c20_235] : memref<16x32xi32, #tpu.memory_space<smem>>
    %444 = arith.index_cast %443 : i32 to index
    %c0_236 = arith.constant 0 : index
    %445 = vector.load %arg2[%444, %c0_236] : memref<256x16xf32, #tpu.memory_space<vmem>>, vector<1x16xf32>
    %c2_i32_237 = arith.constant 2 : i32
    %446 = arith.addi %0, %c2_i32_237 : i32
    %447 = arith.index_cast %446 : i32 to index
    %c21_238 = arith.constant 21 : index
    %448 = memref.load %arg1[%447, %c21_238] : memref<16x32xi32, #tpu.memory_space<smem>>
    %449 = arith.index_cast %448 : i32 to index
    %c0_239 = arith.constant 0 : index
    %450 = vector.load %arg2[%449, %c0_239] : memref<256x16xf32, #tpu.memory_space<vmem>>, vector<1x16xf32>
    %c2_i32_240 = arith.constant 2 : i32
    %451 = arith.addi %0, %c2_i32_240 : i32
    %452 = arith.index_cast %451 : i32 to index
    %c22_241 = arith.constant 22 : index
    %453 = memref.load %arg1[%452, %c22_241] : memref<16x32xi32, #tpu.memory_space<smem>>
    %454 = arith.index_cast %453 : i32 to index
    %c0_242 = arith.constant 0 : index
    %455 = vector.load %arg2[%454, %c0_242] : memref<256x16xf32, #tpu.memory_space<vmem>>, vector<1x16xf32>
    %c2_i32_243 = arith.constant 2 : i32
    %456 = arith.addi %0, %c2_i32_243 : i32
    %457 = arith.index_cast %456 : i32 to index
    %c23_244 = arith.constant 23 : index
    %458 = memref.load %arg1[%457, %c23_244] : memref<16x32xi32, #tpu.memory_space<smem>>
    %459 = arith.index_cast %458 : i32 to index
    %c0_245 = arith.constant 0 : index
    %460 = vector.load %arg2[%459, %c0_245] : memref<256x16xf32, #tpu.memory_space<vmem>>, vector<1x16xf32>
    %461 = tpu.concatenate %425, %430, %435, %440, %445, %450, %455, %460 in 1 : vector<1x16xf32>, vector<1x16xf32>, vector<1x16xf32>, vector<1x16xf32>, vector<1x16xf32>, vector<1x16xf32>, vector<1x16xf32>, vector<1x16xf32> -> vector<1x128xf32>
    %c2_246 = arith.constant 2 : index
    %c256_247 = arith.constant 256 : index
    %462 = vector.load %arg8[%c2_246, %c256_247] : memref<8x512xf32, #tpu.memory_space<vmem>>, vector<1x128xf32>
    tpu.vector_store %arg8[%c2_246, %c256_247], %461 {strides = array<i32>} : memref<8x512xf32, #tpu.memory_space<vmem>>, vector<1x128xf32>,
    %c2_i32_248 = arith.constant 2 : i32
    %463 = arith.addi %0, %c2_i32_248 : i32
    %464 = arith.index_cast %463 : i32 to index
    %c24_249 = arith.constant 24 : index
    %465 = memref.load %arg1[%464, %c24_249] : memref<16x32xi32, #tpu.memory_space<smem>>
    %466 = arith.index_cast %465 : i32 to index
    %c0_250 = arith.constant 0 : index
    %467 = vector.load %arg2[%466, %c0_250] : memref<256x16xf32, #tpu.memory_space<vmem>>, vector<1x16xf32>
    %c2_i32_251 = arith.constant 2 : i32
    %468 = arith.addi %0, %c2_i32_251 : i32
    %469 = arith.index_cast %468 : i32 to index
    %c25_252 = arith.constant 25 : index
    %470 = memref.load %arg1[%469, %c25_252] : memref<16x32xi32, #tpu.memory_space<smem>>
    %471 = arith.index_cast %470 : i32 to index
    %c0_253 = arith.constant 0 : index
    %472 = vector.load %arg2[%471, %c0_253] : memref<256x16xf32, #tpu.memory_space<vmem>>, vector<1x16xf32>
    %c2_i32_254 = arith.constant 2 : i32
    %473 = arith.addi %0, %c2_i32_254 : i32
    %474 = arith.index_cast %473 : i32 to index
    %c26_255 = arith.constant 26 : index
    %475 = memref.load %arg1[%474, %c26_255] : memref<16x32xi32, #tpu.memory_space<smem>>
    %476 = arith.index_cast %475 : i32 to index
    %c0_256 = arith.constant 0 : index
    %477 = vector.load %arg2[%476, %c0_256] : memref<256x16xf32, #tpu.memory_space<vmem>>, vector<1x16xf32>
    %c2_i32_257 = arith.constant 2 : i32
    %478 = arith.addi %0, %c2_i32_257 : i32
    %479 = arith.index_cast %478 : i32 to index
    %c27_258 = arith.constant 27 : index
    %480 = memref.load %arg1[%479, %c27_258] : memref<16x32xi32, #tpu.memory_space<smem>>
    %481 = arith.index_cast %480 : i32 to index
    %c0_259 = arith.constant 0 : index
    %482 = vector.load %arg2[%481, %c0_259] : memref<256x16xf32, #tpu.memory_space<vmem>>, vector<1x16xf32>
    %c2_i32_260 = arith.constant 2 : i32
    %483 = arith.addi %0, %c2_i32_260 : i32
    %484 = arith.index_cast %483 : i32 to index
    %c28_261 = arith.constant 28 : index
    %485 = memref.load %arg1[%484, %c28_261] : memref<16x32xi32, #tpu.memory_space<smem>>
    %486 = arith.index_cast %485 : i32 to index
    %c0_262 = arith.constant 0 : index
    %487 = vector.load %arg2[%486, %c0_262] : memref<256x16xf32, #tpu.memory_space<vmem>>, vector<1x16xf32>
    %c2_i32_263 = arith.constant 2 : i32
    %488 = arith.addi %0, %c2_i32_263 : i32
    %489 = arith.index_cast %488 : i32 to index
    %c29_264 = arith.constant 29 : index
    %490 = memref.load %arg1[%489, %c29_264] : memref<16x32xi32, #tpu.memory_space<smem>>
    %491 = arith.index_cast %490 : i32 to index
    %c0_265 = arith.constant 0 : index
    %492 = vector.load %arg2[%491, %c0_265] : memref<256x16xf32, #tpu.memory_space<vmem>>, vector<1x16xf32>
    %c2_i32_266 = arith.constant 2 : i32
    %493 = arith.addi %0, %c2_i32_266 : i32
    %494 = arith.index_cast %493 : i32 to index
    %c30_267 = arith.constant 30 : index
    %495 = memref.load %arg1[%494, %c30_267] : memref<16x32xi32, #tpu.memory_space<smem>>
    %496 = arith.index_cast %495 : i32 to index
    %c0_268 = arith.constant 0 : index
    %497 = vector.load %arg2[%496, %c0_268] : memref<256x16xf32, #tpu.memory_space<vmem>>, vector<1x16xf32>
    %c2_i32_269 = arith.constant 2 : i32
    %498 = arith.addi %0, %c2_i32_269 : i32
    %499 = arith.index_cast %498 : i32 to index
    %c31_270 = arith.constant 31 : index
    %500 = memref.load %arg1[%499, %c31_270] : memref<16x32xi32, #tpu.memory_space<smem>>
    %501 = arith.index_cast %500 : i32 to index
    %c0_271 = arith.constant 0 : index
    %502 = vector.load %arg2[%501, %c0_271] : memref<256x16xf32, #tpu.memory_space<vmem>>, vector<1x16xf32>
    %503 = tpu.concatenate %467, %472, %477, %482, %487, %492, %497, %502 in 1 : vector<1x16xf32>, vector<1x16xf32>, vector<1x16xf32>, vector<1x16xf32>, vector<1x16xf32>, vector<1x16xf32>, vector<1x16xf32>, vector<1x16xf32> -> vector<1x128xf32>
    %c2_272 = arith.constant 2 : index
    %c384_273 = arith.constant 384 : index
    %504 = vector.load %arg8[%c2_272, %c384_273] : memref<8x512xf32, #tpu.memory_space<vmem>>, vector<1x128xf32>
    tpu.vector_store %arg8[%c2_272, %c384_273], %503 {strides = array<i32>} : memref<8x512xf32, #tpu.memory_space<vmem>>, vector<1x128xf32>,
    %c3_i32 = arith.constant 3 : i32
    %505 = arith.addi %0, %c3_i32 : i32
    %506 = arith.index_cast %505 : i32 to index
    %c0_274 = arith.constant 0 : index
    %507 = memref.load %arg1[%506, %c0_274] : memref<16x32xi32, #tpu.memory_space<smem>>
    %508 = arith.index_cast %507 : i32 to index
    %c0_275 = arith.constant 0 : index
    %509 = vector.load %arg2[%508, %c0_275] : memref<256x16xf32, #tpu.memory_space<vmem>>, vector<1x16xf32>
    %c3_i32_276 = arith.constant 3 : i32
    %510 = arith.addi %0, %c3_i32_276 : i32
    %511 = arith.index_cast %510 : i32 to index
    %c1_277 = arith.constant 1 : index
    %512 = memref.load %arg1[%511, %c1_277] : memref<16x32xi32, #tpu.memory_space<smem>>
    %513 = arith.index_cast %512 : i32 to index
    %c0_278 = arith.constant 0 : index
    %514 = vector.load %arg2[%513, %c0_278] : memref<256x16xf32, #tpu.memory_space<vmem>>, vector<1x16xf32>
    %c3_i32_279 = arith.constant 3 : i32
    %515 = arith.addi %0, %c3_i32_279 : i32
    %516 = arith.index_cast %515 : i32 to index
    %c2_280 = arith.constant 2 : index
    %517 = memref.load %arg1[%516, %c2_280] : memref<16x32xi32, #tpu.memory_space<smem>>
    %518 = arith.index_cast %517 : i32 to index
    %c0_281 = arith.constant 0 : index
    %519 = vector.load %arg2[%518, %c0_281] : memref<256x16xf32, #tpu.memory_space<vmem>>, vector<1x16xf32>
    %c3_i32_282 = arith.constant 3 : i32
    %520 = arith.addi %0, %c3_i32_282 : i32
    %521 = arith.index_cast %520 : i32 to index
    %c3_283 = arith.constant 3 : index
    %522 = memref.load %arg1[%521, %c3_283] : memref<16x32xi32, #tpu.memory_space<smem>>
    %523 = arith.index_cast %522 : i32 to index
    %c0_284 = arith.constant 0 : index
    %524 = vector.load %arg2[%523, %c0_284] : memref<256x16xf32, #tpu.memory_space<vmem>>, vector<1x16xf32>
    %c3_i32_285 = arith.constant 3 : i32
    %525 = arith.addi %0, %c3_i32_285 : i32
    %526 = arith.index_cast %525 : i32 to index
    %c4_286 = arith.constant 4 : index
    %527 = memref.load %arg1[%526, %c4_286] : memref<16x32xi32, #tpu.memory_space<smem>>
    %528 = arith.index_cast %527 : i32 to index
    %c0_287 = arith.constant 0 : index
    %529 = vector.load %arg2[%528, %c0_287] : memref<256x16xf32, #tpu.memory_space<vmem>>, vector<1x16xf32>
    %c3_i32_288 = arith.constant 3 : i32
    %530 = arith.addi %0, %c3_i32_288 : i32
    %531 = arith.index_cast %530 : i32 to index
    %c5_289 = arith.constant 5 : index
    %532 = memref.load %arg1[%531, %c5_289] : memref<16x32xi32, #tpu.memory_space<smem>>
    %533 = arith.index_cast %532 : i32 to index
    %c0_290 = arith.constant 0 : index
    %534 = vector.load %arg2[%533, %c0_290] : memref<256x16xf32, #tpu.memory_space<vmem>>, vector<1x16xf32>
    %c3_i32_291 = arith.constant 3 : i32
    %535 = arith.addi %0, %c3_i32_291 : i32
    %536 = arith.index_cast %535 : i32 to index
    %c6_292 = arith.constant 6 : index
    %537 = memref.load %arg1[%536, %c6_292] : memref<16x32xi32, #tpu.memory_space<smem>>
    %538 = arith.index_cast %537 : i32 to index
    %c0_293 = arith.constant 0 : index
    %539 = vector.load %arg2[%538, %c0_293] : memref<256x16xf32, #tpu.memory_space<vmem>>, vector<1x16xf32>
    %c3_i32_294 = arith.constant 3 : i32
    %540 = arith.addi %0, %c3_i32_294 : i32
    %541 = arith.index_cast %540 : i32 to index
    %c7_295 = arith.constant 7 : index
    %542 = memref.load %arg1[%541, %c7_295] : memref<16x32xi32, #tpu.memory_space<smem>>
    %543 = arith.index_cast %542 : i32 to index
    %c0_296 = arith.constant 0 : index
    %544 = vector.load %arg2[%543, %c0_296] : memref<256x16xf32, #tpu.memory_space<vmem>>, vector<1x16xf32>
    %545 = tpu.concatenate %509, %514, %519, %524, %529, %534, %539, %544 in 1 : vector<1x16xf32>, vector<1x16xf32>, vector<1x16xf32>, vector<1x16xf32>, vector<1x16xf32>, vector<1x16xf32>, vector<1x16xf32>, vector<1x16xf32> -> vector<1x128xf32>
    %c3_297 = arith.constant 3 : index
    %c0_298 = arith.constant 0 : index
    %546 = vector.load %arg8[%c3_297, %c0_298] : memref<8x512xf32, #tpu.memory_space<vmem>>, vector<1x128xf32>
    tpu.vector_store %arg8[%c3_297, %c0_298], %545 {strides = array<i32>} : memref<8x512xf32, #tpu.memory_space<vmem>>, vector<1x128xf32>,
    %c3_i32_299 = arith.constant 3 : i32
    %547 = arith.addi %0, %c3_i32_299 : i32
    %548 = arith.index_cast %547 : i32 to index
    %c8_300 = arith.constant 8 : index
    %549 = memref.load %arg1[%548, %c8_300] : memref<16x32xi32, #tpu.memory_space<smem>>
    %550 = arith.index_cast %549 : i32 to index
    %c0_301 = arith.constant 0 : index
    %551 = vector.load %arg2[%550, %c0_301] : memref<256x16xf32, #tpu.memory_space<vmem>>, vector<1x16xf32>
    %c3_i32_302 = arith.constant 3 : i32
    %552 = arith.addi %0, %c3_i32_302 : i32
    %553 = arith.index_cast %552 : i32 to index
    %c9_303 = arith.constant 9 : index
    %554 = memref.load %arg1[%553, %c9_303] : memref<16x32xi32, #tpu.memory_space<smem>>
    %555 = arith.index_cast %554 : i32 to index
    %c0_304 = arith.constant 0 : index
    %556 = vector.load %arg2[%555, %c0_304] : memref<256x16xf32, #tpu.memory_space<vmem>>, vector<1x16xf32>
    %c3_i32_305 = arith.constant 3 : i32
    %557 = arith.addi %0, %c3_i32_305 : i32
    %558 = arith.index_cast %557 : i32 to index
    %c10_306 = arith.constant 10 : index
    %559 = memref.load %arg1[%558, %c10_306] : memref<16x32xi32, #tpu.memory_space<smem>>
    %560 = arith.index_cast %559 : i32 to index
    %c0_307 = arith.constant 0 : index
    %561 = vector.load %arg2[%560, %c0_307] : memref<256x16xf32, #tpu.memory_space<vmem>>, vector<1x16xf32>
    %c3_i32_308 = arith.constant 3 : i32
    %562 = arith.addi %0, %c3_i32_308 : i32
    %563 = arith.index_cast %562 : i32 to index
    %c11_309 = arith.constant 11 : index
    %564 = memref.load %arg1[%563, %c11_309] : memref<16x32xi32, #tpu.memory_space<smem>>
    %565 = arith.index_cast %564 : i32 to index
    %c0_310 = arith.constant 0 : index
    %566 = vector.load %arg2[%565, %c0_310] : memref<256x16xf32, #tpu.memory_space<vmem>>, vector<1x16xf32>
    %c3_i32_311 = arith.constant 3 : i32
    %567 = arith.addi %0, %c3_i32_311 : i32
    %568 = arith.index_cast %567 : i32 to index
    %c12_312 = arith.constant 12 : index
    %569 = memref.load %arg1[%568, %c12_312] : memref<16x32xi32, #tpu.memory_space<smem>>
    %570 = arith.index_cast %569 : i32 to index
    %c0_313 = arith.constant 0 : index
    %571 = vector.load %arg2[%570, %c0_313] : memref<256x16xf32, #tpu.memory_space<vmem>>, vector<1x16xf32>
    %c3_i32_314 = arith.constant 3 : i32
    %572 = arith.addi %0, %c3_i32_314 : i32
    %573 = arith.index_cast %572 : i32 to index
    %c13_315 = arith.constant 13 : index
    %574 = memref.load %arg1[%573, %c13_315] : memref<16x32xi32, #tpu.memory_space<smem>>
    %575 = arith.index_cast %574 : i32 to index
    %c0_316 = arith.constant 0 : index
    %576 = vector.load %arg2[%575, %c0_316] : memref<256x16xf32, #tpu.memory_space<vmem>>, vector<1x16xf32>
    %c3_i32_317 = arith.constant 3 : i32
    %577 = arith.addi %0, %c3_i32_317 : i32
    %578 = arith.index_cast %577 : i32 to index
    %c14_318 = arith.constant 14 : index
    %579 = memref.load %arg1[%578, %c14_318] : memref<16x32xi32, #tpu.memory_space<smem>>
    %580 = arith.index_cast %579 : i32 to index
    %c0_319 = arith.constant 0 : index
    %581 = vector.load %arg2[%580, %c0_319] : memref<256x16xf32, #tpu.memory_space<vmem>>, vector<1x16xf32>
    %c3_i32_320 = arith.constant 3 : i32
    %582 = arith.addi %0, %c3_i32_320 : i32
    %583 = arith.index_cast %582 : i32 to index
    %c15_321 = arith.constant 15 : index
    %584 = memref.load %arg1[%583, %c15_321] : memref<16x32xi32, #tpu.memory_space<smem>>
    %585 = arith.index_cast %584 : i32 to index
    %c0_322 = arith.constant 0 : index
    %586 = vector.load %arg2[%585, %c0_322] : memref<256x16xf32, #tpu.memory_space<vmem>>, vector<1x16xf32>
    %587 = tpu.concatenate %551, %556, %561, %566, %571, %576, %581, %586 in 1 : vector<1x16xf32>, vector<1x16xf32>, vector<1x16xf32>, vector<1x16xf32>, vector<1x16xf32>, vector<1x16xf32>, vector<1x16xf32>, vector<1x16xf32> -> vector<1x128xf32>
    %c3_323 = arith.constant 3 : index
    %c128_324 = arith.constant 128 : index
    %588 = vector.load %arg8[%c3_323, %c128_324] : memref<8x512xf32, #tpu.memory_space<vmem>>, vector<1x128xf32>
    tpu.vector_store %arg8[%c3_323, %c128_324], %587 {strides = array<i32>} : memref<8x512xf32, #tpu.memory_space<vmem>>, vector<1x128xf32>,
    %c3_i32_325 = arith.constant 3 : i32
    %589 = arith.addi %0, %c3_i32_325 : i32
    %590 = arith.index_cast %589 : i32 to index
    %c16_326 = arith.constant 16 : index
    %591 = memref.load %arg1[%590, %c16_326] : memref<16x32xi32, #tpu.memory_space<smem>>
    %592 = arith.index_cast %591 : i32 to index
    %c0_327 = arith.constant 0 : index
    %593 = vector.load %arg2[%592, %c0_327] : memref<256x16xf32, #tpu.memory_space<vmem>>, vector<1x16xf32>
    %c3_i32_328 = arith.constant 3 : i32
    %594 = arith.addi %0, %c3_i32_328 : i32
    %595 = arith.index_cast %594 : i32 to index
    %c17_329 = arith.constant 17 : index
    %596 = memref.load %arg1[%595, %c17_329] : memref<16x32xi32, #tpu.memory_space<smem>>
    %597 = arith.index_cast %596 : i32 to index
    %c0_330 = arith.constant 0 : index
    %598 = vector.load %arg2[%597, %c0_330] : memref<256x16xf32, #tpu.memory_space<vmem>>, vector<1x16xf32>
    %c3_i32_331 = arith.constant 3 : i32
    %599 = arith.addi %0, %c3_i32_331 : i32
    %600 = arith.index_cast %599 : i32 to index
    %c18_332 = arith.constant 18 : index
    %601 = memref.load %arg1[%600, %c18_332] : memref<16x32xi32, #tpu.memory_space<smem>>
    %602 = arith.index_cast %601 : i32 to index
    %c0_333 = arith.constant 0 : index
    %603 = vector.load %arg2[%602, %c0_333] : memref<256x16xf32, #tpu.memory_space<vmem>>, vector<1x16xf32>
    %c3_i32_334 = arith.constant 3 : i32
    %604 = arith.addi %0, %c3_i32_334 : i32
    %605 = arith.index_cast %604 : i32 to index
    %c19_335 = arith.constant 19 : index
    %606 = memref.load %arg1[%605, %c19_335] : memref<16x32xi32, #tpu.memory_space<smem>>
    %607 = arith.index_cast %606 : i32 to index
    %c0_336 = arith.constant 0 : index
    %608 = vector.load %arg2[%607, %c0_336] : memref<256x16xf32, #tpu.memory_space<vmem>>, vector<1x16xf32>
    %c3_i32_337 = arith.constant 3 : i32
    %609 = arith.addi %0, %c3_i32_337 : i32
    %610 = arith.index_cast %609 : i32 to index
    %c20_338 = arith.constant 20 : index
    %611 = memref.load %arg1[%610, %c20_338] : memref<16x32xi32, #tpu.memory_space<smem>>
    %612 = arith.index_cast %611 : i32 to index
    %c0_339 = arith.constant 0 : index
    %613 = vector.load %arg2[%612, %c0_339] : memref<256x16xf32, #tpu.memory_space<vmem>>, vector<1x16xf32>
    %c3_i32_340 = arith.constant 3 : i32
    %614 = arith.addi %0, %c3_i32_340 : i32
    %615 = arith.index_cast %614 : i32 to index
    %c21_341 = arith.constant 21 : index
    %616 = memref.load %arg1[%615, %c21_341] : memref<16x32xi32, #tpu.memory_space<smem>>
    %617 = arith.index_cast %616 : i32 to index
    %c0_342 = arith.constant 0 : index
    %618 = vector.load %arg2[%617, %c0_342] : memref<256x16xf32, #tpu.memory_space<vmem>>, vector<1x16xf32>
    %c3_i32_343 = arith.constant 3 : i32
    %619 = arith.addi %0, %c3_i32_343 : i32
    %620 = arith.index_cast %619 : i32 to index
    %c22_344 = arith.constant 22 : index
    %621 = memref.load %arg1[%620, %c22_344] : memref<16x32xi32, #tpu.memory_space<smem>>
    %622 = arith.index_cast %621 : i32 to index
    %c0_345 = arith.constant 0 : index
    %623 = vector.load %arg2[%622, %c0_345] : memref<256x16xf32, #tpu.memory_space<vmem>>, vector<1x16xf32>
    %c3_i32_346 = arith.constant 3 : i32
    %624 = arith.addi %0, %c3_i32_346 : i32
    %625 = arith.index_cast %624 : i32 to index
    %c23_347 = arith.constant 23 : index
    %626 = memref.load %arg1[%625, %c23_347] : memref<16x32xi32, #tpu.memory_space<smem>>
    %627 = arith.index_cast %626 : i32 to index
    %c0_348 = arith.constant 0 : index
    %628 = vector.load %arg2[%627, %c0_348] : memref<256x16xf32, #tpu.memory_space<vmem>>, vector<1x16xf32>
    %629 = tpu.concatenate %593, %598, %603, %608, %613, %618, %623, %628 in 1 : vector<1x16xf32>, vector<1x16xf32>, vector<1x16xf32>, vector<1x16xf32>, vector<1x16xf32>, vector<1x16xf32>, vector<1x16xf32>, vector<1x16xf32> -> vector<1x128xf32>
    %c3_349 = arith.constant 3 : index
    %c256_350 = arith.constant 256 : index
    %630 = vector.load %arg8[%c3_349, %c256_350] : memref<8x512xf32, #tpu.memory_space<vmem>>, vector<1x128xf32>
    tpu.vector_store %arg8[%c3_349, %c256_350], %629 {strides = array<i32>} : memref<8x512xf32, #tpu.memory_space<vmem>>, vector<1x128xf32>,
    %c3_i32_351 = arith.constant 3 : i32
    %631 = arith.addi %0, %c3_i32_351 : i32
    %632 = arith.index_cast %631 : i32 to index
    %c24_352 = arith.constant 24 : index
    %633 = memref.load %arg1[%632, %c24_352] : memref<16x32xi32, #tpu.memory_space<smem>>
    %634 = arith.index_cast %633 : i32 to index
    %c0_353 = arith.constant 0 : index
    %635 = vector.load %arg2[%634, %c0_353] : memref<256x16xf32, #tpu.memory_space<vmem>>, vector<1x16xf32>
    %c3_i32_354 = arith.constant 3 : i32
    %636 = arith.addi %0, %c3_i32_354 : i32
    %637 = arith.index_cast %636 : i32 to index
    %c25_355 = arith.constant 25 : index
    %638 = memref.load %arg1[%637, %c25_355] : memref<16x32xi32, #tpu.memory_space<smem>>
    %639 = arith.index_cast %638 : i32 to index
    %c0_356 = arith.constant 0 : index
    %640 = vector.load %arg2[%639, %c0_356] : memref<256x16xf32, #tpu.memory_space<vmem>>, vector<1x16xf32>
    %c3_i32_357 = arith.constant 3 : i32
    %641 = arith.addi %0, %c3_i32_357 : i32
    %642 = arith.index_cast %641 : i32 to index
    %c26_358 = arith.constant 26 : index
    %643 = memref.load %arg1[%642, %c26_358] : memref<16x32xi32, #tpu.memory_space<smem>>
    %644 = arith.index_cast %643 : i32 to index
    %c0_359 = arith.constant 0 : index
    %645 = vector.load %arg2[%644, %c0_359] : memref<256x16xf32, #tpu.memory_space<vmem>>, vector<1x16xf32>
    %c3_i32_360 = arith.constant 3 : i32
    %646 = arith.addi %0, %c3_i32_360 : i32
    %647 = arith.index_cast %646 : i32 to index
    %c27_361 = arith.constant 27 : index
    %648 = memref.load %arg1[%647, %c27_361] : memref<16x32xi32, #tpu.memory_space<smem>>
    %649 = arith.index_cast %648 : i32 to index
    %c0_362 = arith.constant 0 : index
    %650 = vector.load %arg2[%649, %c0_362] : memref<256x16xf32, #tpu.memory_space<vmem>>, vector<1x16xf32>
    %c3_i32_363 = arith.constant 3 : i32
    %651 = arith.addi %0, %c3_i32_363 : i32
    %652 = arith.index_cast %651 : i32 to index
    %c28_364 = arith.constant 28 : index
    %653 = memref.load %arg1[%652, %c28_364] : memref<16x32xi32, #tpu.memory_space<smem>>
    %654 = arith.index_cast %653 : i32 to index
    %c0_365 = arith.constant 0 : index
    %655 = vector.load %arg2[%654, %c0_365] : memref<256x16xf32, #tpu.memory_space<vmem>>, vector<1x16xf32>
    %c3_i32_366 = arith.constant 3 : i32
    %656 = arith.addi %0, %c3_i32_366 : i32
    %657 = arith.index_cast %656 : i32 to index
    %c29_367 = arith.constant 29 : index
    %658 = memref.load %arg1[%657, %c29_367] : memref<16x32xi32, #tpu.memory_space<smem>>
    %659 = arith.index_cast %658 : i32 to index
    %c0_368 = arith.constant 0 : index
    %660 = vector.load %arg2[%659, %c0_368] : memref<256x16xf32, #tpu.memory_space<vmem>>, vector<1x16xf32>
    %c3_i32_369 = arith.constant 3 : i32
    %661 = arith.addi %0, %c3_i32_369 : i32
    %662 = arith.index_cast %661 : i32 to index
    %c30_370 = arith.constant 30 : index
    %663 = memref.load %arg1[%662, %c30_370] : memref<16x32xi32, #tpu.memory_space<smem>>
    %664 = arith.index_cast %663 : i32 to index
    %c0_371 = arith.constant 0 : index
    %665 = vector.load %arg2[%664, %c0_371] : memref<256x16xf32, #tpu.memory_space<vmem>>, vector<1x16xf32>
    %c3_i32_372 = arith.constant 3 : i32
    %666 = arith.addi %0, %c3_i32_372 : i32
    %667 = arith.index_cast %666 : i32 to index
    %c31_373 = arith.constant 31 : index
    %668 = memref.load %arg1[%667, %c31_373] : memref<16x32xi32, #tpu.memory_space<smem>>
    %669 = arith.index_cast %668 : i32 to index
    %c0_374 = arith.constant 0 : index
    %670 = vector.load %arg2[%669, %c0_374] : memref<256x16xf32, #tpu.memory_space<vmem>>, vector<1x16xf32>
    %671 = tpu.concatenate %635, %640, %645, %650, %655, %660, %665, %670 in 1 : vector<1x16xf32>, vector<1x16xf32>, vector<1x16xf32>, vector<1x16xf32>, vector<1x16xf32>, vector<1x16xf32>, vector<1x16xf32>, vector<1x16xf32> -> vector<1x128xf32>
    %c3_375 = arith.constant 3 : index
    %c384_376 = arith.constant 384 : index
    %672 = vector.load %arg8[%c3_375, %c384_376] : memref<8x512xf32, #tpu.memory_space<vmem>>, vector<1x128xf32>
    tpu.vector_store %arg8[%c3_375, %c384_376], %671 {strides = array<i32>} : memref<8x512xf32, #tpu.memory_space<vmem>>, vector<1x128xf32>,
    %c4_i32 = arith.constant 4 : i32
    %673 = arith.addi %0, %c4_i32 : i32
    %674 = arith.index_cast %673 : i32 to index
    %c0_377 = arith.constant 0 : index
    %675 = memref.load %arg1[%674, %c0_377] : memref<16x32xi32, #tpu.memory_space<smem>>
    %676 = arith.index_cast %675 : i32 to index
    %c0_378 = arith.constant 0 : index
    %677 = vector.load %arg2[%676, %c0_378] : memref<256x16xf32, #tpu.memory_space<vmem>>, vector<1x16xf32>
    %c4_i32_379 = arith.constant 4 : i32
    %678 = arith.addi %0, %c4_i32_379 : i32
    %679 = arith.index_cast %678 : i32 to index
    %c1_380 = arith.constant 1 : index
    %680 = memref.load %arg1[%679, %c1_380] : memref<16x32xi32, #tpu.memory_space<smem>>
    %681 = arith.index_cast %680 : i32 to index
    %c0_381 = arith.constant 0 : index
    %682 = vector.load %arg2[%681, %c0_381] : memref<256x16xf32, #tpu.memory_space<vmem>>, vector<1x16xf32>
    %c4_i32_382 = arith.constant 4 : i32
    %683 = arith.addi %0, %c4_i32_382 : i32
    %684 = arith.index_cast %683 : i32 to index
    %c2_383 = arith.constant 2 : index
    %685 = memref.load %arg1[%684, %c2_383] : memref<16x32xi32, #tpu.memory_space<smem>>
    %686 = arith.index_cast %685 : i32 to index
    %c0_384 = arith.constant 0 : index
    %687 = vector.load %arg2[%686, %c0_384] : memref<256x16xf32, #tpu.memory_space<vmem>>, vector<1x16xf32>
    %c4_i32_385 = arith.constant 4 : i32
    %688 = arith.addi %0, %c4_i32_385 : i32
    %689 = arith.index_cast %688 : i32 to index
    %c3_386 = arith.constant 3 : index
    %690 = memref.load %arg1[%689, %c3_386] : memref<16x32xi32, #tpu.memory_space<smem>>
    %691 = arith.index_cast %690 : i32 to index
    %c0_387 = arith.constant 0 : index
    %692 = vector.load %arg2[%691, %c0_387] : memref<256x16xf32, #tpu.memory_space<vmem>>, vector<1x16xf32>
    %c4_i32_388 = arith.constant 4 : i32
    %693 = arith.addi %0, %c4_i32_388 : i32
    %694 = arith.index_cast %693 : i32 to index
    %c4_389 = arith.constant 4 : index
    %695 = memref.load %arg1[%694, %c4_389] : memref<16x32xi32, #tpu.memory_space<smem>>
    %696 = arith.index_cast %695 : i32 to index
    %c0_390 = arith.constant 0 : index
    %697 = vector.load %arg2[%696, %c0_390] : memref<256x16xf32, #tpu.memory_space<vmem>>, vector<1x16xf32>
    %c4_i32_391 = arith.constant 4 : i32
    %698 = arith.addi %0, %c4_i32_391 : i32
    %699 = arith.index_cast %698 : i32 to index
    %c5_392 = arith.constant 5 : index
    %700 = memref.load %arg1[%699, %c5_392] : memref<16x32xi32, #tpu.memory_space<smem>>
    %701 = arith.index_cast %700 : i32 to index
    %c0_393 = arith.constant 0 : index
    %702 = vector.load %arg2[%701, %c0_393] : memref<256x16xf32, #tpu.memory_space<vmem>>, vector<1x16xf32>
    %c4_i32_394 = arith.constant 4 : i32
    %703 = arith.addi %0, %c4_i32_394 : i32
    %704 = arith.index_cast %703 : i32 to index
    %c6_395 = arith.constant 6 : index
    %705 = memref.load %arg1[%704, %c6_395] : memref<16x32xi32, #tpu.memory_space<smem>>
    %706 = arith.index_cast %705 : i32 to index
    %c0_396 = arith.constant 0 : index
    %707 = vector.load %arg2[%706, %c0_396] : memref<256x16xf32, #tpu.memory_space<vmem>>, vector<1x16xf32>
    %c4_i32_397 = arith.constant 4 : i32
    %708 = arith.addi %0, %c4_i32_397 : i32
    %709 = arith.index_cast %708 : i32 to index
    %c7_398 = arith.constant 7 : index
    %710 = memref.load %arg1[%709, %c7_398] : memref<16x32xi32, #tpu.memory_space<smem>>
    %711 = arith.index_cast %710 : i32 to index
    %c0_399 = arith.constant 0 : index
    %712 = vector.load %arg2[%711, %c0_399] : memref<256x16xf32, #tpu.memory_space<vmem>>, vector<1x16xf32>
    %713 = tpu.concatenate %677, %682, %687, %692, %697, %702, %707, %712 in 1 : vector<1x16xf32>, vector<1x16xf32>, vector<1x16xf32>, vector<1x16xf32>, vector<1x16xf32>, vector<1x16xf32>, vector<1x16xf32>, vector<1x16xf32> -> vector<1x128xf32>
    %c4_400 = arith.constant 4 : index
    %c0_401 = arith.constant 0 : index
    %714 = vector.load %arg8[%c4_400, %c0_401] : memref<8x512xf32, #tpu.memory_space<vmem>>, vector<1x128xf32>
    tpu.vector_store %arg8[%c4_400, %c0_401], %713 {strides = array<i32>} : memref<8x512xf32, #tpu.memory_space<vmem>>, vector<1x128xf32>,
    %c4_i32_402 = arith.constant 4 : i32
    %715 = arith.addi %0, %c4_i32_402 : i32
    %716 = arith.index_cast %715 : i32 to index
    %c8_403 = arith.constant 8 : index
    %717 = memref.load %arg1[%716, %c8_403] : memref<16x32xi32, #tpu.memory_space<smem>>
    %718 = arith.index_cast %717 : i32 to index
    %c0_404 = arith.constant 0 : index
    %719 = vector.load %arg2[%718, %c0_404] : memref<256x16xf32, #tpu.memory_space<vmem>>, vector<1x16xf32>
    %c4_i32_405 = arith.constant 4 : i32
    %720 = arith.addi %0, %c4_i32_405 : i32
    %721 = arith.index_cast %720 : i32 to index
    %c9_406 = arith.constant 9 : index
    %722 = memref.load %arg1[%721, %c9_406] : memref<16x32xi32, #tpu.memory_space<smem>>
    %723 = arith.index_cast %722 : i32 to index
    %c0_407 = arith.constant 0 : index
    %724 = vector.load %arg2[%723, %c0_407] : memref<256x16xf32, #tpu.memory_space<vmem>>, vector<1x16xf32>
    %c4_i32_408 = arith.constant 4 : i32
    %725 = arith.addi %0, %c4_i32_408 : i32
    %726 = arith.index_cast %725 : i32 to index
    %c10_409 = arith.constant 10 : index
    %727 = memref.load %arg1[%726, %c10_409] : memref<16x32xi32, #tpu.memory_space<smem>>
    %728 = arith.index_cast %727 : i32 to index
    %c0_410 = arith.constant 0 : index
    %729 = vector.load %arg2[%728, %c0_410] : memref<256x16xf32, #tpu.memory_space<vmem>>, vector<1x16xf32>
    %c4_i32_411 = arith.constant 4 : i32
    %730 = arith.addi %0, %c4_i32_411 : i32
    %731 = arith.index_cast %730 : i32 to index
    %c11_412 = arith.constant 11 : index
    %732 = memref.load %arg1[%731, %c11_412] : memref<16x32xi32, #tpu.memory_space<smem>>
    %733 = arith.index_cast %732 : i32 to index
    %c0_413 = arith.constant 0 : index
    %734 = vector.load %arg2[%733, %c0_413] : memref<256x16xf32, #tpu.memory_space<vmem>>, vector<1x16xf32>
    %c4_i32_414 = arith.constant 4 : i32
    %735 = arith.addi %0, %c4_i32_414 : i32
    %736 = arith.index_cast %735 : i32 to index
    %c12_415 = arith.constant 12 : index
    %737 = memref.load %arg1[%736, %c12_415] : memref<16x32xi32, #tpu.memory_space<smem>>
    %738 = arith.index_cast %737 : i32 to index
    %c0_416 = arith.constant 0 : index
    %739 = vector.load %arg2[%738, %c0_416] : memref<256x16xf32, #tpu.memory_space<vmem>>, vector<1x16xf32>
    %c4_i32_417 = arith.constant 4 : i32
    %740 = arith.addi %0, %c4_i32_417 : i32
    %741 = arith.index_cast %740 : i32 to index
    %c13_418 = arith.constant 13 : index
    %742 = memref.load %arg1[%741, %c13_418] : memref<16x32xi32, #tpu.memory_space<smem>>
    %743 = arith.index_cast %742 : i32 to index
    %c0_419 = arith.constant 0 : index
    %744 = vector.load %arg2[%743, %c0_419] : memref<256x16xf32, #tpu.memory_space<vmem>>, vector<1x16xf32>
    %c4_i32_420 = arith.constant 4 : i32
    %745 = arith.addi %0, %c4_i32_420 : i32
    %746 = arith.index_cast %745 : i32 to index
    %c14_421 = arith.constant 14 : index
    %747 = memref.load %arg1[%746, %c14_421] : memref<16x32xi32, #tpu.memory_space<smem>>
    %748 = arith.index_cast %747 : i32 to index
    %c0_422 = arith.constant 0 : index
    %749 = vector.load %arg2[%748, %c0_422] : memref<256x16xf32, #tpu.memory_space<vmem>>, vector<1x16xf32>
    %c4_i32_423 = arith.constant 4 : i32
    %750 = arith.addi %0, %c4_i32_423 : i32
    %751 = arith.index_cast %750 : i32 to index
    %c15_424 = arith.constant 15 : index
    %752 = memref.load %arg1[%751, %c15_424] : memref<16x32xi32, #tpu.memory_space<smem>>
    %753 = arith.index_cast %752 : i32 to index
    %c0_425 = arith.constant 0 : index
    %754 = vector.load %arg2[%753, %c0_425] : memref<256x16xf32, #tpu.memory_space<vmem>>, vector<1x16xf32>
    %755 = tpu.concatenate %719, %724, %729, %734, %739, %744, %749, %754 in 1 : vector<1x16xf32>, vector<1x16xf32>, vector<1x16xf32>, vector<1x16xf32>, vector<1x16xf32>, vector<1x16xf32>, vector<1x16xf32>, vector<1x16xf32> -> vector<1x128xf32>
    %c4_426 = arith.constant 4 : index
    %c128_427 = arith.constant 128 : index
    %756 = vector.load %arg8[%c4_426, %c128_427] : memref<8x512xf32, #tpu.memory_space<vmem>>, vector<1x128xf32>
    tpu.vector_store %arg8[%c4_426, %c128_427], %755 {strides = array<i32>} : memref<8x512xf32, #tpu.memory_space<vmem>>, vector<1x128xf32>,
    %c4_i32_428 = arith.constant 4 : i32
    %757 = arith.addi %0, %c4_i32_428 : i32
    %758 = arith.index_cast %757 : i32 to index
    %c16_429 = arith.constant 16 : index
    %759 = memref.load %arg1[%758, %c16_429] : memref<16x32xi32, #tpu.memory_space<smem>>
    %760 = arith.index_cast %759 : i32 to index
    %c0_430 = arith.constant 0 : index
    %761 = vector.load %arg2[%760, %c0_430] : memref<256x16xf32, #tpu.memory_space<vmem>>, vector<1x16xf32>
    %c4_i32_431 = arith.constant 4 : i32
    %762 = arith.addi %0, %c4_i32_431 : i32
    %763 = arith.index_cast %762 : i32 to index
    %c17_432 = arith.constant 17 : index
    %764 = memref.load %arg1[%763, %c17_432] : memref<16x32xi32, #tpu.memory_space<smem>>
    %765 = arith.index_cast %764 : i32 to index
    %c0_433 = arith.constant 0 : index
    %766 = vector.load %arg2[%765, %c0_433] : memref<256x16xf32, #tpu.memory_space<vmem>>, vector<1x16xf32>
    %c4_i32_434 = arith.constant 4 : i32
    %767 = arith.addi %0, %c4_i32_434 : i32
    %768 = arith.index_cast %767 : i32 to index
    %c18_435 = arith.constant 18 : index
    %769 = memref.load %arg1[%768, %c18_435] : memref<16x32xi32, #tpu.memory_space<smem>>
    %770 = arith.index_cast %769 : i32 to index
    %c0_436 = arith.constant 0 : index
    %771 = vector.load %arg2[%770, %c0_436] : memref<256x16xf32, #tpu.memory_space<vmem>>, vector<1x16xf32>
    %c4_i32_437 = arith.constant 4 : i32
    %772 = arith.addi %0, %c4_i32_437 : i32
    %773 = arith.index_cast %772 : i32 to index
    %c19_438 = arith.constant 19 : index
    %774 = memref.load %arg1[%773, %c19_438] : memref<16x32xi32, #tpu.memory_space<smem>>
    %775 = arith.index_cast %774 : i32 to index
    %c0_439 = arith.constant 0 : index
    %776 = vector.load %arg2[%775, %c0_439] : memref<256x16xf32, #tpu.memory_space<vmem>>, vector<1x16xf32>
    %c4_i32_440 = arith.constant 4 : i32
    %777 = arith.addi %0, %c4_i32_440 : i32
    %778 = arith.index_cast %777 : i32 to index
    %c20_441 = arith.constant 20 : index
    %779 = memref.load %arg1[%778, %c20_441] : memref<16x32xi32, #tpu.memory_space<smem>>
    %780 = arith.index_cast %779 : i32 to index
    %c0_442 = arith.constant 0 : index
    %781 = vector.load %arg2[%780, %c0_442] : memref<256x16xf32, #tpu.memory_space<vmem>>, vector<1x16xf32>
    %c4_i32_443 = arith.constant 4 : i32
    %782 = arith.addi %0, %c4_i32_443 : i32
    %783 = arith.index_cast %782 : i32 to index
    %c21_444 = arith.constant 21 : index
    %784 = memref.load %arg1[%783, %c21_444] : memref<16x32xi32, #tpu.memory_space<smem>>
    %785 = arith.index_cast %784 : i32 to index
    %c0_445 = arith.constant 0 : index
    %786 = vector.load %arg2[%785, %c0_445] : memref<256x16xf32, #tpu.memory_space<vmem>>, vector<1x16xf32>
    %c4_i32_446 = arith.constant 4 : i32
    %787 = arith.addi %0, %c4_i32_446 : i32
    %788 = arith.index_cast %787 : i32 to index
    %c22_447 = arith.constant 22 : index
    %789 = memref.load %arg1[%788, %c22_447] : memref<16x32xi32, #tpu.memory_space<smem>>
    %790 = arith.index_cast %789 : i32 to index
    %c0_448 = arith.constant 0 : index
    %791 = vector.load %arg2[%790, %c0_448] : memref<256x16xf32, #tpu.memory_space<vmem>>, vector<1x16xf32>
    %c4_i32_449 = arith.constant 4 : i32
    %792 = arith.addi %0, %c4_i32_449 : i32
    %793 = arith.index_cast %792 : i32 to index
    %c23_450 = arith.constant 23 : index
    %794 = memref.load %arg1[%793, %c23_450] : memref<16x32xi32, #tpu.memory_space<smem>>
    %795 = arith.index_cast %794 : i32 to index
    %c0_451 = arith.constant 0 : index
    %796 = vector.load %arg2[%795, %c0_451] : memref<256x16xf32, #tpu.memory_space<vmem>>, vector<1x16xf32>
    %797 = tpu.concatenate %761, %766, %771, %776, %781, %786, %791, %796 in 1 : vector<1x16xf32>, vector<1x16xf32>, vector<1x16xf32>, vector<1x16xf32>, vector<1x16xf32>, vector<1x16xf32>, vector<1x16xf32>, vector<1x16xf32> -> vector<1x128xf32>
    %c4_452 = arith.constant 4 : index
    %c256_453 = arith.constant 256 : index
    %798 = vector.load %arg8[%c4_452, %c256_453] : memref<8x512xf32, #tpu.memory_space<vmem>>, vector<1x128xf32>
    tpu.vector_store %arg8[%c4_452, %c256_453], %797 {strides = array<i32>} : memref<8x512xf32, #tpu.memory_space<vmem>>, vector<1x128xf32>,
    %c4_i32_454 = arith.constant 4 : i32
    %799 = arith.addi %0, %c4_i32_454 : i32
    %800 = arith.index_cast %799 : i32 to index
    %c24_455 = arith.constant 24 : index
    %801 = memref.load %arg1[%800, %c24_455] : memref<16x32xi32, #tpu.memory_space<smem>>
    %802 = arith.index_cast %801 : i32 to index
    %c0_456 = arith.constant 0 : index
    %803 = vector.load %arg2[%802, %c0_456] : memref<256x16xf32, #tpu.memory_space<vmem>>, vector<1x16xf32>
    %c4_i32_457 = arith.constant 4 : i32
    %804 = arith.addi %0, %c4_i32_457 : i32
    %805 = arith.index_cast %804 : i32 to index
    %c25_458 = arith.constant 25 : index
    %806 = memref.load %arg1[%805, %c25_458] : memref<16x32xi32, #tpu.memory_space<smem>>
    %807 = arith.index_cast %806 : i32 to index
    %c0_459 = arith.constant 0 : index
    %808 = vector.load %arg2[%807, %c0_459] : memref<256x16xf32, #tpu.memory_space<vmem>>, vector<1x16xf32>
    %c4_i32_460 = arith.constant 4 : i32
    %809 = arith.addi %0, %c4_i32_460 : i32
    %810 = arith.index_cast %809 : i32 to index
    %c26_461 = arith.constant 26 : index
    %811 = memref.load %arg1[%810, %c26_461] : memref<16x32xi32, #tpu.memory_space<smem>>
    %812 = arith.index_cast %811 : i32 to index
    %c0_462 = arith.constant 0 : index
    %813 = vector.load %arg2[%812, %c0_462] : memref<256x16xf32, #tpu.memory_space<vmem>>, vector<1x16xf32>
    %c4_i32_463 = arith.constant 4 : i32
    %814 = arith.addi %0, %c4_i32_463 : i32
    %815 = arith.index_cast %814 : i32 to index
    %c27_464 = arith.constant 27 : index
    %816 = memref.load %arg1[%815, %c27_464] : memref<16x32xi32, #tpu.memory_space<smem>>
    %817 = arith.index_cast %816 : i32 to index
    %c0_465 = arith.constant 0 : index
    %818 = vector.load %arg2[%817, %c0_465] : memref<256x16xf32, #tpu.memory_space<vmem>>, vector<1x16xf32>
    %c4_i32_466 = arith.constant 4 : i32
    %819 = arith.addi %0, %c4_i32_466 : i32
    %820 = arith.index_cast %819 : i32 to index
    %c28_467 = arith.constant 28 : index
    %821 = memref.load %arg1[%820, %c28_467] : memref<16x32xi32, #tpu.memory_space<smem>>
    %822 = arith.index_cast %821 : i32 to index
    %c0_468 = arith.constant 0 : index
    %823 = vector.load %arg2[%822, %c0_468] : memref<256x16xf32, #tpu.memory_space<vmem>>, vector<1x16xf32>
    %c4_i32_469 = arith.constant 4 : i32
    %824 = arith.addi %0, %c4_i32_469 : i32
    %825 = arith.index_cast %824 : i32 to index
    %c29_470 = arith.constant 29 : index
    %826 = memref.load %arg1[%825, %c29_470] : memref<16x32xi32, #tpu.memory_space<smem>>
    %827 = arith.index_cast %826 : i32 to index
    %c0_471 = arith.constant 0 : index
    %828 = vector.load %arg2[%827, %c0_471] : memref<256x16xf32, #tpu.memory_space<vmem>>, vector<1x16xf32>
    %c4_i32_472 = arith.constant 4 : i32
    %829 = arith.addi %0, %c4_i32_472 : i32
    %830 = arith.index_cast %829 : i32 to index
    %c30_473 = arith.constant 30 : index
    %831 = memref.load %arg1[%830, %c30_473] : memref<16x32xi32, #tpu.memory_space<smem>>
    %832 = arith.index_cast %831 : i32 to index
    %c0_474 = arith.constant 0 : index
    %833 = vector.load %arg2[%832, %c0_474] : memref<256x16xf32, #tpu.memory_space<vmem>>, vector<1x16xf32>
    %c4_i32_475 = arith.constant 4 : i32
    %834 = arith.addi %0, %c4_i32_475 : i32
    %835 = arith.index_cast %834 : i32 to index
    %c31_476 = arith.constant 31 : index
    %836 = memref.load %arg1[%835, %c31_476] : memref<16x32xi32, #tpu.memory_space<smem>>
    %837 = arith.index_cast %836 : i32 to index
    %c0_477 = arith.constant 0 : index
    %838 = vector.load %arg2[%837, %c0_477] : memref<256x16xf32, #tpu.memory_space<vmem>>, vector<1x16xf32>
    %839 = tpu.concatenate %803, %808, %813, %818, %823, %828, %833, %838 in 1 : vector<1x16xf32>, vector<1x16xf32>, vector<1x16xf32>, vector<1x16xf32>, vector<1x16xf32>, vector<1x16xf32>, vector<1x16xf32>, vector<1x16xf32> -> vector<1x128xf32>
    %c4_478 = arith.constant 4 : index
    %c384_479 = arith.constant 384 : index
    %840 = vector.load %arg8[%c4_478, %c384_479] : memref<8x512xf32, #tpu.memory_space<vmem>>, vector<1x128xf32>
    tpu.vector_store %arg8[%c4_478, %c384_479], %839 {strides = array<i32>} : memref<8x512xf32, #tpu.memory_space<vmem>>, vector<1x128xf32>,
    %c5_i32 = arith.constant 5 : i32
    %841 = arith.addi %0, %c5_i32 : i32
    %842 = arith.index_cast %841 : i32 to index
    %c0_480 = arith.constant 0 : index
    %843 = memref.load %arg1[%842, %c0_480] : memref<16x32xi32, #tpu.memory_space<smem>>
    %844 = arith.index_cast %843 : i32 to index
    %c0_481 = arith.constant 0 : index
    %845 = vector.load %arg2[%844, %c0_481] : memref<256x16xf32, #tpu.memory_space<vmem>>, vector<1x16xf32>
    %c5_i32_482 = arith.constant 5 : i32
    %846 = arith.addi %0, %c5_i32_482 : i32
    %847 = arith.index_cast %846 : i32 to index
    %c1_483 = arith.constant 1 : index
    %848 = memref.load %arg1[%847, %c1_483] : memref<16x32xi32, #tpu.memory_space<smem>>
    %849 = arith.index_cast %848 : i32 to index
    %c0_484 = arith.constant 0 : index
    %850 = vector.load %arg2[%849, %c0_484] : memref<256x16xf32, #tpu.memory_space<vmem>>, vector<1x16xf32>
    %c5_i32_485 = arith.constant 5 : i32
    %851 = arith.addi %0, %c5_i32_485 : i32
    %852 = arith.index_cast %851 : i32 to index
    %c2_486 = arith.constant 2 : index
    %853 = memref.load %arg1[%852, %c2_486] : memref<16x32xi32, #tpu.memory_space<smem>>
    %854 = arith.index_cast %853 : i32 to index
    %c0_487 = arith.constant 0 : index
    %855 = vector.load %arg2[%854, %c0_487] : memref<256x16xf32, #tpu.memory_space<vmem>>, vector<1x16xf32>
    %c5_i32_488 = arith.constant 5 : i32
    %856 = arith.addi %0, %c5_i32_488 : i32
    %857 = arith.index_cast %856 : i32 to index
    %c3_489 = arith.constant 3 : index
    %858 = memref.load %arg1[%857, %c3_489] : memref<16x32xi32, #tpu.memory_space<smem>>
    %859 = arith.index_cast %858 : i32 to index
    %c0_490 = arith.constant 0 : index
    %860 = vector.load %arg2[%859, %c0_490] : memref<256x16xf32, #tpu.memory_space<vmem>>, vector<1x16xf32>
    %c5_i32_491 = arith.constant 5 : i32
    %861 = arith.addi %0, %c5_i32_491 : i32
    %862 = arith.index_cast %861 : i32 to index
    %c4_492 = arith.constant 4 : index
    %863 = memref.load %arg1[%862, %c4_492] : memref<16x32xi32, #tpu.memory_space<smem>>
    %864 = arith.index_cast %863 : i32 to index
    %c0_493 = arith.constant 0 : index
    %865 = vector.load %arg2[%864, %c0_493] : memref<256x16xf32, #tpu.memory_space<vmem>>, vector<1x16xf32>
    %c5_i32_494 = arith.constant 5 : i32
    %866 = arith.addi %0, %c5_i32_494 : i32
    %867 = arith.index_cast %866 : i32 to index
    %c5_495 = arith.constant 5 : index
    %868 = memref.load %arg1[%867, %c5_495] : memref<16x32xi32, #tpu.memory_space<smem>>
    %869 = arith.index_cast %868 : i32 to index
    %c0_496 = arith.constant 0 : index
    %870 = vector.load %arg2[%869, %c0_496] : memref<256x16xf32, #tpu.memory_space<vmem>>, vector<1x16xf32>
    %c5_i32_497 = arith.constant 5 : i32
    %871 = arith.addi %0, %c5_i32_497 : i32
    %872 = arith.index_cast %871 : i32 to index
    %c6_498 = arith.constant 6 : index
    %873 = memref.load %arg1[%872, %c6_498] : memref<16x32xi32, #tpu.memory_space<smem>>
    %874 = arith.index_cast %873 : i32 to index
    %c0_499 = arith.constant 0 : index
    %875 = vector.load %arg2[%874, %c0_499] : memref<256x16xf32, #tpu.memory_space<vmem>>, vector<1x16xf32>
    %c5_i32_500 = arith.constant 5 : i32
    %876 = arith.addi %0, %c5_i32_500 : i32
    %877 = arith.index_cast %876 : i32 to index
    %c7_501 = arith.constant 7 : index
    %878 = memref.load %arg1[%877, %c7_501] : memref<16x32xi32, #tpu.memory_space<smem>>
    %879 = arith.index_cast %878 : i32 to index
    %c0_502 = arith.constant 0 : index
    %880 = vector.load %arg2[%879, %c0_502] : memref<256x16xf32, #tpu.memory_space<vmem>>, vector<1x16xf32>
    %881 = tpu.concatenate %845, %850, %855, %860, %865, %870, %875, %880 in 1 : vector<1x16xf32>, vector<1x16xf32>, vector<1x16xf32>, vector<1x16xf32>, vector<1x16xf32>, vector<1x16xf32>, vector<1x16xf32>, vector<1x16xf32> -> vector<1x128xf32>
    %c5_503 = arith.constant 5 : index
    %c0_504 = arith.constant 0 : index
    %882 = vector.load %arg8[%c5_503, %c0_504] : memref<8x512xf32, #tpu.memory_space<vmem>>, vector<1x128xf32>
    tpu.vector_store %arg8[%c5_503, %c0_504], %881 {strides = array<i32>} : memref<8x512xf32, #tpu.memory_space<vmem>>, vector<1x128xf32>,
    %c5_i32_505 = arith.constant 5 : i32
    %883 = arith.addi %0, %c5_i32_505 : i32
    %884 = arith.index_cast %883 : i32 to index
    %c8_506 = arith.constant 8 : index
    %885 = memref.load %arg1[%884, %c8_506] : memref<16x32xi32, #tpu.memory_space<smem>>
    %886 = arith.index_cast %885 : i32 to index
    %c0_507 = arith.constant 0 : index
    %887 = vector.load %arg2[%886, %c0_507] : memref<256x16xf32, #tpu.memory_space<vmem>>, vector<1x16xf32>
    %c5_i32_508 = arith.constant 5 : i32
    %888 = arith.addi %0, %c5_i32_508 : i32
    %889 = arith.index_cast %888 : i32 to index
    %c9_509 = arith.constant 9 : index
    %890 = memref.load %arg1[%889, %c9_509] : memref<16x32xi32, #tpu.memory_space<smem>>
    %891 = arith.index_cast %890 : i32 to index
    %c0_510 = arith.constant 0 : index
    %892 = vector.load %arg2[%891, %c0_510] : memref<256x16xf32, #tpu.memory_space<vmem>>, vector<1x16xf32>
    %c5_i32_511 = arith.constant 5 : i32
    %893 = arith.addi %0, %c5_i32_511 : i32
    %894 = arith.index_cast %893 : i32 to index
    %c10_512 = arith.constant 10 : index
    %895 = memref.load %arg1[%894, %c10_512] : memref<16x32xi32, #tpu.memory_space<smem>>
    %896 = arith.index_cast %895 : i32 to index
    %c0_513 = arith.constant 0 : index
    %897 = vector.load %arg2[%896, %c0_513] : memref<256x16xf32, #tpu.memory_space<vmem>>, vector<1x16xf32>
    %c5_i32_514 = arith.constant 5 : i32
    %898 = arith.addi %0, %c5_i32_514 : i32
    %899 = arith.index_cast %898 : i32 to index
    %c11_515 = arith.constant 11 : index
    %900 = memref.load %arg1[%899, %c11_515] : memref<16x32xi32, #tpu.memory_space<smem>>
    %901 = arith.index_cast %900 : i32 to index
    %c0_516 = arith.constant 0 : index
    %902 = vector.load %arg2[%901, %c0_516] : memref<256x16xf32, #tpu.memory_space<vmem>>, vector<1x16xf32>
    %c5_i32_517 = arith.constant 5 : i32
    %903 = arith.addi %0, %c5_i32_517 : i32
    %904 = arith.index_cast %903 : i32 to index
    %c12_518 = arith.constant 12 : index
    %905 = memref.load %arg1[%904, %c12_518] : memref<16x32xi32, #tpu.memory_space<smem>>
    %906 = arith.index_cast %905 : i32 to index
    %c0_519 = arith.constant 0 : index
    %907 = vector.load %arg2[%906, %c0_519] : memref<256x16xf32, #tpu.memory_space<vmem>>, vector<1x16xf32>
    %c5_i32_520 = arith.constant 5 : i32
    %908 = arith.addi %0, %c5_i32_520 : i32
    %909 = arith.index_cast %908 : i32 to index
    %c13_521 = arith.constant 13 : index
    %910 = memref.load %arg1[%909, %c13_521] : memref<16x32xi32, #tpu.memory_space<smem>>
    %911 = arith.index_cast %910 : i32 to index
    %c0_522 = arith.constant 0 : index
    %912 = vector.load %arg2[%911, %c0_522] : memref<256x16xf32, #tpu.memory_space<vmem>>, vector<1x16xf32>
    %c5_i32_523 = arith.constant 5 : i32
    %913 = arith.addi %0, %c5_i32_523 : i32
    %914 = arith.index_cast %913 : i32 to index
    %c14_524 = arith.constant 14 : index
    %915 = memref.load %arg1[%914, %c14_524] : memref<16x32xi32, #tpu.memory_space<smem>>
    %916 = arith.index_cast %915 : i32 to index
    %c0_525 = arith.constant 0 : index
    %917 = vector.load %arg2[%916, %c0_525] : memref<256x16xf32, #tpu.memory_space<vmem>>, vector<1x16xf32>
    %c5_i32_526 = arith.constant 5 : i32
    %918 = arith.addi %0, %c5_i32_526 : i32
    %919 = arith.index_cast %918 : i32 to index
    %c15_527 = arith.constant 15 : index
    %920 = memref.load %arg1[%919, %c15_527] : memref<16x32xi32, #tpu.memory_space<smem>>
    %921 = arith.index_cast %920 : i32 to index
    %c0_528 = arith.constant 0 : index
    %922 = vector.load %arg2[%921, %c0_528] : memref<256x16xf32, #tpu.memory_space<vmem>>, vector<1x16xf32>
    %923 = tpu.concatenate %887, %892, %897, %902, %907, %912, %917, %922 in 1 : vector<1x16xf32>, vector<1x16xf32>, vector<1x16xf32>, vector<1x16xf32>, vector<1x16xf32>, vector<1x16xf32>, vector<1x16xf32>, vector<1x16xf32> -> vector<1x128xf32>
    %c5_529 = arith.constant 5 : index
    %c128_530 = arith.constant 128 : index
    %924 = vector.load %arg8[%c5_529, %c128_530] : memref<8x512xf32, #tpu.memory_space<vmem>>, vector<1x128xf32>
    tpu.vector_store %arg8[%c5_529, %c128_530], %923 {strides = array<i32>} : memref<8x512xf32, #tpu.memory_space<vmem>>, vector<1x128xf32>,
    %c5_i32_531 = arith.constant 5 : i32
    %925 = arith.addi %0, %c5_i32_531 : i32
    %926 = arith.index_cast %925 : i32 to index
    %c16_532 = arith.constant 16 : index
    %927 = memref.load %arg1[%926, %c16_532] : memref<16x32xi32, #tpu.memory_space<smem>>
    %928 = arith.index_cast %927 : i32 to index
    %c0_533 = arith.constant 0 : index
    %929 = vector.load %arg2[%928, %c0_533] : memref<256x16xf32, #tpu.memory_space<vmem>>, vector<1x16xf32>
    %c5_i32_534 = arith.constant 5 : i32
    %930 = arith.addi %0, %c5_i32_534 : i32
    %931 = arith.index_cast %930 : i32 to index
    %c17_535 = arith.constant 17 : index
    %932 = memref.load %arg1[%931, %c17_535] : memref<16x32xi32, #tpu.memory_space<smem>>
    %933 = arith.index_cast %932 : i32 to index
    %c0_536 = arith.constant 0 : index
    %934 = vector.load %arg2[%933, %c0_536] : memref<256x16xf32, #tpu.memory_space<vmem>>, vector<1x16xf32>
    %c5_i32_537 = arith.constant 5 : i32
    %935 = arith.addi %0, %c5_i32_537 : i32
    %936 = arith.index_cast %935 : i32 to index
    %c18_538 = arith.constant 18 : index
    %937 = memref.load %arg1[%936, %c18_538] : memref<16x32xi32, #tpu.memory_space<smem>>
    %938 = arith.index_cast %937 : i32 to index
    %c0_539 = arith.constant 0 : index
    %939 = vector.load %arg2[%938, %c0_539] : memref<256x16xf32, #tpu.memory_space<vmem>>, vector<1x16xf32>
    %c5_i32_540 = arith.constant 5 : i32
    %940 = arith.addi %0, %c5_i32_540 : i32
    %941 = arith.index_cast %940 : i32 to index
    %c19_541 = arith.constant 19 : index
    %942 = memref.load %arg1[%941, %c19_541] : memref<16x32xi32, #tpu.memory_space<smem>>
    %943 = arith.index_cast %942 : i32 to index
    %c0_542 = arith.constant 0 : index
    %944 = vector.load %arg2[%943, %c0_542] : memref<256x16xf32, #tpu.memory_space<vmem>>, vector<1x16xf32>
    %c5_i32_543 = arith.constant 5 : i32
    %945 = arith.addi %0, %c5_i32_543 : i32
    %946 = arith.index_cast %945 : i32 to index
    %c20_544 = arith.constant 20 : index
    %947 = memref.load %arg1[%946, %c20_544] : memref<16x32xi32, #tpu.memory_space<smem>>
    %948 = arith.index_cast %947 : i32 to index
    %c0_545 = arith.constant 0 : index
    %949 = vector.load %arg2[%948, %c0_545] : memref<256x16xf32, #tpu.memory_space<vmem>>, vector<1x16xf32>
    %c5_i32_546 = arith.constant 5 : i32
    %950 = arith.addi %0, %c5_i32_546 : i32
    %951 = arith.index_cast %950 : i32 to index
    %c21_547 = arith.constant 21 : index
    %952 = memref.load %arg1[%951, %c21_547] : memref<16x32xi32, #tpu.memory_space<smem>>
    %953 = arith.index_cast %952 : i32 to index
    %c0_548 = arith.constant 0 : index
    %954 = vector.load %arg2[%953, %c0_548] : memref<256x16xf32, #tpu.memory_space<vmem>>, vector<1x16xf32>
    %c5_i32_549 = arith.constant 5 : i32
    %955 = arith.addi %0, %c5_i32_549 : i32
    %956 = arith.index_cast %955 : i32 to index
    %c22_550 = arith.constant 22 : index
    %957 = memref.load %arg1[%956, %c22_550] : memref<16x32xi32, #tpu.memory_space<smem>>
    %958 = arith.index_cast %957 : i32 to index
    %c0_551 = arith.constant 0 : index
    %959 = vector.load %arg2[%958, %c0_551] : memref<256x16xf32, #tpu.memory_space<vmem>>, vector<1x16xf32>
    %c5_i32_552 = arith.constant 5 : i32
    %960 = arith.addi %0, %c5_i32_552 : i32
    %961 = arith.index_cast %960 : i32 to index
    %c23_553 = arith.constant 23 : index
    %962 = memref.load %arg1[%961, %c23_553] : memref<16x32xi32, #tpu.memory_space<smem>>
    %963 = arith.index_cast %962 : i32 to index
    %c0_554 = arith.constant 0 : index
    %964 = vector.load %arg2[%963, %c0_554] : memref<256x16xf32, #tpu.memory_space<vmem>>, vector<1x16xf32>
    %965 = tpu.concatenate %929, %934, %939, %944, %949, %954, %959, %964 in 1 : vector<1x16xf32>, vector<1x16xf32>, vector<1x16xf32>, vector<1x16xf32>, vector<1x16xf32>, vector<1x16xf32>, vector<1x16xf32>, vector<1x16xf32> -> vector<1x128xf32>
    %c5_555 = arith.constant 5 : index
    %c256_556 = arith.constant 256 : index
    %966 = vector.load %arg8[%c5_555, %c256_556] : memref<8x512xf32, #tpu.memory_space<vmem>>, vector<1x128xf32>
    tpu.vector_store %arg8[%c5_555, %c256_556], %965 {strides = array<i32>} : memref<8x512xf32, #tpu.memory_space<vmem>>, vector<1x128xf32>,
    %c5_i32_557 = arith.constant 5 : i32
    %967 = arith.addi %0, %c5_i32_557 : i32
    %968 = arith.index_cast %967 : i32 to index
    %c24_558 = arith.constant 24 : index
    %969 = memref.load %arg1[%968, %c24_558] : memref<16x32xi32, #tpu.memory_space<smem>>
    %970 = arith.index_cast %969 : i32 to index
    %c0_559 = arith.constant 0 : index
    %971 = vector.load %arg2[%970, %c0_559] : memref<256x16xf32, #tpu.memory_space<vmem>>, vector<1x16xf32>
    %c5_i32_560 = arith.constant 5 : i32
    %972 = arith.addi %0, %c5_i32_560 : i32
    %973 = arith.index_cast %972 : i32 to index
    %c25_561 = arith.constant 25 : index
    %974 = memref.load %arg1[%973, %c25_561] : memref<16x32xi32, #tpu.memory_space<smem>>
    %975 = arith.index_cast %974 : i32 to index
    %c0_562 = arith.constant 0 : index
    %976 = vector.load %arg2[%975, %c0_562] : memref<256x16xf32, #tpu.memory_space<vmem>>, vector<1x16xf32>
    %c5_i32_563 = arith.constant 5 : i32
    %977 = arith.addi %0, %c5_i32_563 : i32
    %978 = arith.index_cast %977 : i32 to index
    %c26_564 = arith.constant 26 : index
    %979 = memref.load %arg1[%978, %c26_564] : memref<16x32xi32, #tpu.memory_space<smem>>
    %980 = arith.index_cast %979 : i32 to index
    %c0_565 = arith.constant 0 : index
    %981 = vector.load %arg2[%980, %c0_565] : memref<256x16xf32, #tpu.memory_space<vmem>>, vector<1x16xf32>
    %c5_i32_566 = arith.constant 5 : i32
    %982 = arith.addi %0, %c5_i32_566 : i32
    %983 = arith.index_cast %982 : i32 to index
    %c27_567 = arith.constant 27 : index
    %984 = memref.load %arg1[%983, %c27_567] : memref<16x32xi32, #tpu.memory_space<smem>>
    %985 = arith.index_cast %984 : i32 to index
    %c0_568 = arith.constant 0 : index
    %986 = vector.load %arg2[%985, %c0_568] : memref<256x16xf32, #tpu.memory_space<vmem>>, vector<1x16xf32>
    %c5_i32_569 = arith.constant 5 : i32
    %987 = arith.addi %0, %c5_i32_569 : i32
    %988 = arith.index_cast %987 : i32 to index
    %c28_570 = arith.constant 28 : index
    %989 = memref.load %arg1[%988, %c28_570] : memref<16x32xi32, #tpu.memory_space<smem>>
    %990 = arith.index_cast %989 : i32 to index
    %c0_571 = arith.constant 0 : index
    %991 = vector.load %arg2[%990, %c0_571] : memref<256x16xf32, #tpu.memory_space<vmem>>, vector<1x16xf32>
    %c5_i32_572 = arith.constant 5 : i32
    %992 = arith.addi %0, %c5_i32_572 : i32
    %993 = arith.index_cast %992 : i32 to index
    %c29_573 = arith.constant 29 : index
    %994 = memref.load %arg1[%993, %c29_573] : memref<16x32xi32, #tpu.memory_space<smem>>
    %995 = arith.index_cast %994 : i32 to index
    %c0_574 = arith.constant 0 : index
    %996 = vector.load %arg2[%995, %c0_574] : memref<256x16xf32, #tpu.memory_space<vmem>>, vector<1x16xf32>
    %c5_i32_575 = arith.constant 5 : i32
    %997 = arith.addi %0, %c5_i32_575 : i32
    %998 = arith.index_cast %997 : i32 to index
    %c30_576 = arith.constant 30 : index
    %999 = memref.load %arg1[%998, %c30_576] : memref<16x32xi32, #tpu.memory_space<smem>>
    %1000 = arith.index_cast %999 : i32 to index
    %c0_577 = arith.constant 0 : index
    %1001 = vector.load %arg2[%1000, %c0_577] : memref<256x16xf32, #tpu.memory_space<vmem>>, vector<1x16xf32>
    %c5_i32_578 = arith.constant 5 : i32
    %1002 = arith.addi %0, %c5_i32_578 : i32
    %1003 = arith.index_cast %1002 : i32 to index
    %c31_579 = arith.constant 31 : index
    %1004 = memref.load %arg1[%1003, %c31_579] : memref<16x32xi32, #tpu.memory_space<smem>>
    %1005 = arith.index_cast %1004 : i32 to index
    %c0_580 = arith.constant 0 : index
    %1006 = vector.load %arg2[%1005, %c0_580] : memref<256x16xf32, #tpu.memory_space<vmem>>, vector<1x16xf32>
    %1007 = tpu.concatenate %971, %976, %981, %986, %991, %996, %1001, %1006 in 1 : vector<1x16xf32>, vector<1x16xf32>, vector<1x16xf32>, vector<1x16xf32>, vector<1x16xf32>, vector<1x16xf32>, vector<1x16xf32>, vector<1x16xf32> -> vector<1x128xf32>
    %c5_581 = arith.constant 5 : index
    %c384_582 = arith.constant 384 : index
    %1008 = vector.load %arg8[%c5_581, %c384_582] : memref<8x512xf32, #tpu.memory_space<vmem>>, vector<1x128xf32>
    tpu.vector_store %arg8[%c5_581, %c384_582], %1007 {strides = array<i32>} : memref<8x512xf32, #tpu.memory_space<vmem>>, vector<1x128xf32>,
    %c6_i32 = arith.constant 6 : i32
    %1009 = arith.addi %0, %c6_i32 : i32
    %1010 = arith.index_cast %1009 : i32 to index
    %c0_583 = arith.constant 0 : index
    %1011 = memref.load %arg1[%1010, %c0_583] : memref<16x32xi32, #tpu.memory_space<smem>>
    %1012 = arith.index_cast %1011 : i32 to index
    %c0_584 = arith.constant 0 : index
    %1013 = vector.load %arg2[%1012, %c0_584] : memref<256x16xf32, #tpu.memory_space<vmem>>, vector<1x16xf32>
    %c6_i32_585 = arith.constant 6 : i32
    %1014 = arith.addi %0, %c6_i32_585 : i32
    %1015 = arith.index_cast %1014 : i32 to index
    %c1_586 = arith.constant 1 : index
    %1016 = memref.load %arg1[%1015, %c1_586] : memref<16x32xi32, #tpu.memory_space<smem>>
    %1017 = arith.index_cast %1016 : i32 to index
    %c0_587 = arith.constant 0 : index
    %1018 = vector.load %arg2[%1017, %c0_587] : memref<256x16xf32, #tpu.memory_space<vmem>>, vector<1x16xf32>
    %c6_i32_588 = arith.constant 6 : i32
    %1019 = arith.addi %0, %c6_i32_588 : i32
    %1020 = arith.index_cast %1019 : i32 to index
    %c2_589 = arith.constant 2 : index
    %1021 = memref.load %arg1[%1020, %c2_589] : memref<16x32xi32, #tpu.memory_space<smem>>
    %1022 = arith.index_cast %1021 : i32 to index
    %c0_590 = arith.constant 0 : index
    %1023 = vector.load %arg2[%1022, %c0_590] : memref<256x16xf32, #tpu.memory_space<vmem>>, vector<1x16xf32>
    %c6_i32_591 = arith.constant 6 : i32
    %1024 = arith.addi %0, %c6_i32_591 : i32
    %1025 = arith.index_cast %1024 : i32 to index
    %c3_592 = arith.constant 3 : index
    %1026 = memref.load %arg1[%1025, %c3_592] : memref<16x32xi32, #tpu.memory_space<smem>>
    %1027 = arith.index_cast %1026 : i32 to index
    %c0_593 = arith.constant 0 : index
    %1028 = vector.load %arg2[%1027, %c0_593] : memref<256x16xf32, #tpu.memory_space<vmem>>, vector<1x16xf32>
    %c6_i32_594 = arith.constant 6 : i32
    %1029 = arith.addi %0, %c6_i32_594 : i32
    %1030 = arith.index_cast %1029 : i32 to index
    %c4_595 = arith.constant 4 : index
    %1031 = memref.load %arg1[%1030, %c4_595] : memref<16x32xi32, #tpu.memory_space<smem>>
    %1032 = arith.index_cast %1031 : i32 to index
    %c0_596 = arith.constant 0 : index
    %1033 = vector.load %arg2[%1032, %c0_596] : memref<256x16xf32, #tpu.memory_space<vmem>>, vector<1x16xf32>
    %c6_i32_597 = arith.constant 6 : i32
    %1034 = arith.addi %0, %c6_i32_597 : i32
    %1035 = arith.index_cast %1034 : i32 to index
    %c5_598 = arith.constant 5 : index
    %1036 = memref.load %arg1[%1035, %c5_598] : memref<16x32xi32, #tpu.memory_space<smem>>
    %1037 = arith.index_cast %1036 : i32 to index
    %c0_599 = arith.constant 0 : index
    %1038 = vector.load %arg2[%1037, %c0_599] : memref<256x16xf32, #tpu.memory_space<vmem>>, vector<1x16xf32>
    %c6_i32_600 = arith.constant 6 : i32
    %1039 = arith.addi %0, %c6_i32_600 : i32
    %1040 = arith.index_cast %1039 : i32 to index
    %c6_601 = arith.constant 6 : index
    %1041 = memref.load %arg1[%1040, %c6_601] : memref<16x32xi32, #tpu.memory_space<smem>>
    %1042 = arith.index_cast %1041 : i32 to index
    %c0_602 = arith.constant 0 : index
    %1043 = vector.load %arg2[%1042, %c0_602] : memref<256x16xf32, #tpu.memory_space<vmem>>, vector<1x16xf32>
    %c6_i32_603 = arith.constant 6 : i32
    %1044 = arith.addi %0, %c6_i32_603 : i32
    %1045 = arith.index_cast %1044 : i32 to index
    %c7_604 = arith.constant 7 : index
    %1046 = memref.load %arg1[%1045, %c7_604] : memref<16x32xi32, #tpu.memory_space<smem>>
    %1047 = arith.index_cast %1046 : i32 to index
    %c0_605 = arith.constant 0 : index
    %1048 = vector.load %arg2[%1047, %c0_605] : memref<256x16xf32, #tpu.memory_space<vmem>>, vector<1x16xf32>
    %1049 = tpu.concatenate %1013, %1018, %1023, %1028, %1033, %1038, %1043, %1048 in 1 : vector<1x16xf32>, vector<1x16xf32>, vector<1x16xf32>, vector<1x16xf32>, vector<1x16xf32>, vector<1x16xf32>, vector<1x16xf32>, vector<1x16xf32> -> vector<1x128xf32>
    %c6_606 = arith.constant 6 : index
    %c0_607 = arith.constant 0 : index
    %1050 = vector.load %arg8[%c6_606, %c0_607] : memref<8x512xf32, #tpu.memory_space<vmem>>, vector<1x128xf32>
    tpu.vector_store %arg8[%c6_606, %c0_607], %1049 {strides = array<i32>} : memref<8x512xf32, #tpu.memory_space<vmem>>, vector<1x128xf32>,
    %c6_i32_608 = arith.constant 6 : i32
    %1051 = arith.addi %0, %c6_i32_608 : i32
    %1052 = arith.index_cast %1051 : i32 to index
    %c8_609 = arith.constant 8 : index
    %1053 = memref.load %arg1[%1052, %c8_609] : memref<16x32xi32, #tpu.memory_space<smem>>
    %1054 = arith.index_cast %1053 : i32 to index
    %c0_610 = arith.constant 0 : index
    %1055 = vector.load %arg2[%1054, %c0_610] : memref<256x16xf32, #tpu.memory_space<vmem>>, vector<1x16xf32>
    %c6_i32_611 = arith.constant 6 : i32
    %1056 = arith.addi %0, %c6_i32_611 : i32
    %1057 = arith.index_cast %1056 : i32 to index
    %c9_612 = arith.constant 9 : index
    %1058 = memref.load %arg1[%1057, %c9_612] : memref<16x32xi32, #tpu.memory_space<smem>>
    %1059 = arith.index_cast %1058 : i32 to index
    %c0_613 = arith.constant 0 : index
    %1060 = vector.load %arg2[%1059, %c0_613] : memref<256x16xf32, #tpu.memory_space<vmem>>, vector<1x16xf32>
    %c6_i32_614 = arith.constant 6 : i32
    %1061 = arith.addi %0, %c6_i32_614 : i32
    %1062 = arith.index_cast %1061 : i32 to index
    %c10_615 = arith.constant 10 : index
    %1063 = memref.load %arg1[%1062, %c10_615] : memref<16x32xi32, #tpu.memory_space<smem>>
    %1064 = arith.index_cast %1063 : i32 to index
    %c0_616 = arith.constant 0 : index
    %1065 = vector.load %arg2[%1064, %c0_616] : memref<256x16xf32, #tpu.memory_space<vmem>>, vector<1x16xf32>
    %c6_i32_617 = arith.constant 6 : i32
    %1066 = arith.addi %0, %c6_i32_617 : i32
    %1067 = arith.index_cast %1066 : i32 to index
    %c11_618 = arith.constant 11 : index
    %1068 = memref.load %arg1[%1067, %c11_618] : memref<16x32xi32, #tpu.memory_space<smem>>
    %1069 = arith.index_cast %1068 : i32 to index
    %c0_619 = arith.constant 0 : index
    %1070 = vector.load %arg2[%1069, %c0_619] : memref<256x16xf32, #tpu.memory_space<vmem>>, vector<1x16xf32>
    %c6_i32_620 = arith.constant 6 : i32
    %1071 = arith.addi %0, %c6_i32_620 : i32
    %1072 = arith.index_cast %1071 : i32 to index
    %c12_621 = arith.constant 12 : index
    %1073 = memref.load %arg1[%1072, %c12_621] : memref<16x32xi32, #tpu.memory_space<smem>>
    %1074 = arith.index_cast %1073 : i32 to index
    %c0_622 = arith.constant 0 : index
    %1075 = vector.load %arg2[%1074, %c0_622] : memref<256x16xf32, #tpu.memory_space<vmem>>, vector<1x16xf32>
    %c6_i32_623 = arith.constant 6 : i32
    %1076 = arith.addi %0, %c6_i32_623 : i32
    %1077 = arith.index_cast %1076 : i32 to index
    %c13_624 = arith.constant 13 : index
    %1078 = memref.load %arg1[%1077, %c13_624] : memref<16x32xi32, #tpu.memory_space<smem>>
    %1079 = arith.index_cast %1078 : i32 to index
    %c0_625 = arith.constant 0 : index
    %1080 = vector.load %arg2[%1079, %c0_625] : memref<256x16xf32, #tpu.memory_space<vmem>>, vector<1x16xf32>
    %c6_i32_626 = arith.constant 6 : i32
    %1081 = arith.addi %0, %c6_i32_626 : i32
    %1082 = arith.index_cast %1081 : i32 to index
    %c14_627 = arith.constant 14 : index
    %1083 = memref.load %arg1[%1082, %c14_627] : memref<16x32xi32, #tpu.memory_space<smem>>
    %1084 = arith.index_cast %1083 : i32 to index
    %c0_628 = arith.constant 0 : index
    %1085 = vector.load %arg2[%1084, %c0_628] : memref<256x16xf32, #tpu.memory_space<vmem>>, vector<1x16xf32>
    %c6_i32_629 = arith.constant 6 : i32
    %1086 = arith.addi %0, %c6_i32_629 : i32
    %1087 = arith.index_cast %1086 : i32 to index
    %c15_630 = arith.constant 15 : index
    %1088 = memref.load %arg1[%1087, %c15_630] : memref<16x32xi32, #tpu.memory_space<smem>>
    %1089 = arith.index_cast %1088 : i32 to index
    %c0_631 = arith.constant 0 : index
    %1090 = vector.load %arg2[%1089, %c0_631] : memref<256x16xf32, #tpu.memory_space<vmem>>, vector<1x16xf32>
    %1091 = tpu.concatenate %1055, %1060, %1065, %1070, %1075, %1080, %1085, %1090 in 1 : vector<1x16xf32>, vector<1x16xf32>, vector<1x16xf32>, vector<1x16xf32>, vector<1x16xf32>, vector<1x16xf32>, vector<1x16xf32>, vector<1x16xf32> -> vector<1x128xf32>
    %c6_632 = arith.constant 6 : index
    %c128_633 = arith.constant 128 : index
    %1092 = vector.load %arg8[%c6_632, %c128_633] : memref<8x512xf32, #tpu.memory_space<vmem>>, vector<1x128xf32>
    tpu.vector_store %arg8[%c6_632, %c128_633], %1091 {strides = array<i32>} : memref<8x512xf32, #tpu.memory_space<vmem>>, vector<1x128xf32>,
    %c6_i32_634 = arith.constant 6 : i32
    %1093 = arith.addi %0, %c6_i32_634 : i32
    %1094 = arith.index_cast %1093 : i32 to index
    %c16_635 = arith.constant 16 : index
    %1095 = memref.load %arg1[%1094, %c16_635] : memref<16x32xi32, #tpu.memory_space<smem>>
    %1096 = arith.index_cast %1095 : i32 to index
    %c0_636 = arith.constant 0 : index
    %1097 = vector.load %arg2[%1096, %c0_636] : memref<256x16xf32, #tpu.memory_space<vmem>>, vector<1x16xf32>
    %c6_i32_637 = arith.constant 6 : i32
    %1098 = arith.addi %0, %c6_i32_637 : i32
    %1099 = arith.index_cast %1098 : i32 to index
    %c17_638 = arith.constant 17 : index
    %1100 = memref.load %arg1[%1099, %c17_638] : memref<16x32xi32, #tpu.memory_space<smem>>
    %1101 = arith.index_cast %1100 : i32 to index
    %c0_639 = arith.constant 0 : index
    %1102 = vector.load %arg2[%1101, %c0_639] : memref<256x16xf32, #tpu.memory_space<vmem>>, vector<1x16xf32>
    %c6_i32_640 = arith.constant 6 : i32
    %1103 = arith.addi %0, %c6_i32_640 : i32
    %1104 = arith.index_cast %1103 : i32 to index
    %c18_641 = arith.constant 18 : index
    %1105 = memref.load %arg1[%1104, %c18_641] : memref<16x32xi32, #tpu.memory_space<smem>>
    %1106 = arith.index_cast %1105 : i32 to index
    %c0_642 = arith.constant 0 : index
    %1107 = vector.load %arg2[%1106, %c0_642] : memref<256x16xf32, #tpu.memory_space<vmem>>, vector<1x16xf32>
    %c6_i32_643 = arith.constant 6 : i32
    %1108 = arith.addi %0, %c6_i32_643 : i32
    %1109 = arith.index_cast %1108 : i32 to index
    %c19_644 = arith.constant 19 : index
    %1110 = memref.load %arg1[%1109, %c19_644] : memref<16x32xi32, #tpu.memory_space<smem>>
    %1111 = arith.index_cast %1110 : i32 to index
    %c0_645 = arith.constant 0 : index
    %1112 = vector.load %arg2[%1111, %c0_645] : memref<256x16xf32, #tpu.memory_space<vmem>>, vector<1x16xf32>
    %c6_i32_646 = arith.constant 6 : i32
    %1113 = arith.addi %0, %c6_i32_646 : i32
    %1114 = arith.index_cast %1113 : i32 to index
    %c20_647 = arith.constant 20 : index
    %1115 = memref.load %arg1[%1114, %c20_647] : memref<16x32xi32, #tpu.memory_space<smem>>
    %1116 = arith.index_cast %1115 : i32 to index
    %c0_648 = arith.constant 0 : index
    %1117 = vector.load %arg2[%1116, %c0_648] : memref<256x16xf32, #tpu.memory_space<vmem>>, vector<1x16xf32>
    %c6_i32_649 = arith.constant 6 : i32
    %1118 = arith.addi %0, %c6_i32_649 : i32
    %1119 = arith.index_cast %1118 : i32 to index
    %c21_650 = arith.constant 21 : index
    %1120 = memref.load %arg1[%1119, %c21_650] : memref<16x32xi32, #tpu.memory_space<smem>>
    %1121 = arith.index_cast %1120 : i32 to index
    %c0_651 = arith.constant 0 : index
    %1122 = vector.load %arg2[%1121, %c0_651] : memref<256x16xf32, #tpu.memory_space<vmem>>, vector<1x16xf32>
    %c6_i32_652 = arith.constant 6 : i32
    %1123 = arith.addi %0, %c6_i32_652 : i32
    %1124 = arith.index_cast %1123 : i32 to index
    %c22_653 = arith.constant 22 : index
    %1125 = memref.load %arg1[%1124, %c22_653] : memref<16x32xi32, #tpu.memory_space<smem>>
    %1126 = arith.index_cast %1125 : i32 to index
    %c0_654 = arith.constant 0 : index
    %1127 = vector.load %arg2[%1126, %c0_654] : memref<256x16xf32, #tpu.memory_space<vmem>>, vector<1x16xf32>
    %c6_i32_655 = arith.constant 6 : i32
    %1128 = arith.addi %0, %c6_i32_655 : i32
    %1129 = arith.index_cast %1128 : i32 to index
    %c23_656 = arith.constant 23 : index
    %1130 = memref.load %arg1[%1129, %c23_656] : memref<16x32xi32, #tpu.memory_space<smem>>
    %1131 = arith.index_cast %1130 : i32 to index
    %c0_657 = arith.constant 0 : index
    %1132 = vector.load %arg2[%1131, %c0_657] : memref<256x16xf32, #tpu.memory_space<vmem>>, vector<1x16xf32>
    %1133 = tpu.concatenate %1097, %1102, %1107, %1112, %1117, %1122, %1127, %1132 in 1 : vector<1x16xf32>, vector<1x16xf32>, vector<1x16xf32>, vector<1x16xf32>, vector<1x16xf32>, vector<1x16xf32>, vector<1x16xf32>, vector<1x16xf32> -> vector<1x128xf32>
    %c6_658 = arith.constant 6 : index
    %c256_659 = arith.constant 256 : index
    %1134 = vector.load %arg8[%c6_658, %c256_659] : memref<8x512xf32, #tpu.memory_space<vmem>>, vector<1x128xf32>
    tpu.vector_store %arg8[%c6_658, %c256_659], %1133 {strides = array<i32>} : memref<8x512xf32, #tpu.memory_space<vmem>>, vector<1x128xf32>,
    %c6_i32_660 = arith.constant 6 : i32
    %1135 = arith.addi %0, %c6_i32_660 : i32
    %1136 = arith.index_cast %1135 : i32 to index
    %c24_661 = arith.constant 24 : index
    %1137 = memref.load %arg1[%1136, %c24_661] : memref<16x32xi32, #tpu.memory_space<smem>>
    %1138 = arith.index_cast %1137 : i32 to index
    %c0_662 = arith.constant 0 : index
    %1139 = vector.load %arg2[%1138, %c0_662] : memref<256x16xf32, #tpu.memory_space<vmem>>, vector<1x16xf32>
    %c6_i32_663 = arith.constant 6 : i32
    %1140 = arith.addi %0, %c6_i32_663 : i32
    %1141 = arith.index_cast %1140 : i32 to index
    %c25_664 = arith.constant 25 : index
    %1142 = memref.load %arg1[%1141, %c25_664] : memref<16x32xi32, #tpu.memory_space<smem>>
    %1143 = arith.index_cast %1142 : i32 to index
    %c0_665 = arith.constant 0 : index
    %1144 = vector.load %arg2[%1143, %c0_665] : memref<256x16xf32, #tpu.memory_space<vmem>>, vector<1x16xf32>
    %c6_i32_666 = arith.constant 6 : i32
    %1145 = arith.addi %0, %c6_i32_666 : i32
    %1146 = arith.index_cast %1145 : i32 to index
    %c26_667 = arith.constant 26 : index
    %1147 = memref.load %arg1[%1146, %c26_667] : memref<16x32xi32, #tpu.memory_space<smem>>
    %1148 = arith.index_cast %1147 : i32 to index
    %c0_668 = arith.constant 0 : index
    %1149 = vector.load %arg2[%1148, %c0_668] : memref<256x16xf32, #tpu.memory_space<vmem>>, vector<1x16xf32>
    %c6_i32_669 = arith.constant 6 : i32
    %1150 = arith.addi %0, %c6_i32_669 : i32
    %1151 = arith.index_cast %1150 : i32 to index
    %c27_670 = arith.constant 27 : index
    %1152 = memref.load %arg1[%1151, %c27_670] : memref<16x32xi32, #tpu.memory_space<smem>>
    %1153 = arith.index_cast %1152 : i32 to index
    %c0_671 = arith.constant 0 : index
    %1154 = vector.load %arg2[%1153, %c0_671] : memref<256x16xf32, #tpu.memory_space<vmem>>, vector<1x16xf32>
    %c6_i32_672 = arith.constant 6 : i32
    %1155 = arith.addi %0, %c6_i32_672 : i32
    %1156 = arith.index_cast %1155 : i32 to index
    %c28_673 = arith.constant 28 : index
    %1157 = memref.load %arg1[%1156, %c28_673] : memref<16x32xi32, #tpu.memory_space<smem>>
    %1158 = arith.index_cast %1157 : i32 to index
    %c0_674 = arith.constant 0 : index
    %1159 = vector.load %arg2[%1158, %c0_674] : memref<256x16xf32, #tpu.memory_space<vmem>>, vector<1x16xf32>
    %c6_i32_675 = arith.constant 6 : i32
    %1160 = arith.addi %0, %c6_i32_675 : i32
    %1161 = arith.index_cast %1160 : i32 to index
    %c29_676 = arith.constant 29 : index
    %1162 = memref.load %arg1[%1161, %c29_676] : memref<16x32xi32, #tpu.memory_space<smem>>
    %1163 = arith.index_cast %1162 : i32 to index
    %c0_677 = arith.constant 0 : index
    %1164 = vector.load %arg2[%1163, %c0_677] : memref<256x16xf32, #tpu.memory_space<vmem>>, vector<1x16xf32>
    %c6_i32_678 = arith.constant 6 : i32
    %1165 = arith.addi %0, %c6_i32_678 : i32
    %1166 = arith.index_cast %1165 : i32 to index
    %c30_679 = arith.constant 30 : index
    %1167 = memref.load %arg1[%1166, %c30_679] : memref<16x32xi32, #tpu.memory_space<smem>>
    %1168 = arith.index_cast %1167 : i32 to index
    %c0_680 = arith.constant 0 : index
    %1169 = vector.load %arg2[%1168, %c0_680] : memref<256x16xf32, #tpu.memory_space<vmem>>, vector<1x16xf32>
    %c6_i32_681 = arith.constant 6 : i32
    %1170 = arith.addi %0, %c6_i32_681 : i32
    %1171 = arith.index_cast %1170 : i32 to index
    %c31_682 = arith.constant 31 : index
    %1172 = memref.load %arg1[%1171, %c31_682] : memref<16x32xi32, #tpu.memory_space<smem>>
    %1173 = arith.index_cast %1172 : i32 to index
    %c0_683 = arith.constant 0 : index
    %1174 = vector.load %arg2[%1173, %c0_683] : memref<256x16xf32, #tpu.memory_space<vmem>>, vector<1x16xf32>
    %1175 = tpu.concatenate %1139, %1144, %1149, %1154, %1159, %1164, %1169, %1174 in 1 : vector<1x16xf32>, vector<1x16xf32>, vector<1x16xf32>, vector<1x16xf32>, vector<1x16xf32>, vector<1x16xf32>, vector<1x16xf32>, vector<1x16xf32> -> vector<1x128xf32>
    %c6_684 = arith.constant 6 : index
    %c384_685 = arith.constant 384 : index
    %1176 = vector.load %arg8[%c6_684, %c384_685] : memref<8x512xf32, #tpu.memory_space<vmem>>, vector<1x128xf32>
    tpu.vector_store %arg8[%c6_684, %c384_685], %1175 {strides = array<i32>} : memref<8x512xf32, #tpu.memory_space<vmem>>, vector<1x128xf32>,
    %c7_i32 = arith.constant 7 : i32
    %1177 = arith.addi %0, %c7_i32 : i32
    %1178 = arith.index_cast %1177 : i32 to index
    %c0_686 = arith.constant 0 : index
    %1179 = memref.load %arg1[%1178, %c0_686] : memref<16x32xi32, #tpu.memory_space<smem>>
    %1180 = arith.index_cast %1179 : i32 to index
    %c0_687 = arith.constant 0 : index
    %1181 = vector.load %arg2[%1180, %c0_687] : memref<256x16xf32, #tpu.memory_space<vmem>>, vector<1x16xf32>
    %c7_i32_688 = arith.constant 7 : i32
    %1182 = arith.addi %0, %c7_i32_688 : i32
    %1183 = arith.index_cast %1182 : i32 to index
    %c1_689 = arith.constant 1 : index
    %1184 = memref.load %arg1[%1183, %c1_689] : memref<16x32xi32, #tpu.memory_space<smem>>
    %1185 = arith.index_cast %1184 : i32 to index
    %c0_690 = arith.constant 0 : index
    %1186 = vector.load %arg2[%1185, %c0_690] : memref<256x16xf32, #tpu.memory_space<vmem>>, vector<1x16xf32>
    %c7_i32_691 = arith.constant 7 : i32
    %1187 = arith.addi %0, %c7_i32_691 : i32
    %1188 = arith.index_cast %1187 : i32 to index
    %c2_692 = arith.constant 2 : index
    %1189 = memref.load %arg1[%1188, %c2_692] : memref<16x32xi32, #tpu.memory_space<smem>>
    %1190 = arith.index_cast %1189 : i32 to index
    %c0_693 = arith.constant 0 : index
    %1191 = vector.load %arg2[%1190, %c0_693] : memref<256x16xf32, #tpu.memory_space<vmem>>, vector<1x16xf32>
    %c7_i32_694 = arith.constant 7 : i32
    %1192 = arith.addi %0, %c7_i32_694 : i32
    %1193 = arith.index_cast %1192 : i32 to index
    %c3_695 = arith.constant 3 : index
    %1194 = memref.load %arg1[%1193, %c3_695] : memref<16x32xi32, #tpu.memory_space<smem>>
    %1195 = arith.index_cast %1194 : i32 to index
    %c0_696 = arith.constant 0 : index
    %1196 = vector.load %arg2[%1195, %c0_696] : memref<256x16xf32, #tpu.memory_space<vmem>>, vector<1x16xf32>
    %c7_i32_697 = arith.constant 7 : i32
    %1197 = arith.addi %0, %c7_i32_697 : i32
    %1198 = arith.index_cast %1197 : i32 to index
    %c4_698 = arith.constant 4 : index
    %1199 = memref.load %arg1[%1198, %c4_698] : memref<16x32xi32, #tpu.memory_space<smem>>
    %1200 = arith.index_cast %1199 : i32 to index
    %c0_699 = arith.constant 0 : index
    %1201 = vector.load %arg2[%1200, %c0_699] : memref<256x16xf32, #tpu.memory_space<vmem>>, vector<1x16xf32>
    %c7_i32_700 = arith.constant 7 : i32
    %1202 = arith.addi %0, %c7_i32_700 : i32
    %1203 = arith.index_cast %1202 : i32 to index
    %c5_701 = arith.constant 5 : index
    %1204 = memref.load %arg1[%1203, %c5_701] : memref<16x32xi32, #tpu.memory_space<smem>>
    %1205 = arith.index_cast %1204 : i32 to index
    %c0_702 = arith.constant 0 : index
    %1206 = vector.load %arg2[%1205, %c0_702] : memref<256x16xf32, #tpu.memory_space<vmem>>, vector<1x16xf32>
    %c7_i32_703 = arith.constant 7 : i32
    %1207 = arith.addi %0, %c7_i32_703 : i32
    %1208 = arith.index_cast %1207 : i32 to index
    %c6_704 = arith.constant 6 : index
    %1209 = memref.load %arg1[%1208, %c6_704] : memref<16x32xi32, #tpu.memory_space<smem>>
    %1210 = arith.index_cast %1209 : i32 to index
    %c0_705 = arith.constant 0 : index
    %1211 = vector.load %arg2[%1210, %c0_705] : memref<256x16xf32, #tpu.memory_space<vmem>>, vector<1x16xf32>
    %c7_i32_706 = arith.constant 7 : i32
    %1212 = arith.addi %0, %c7_i32_706 : i32
    %1213 = arith.index_cast %1212 : i32 to index
    %c7_707 = arith.constant 7 : index
    %1214 = memref.load %arg1[%1213, %c7_707] : memref<16x32xi32, #tpu.memory_space<smem>>
    %1215 = arith.index_cast %1214 : i32 to index
    %c0_708 = arith.constant 0 : index
    %1216 = vector.load %arg2[%1215, %c0_708] : memref<256x16xf32, #tpu.memory_space<vmem>>, vector<1x16xf32>
    %1217 = tpu.concatenate %1181, %1186, %1191, %1196, %1201, %1206, %1211, %1216 in 1 : vector<1x16xf32>, vector<1x16xf32>, vector<1x16xf32>, vector<1x16xf32>, vector<1x16xf32>, vector<1x16xf32>, vector<1x16xf32>, vector<1x16xf32> -> vector<1x128xf32>
    %c7_709 = arith.constant 7 : index
    %c0_710 = arith.constant 0 : index
    %1218 = vector.load %arg8[%c7_709, %c0_710] : memref<8x512xf32, #tpu.memory_space<vmem>>, vector<1x128xf32>
    tpu.vector_store %arg8[%c7_709, %c0_710], %1217 {strides = array<i32>} : memref<8x512xf32, #tpu.memory_space<vmem>>, vector<1x128xf32>,
    %c7_i32_711 = arith.constant 7 : i32
    %1219 = arith.addi %0, %c7_i32_711 : i32
    %1220 = arith.index_cast %1219 : i32 to index
    %c8_712 = arith.constant 8 : index
    %1221 = memref.load %arg1[%1220, %c8_712] : memref<16x32xi32, #tpu.memory_space<smem>>
    %1222 = arith.index_cast %1221 : i32 to index
    %c0_713 = arith.constant 0 : index
    %1223 = vector.load %arg2[%1222, %c0_713] : memref<256x16xf32, #tpu.memory_space<vmem>>, vector<1x16xf32>
    %c7_i32_714 = arith.constant 7 : i32
    %1224 = arith.addi %0, %c7_i32_714 : i32
    %1225 = arith.index_cast %1224 : i32 to index
    %c9_715 = arith.constant 9 : index
    %1226 = memref.load %arg1[%1225, %c9_715] : memref<16x32xi32, #tpu.memory_space<smem>>
    %1227 = arith.index_cast %1226 : i32 to index
    %c0_716 = arith.constant 0 : index
    %1228 = vector.load %arg2[%1227, %c0_716] : memref<256x16xf32, #tpu.memory_space<vmem>>, vector<1x16xf32>
    %c7_i32_717 = arith.constant 7 : i32
    %1229 = arith.addi %0, %c7_i32_717 : i32
    %1230 = arith.index_cast %1229 : i32 to index
    %c10_718 = arith.constant 10 : index
    %1231 = memref.load %arg1[%1230, %c10_718] : memref<16x32xi32, #tpu.memory_space<smem>>
    %1232 = arith.index_cast %1231 : i32 to index
    %c0_719 = arith.constant 0 : index
    %1233 = vector.load %arg2[%1232, %c0_719] : memref<256x16xf32, #tpu.memory_space<vmem>>, vector<1x16xf32>
    %c7_i32_720 = arith.constant 7 : i32
    %1234 = arith.addi %0, %c7_i32_720 : i32
    %1235 = arith.index_cast %1234 : i32 to index
    %c11_721 = arith.constant 11 : index
    %1236 = memref.load %arg1[%1235, %c11_721] : memref<16x32xi32, #tpu.memory_space<smem>>
    %1237 = arith.index_cast %1236 : i32 to index
    %c0_722 = arith.constant 0 : index
    %1238 = vector.load %arg2[%1237, %c0_722] : memref<256x16xf32, #tpu.memory_space<vmem>>, vector<1x16xf32>
    %c7_i32_723 = arith.constant 7 : i32
    %1239 = arith.addi %0, %c7_i32_723 : i32
    %1240 = arith.index_cast %1239 : i32 to index
    %c12_724 = arith.constant 12 : index
    %1241 = memref.load %arg1[%1240, %c12_724] : memref<16x32xi32, #tpu.memory_space<smem>>
    %1242 = arith.index_cast %1241 : i32 to index
    %c0_725 = arith.constant 0 : index
    %1243 = vector.load %arg2[%1242, %c0_725] : memref<256x16xf32, #tpu.memory_space<vmem>>, vector<1x16xf32>
    %c7_i32_726 = arith.constant 7 : i32
    %1244 = arith.addi %0, %c7_i32_726 : i32
    %1245 = arith.index_cast %1244 : i32 to index
    %c13_727 = arith.constant 13 : index
    %1246 = memref.load %arg1[%1245, %c13_727] : memref<16x32xi32, #tpu.memory_space<smem>>
    %1247 = arith.index_cast %1246 : i32 to index
    %c0_728 = arith.constant 0 : index
    %1248 = vector.load %arg2[%1247, %c0_728] : memref<256x16xf32, #tpu.memory_space<vmem>>, vector<1x16xf32>
    %c7_i32_729 = arith.constant 7 : i32
    %1249 = arith.addi %0, %c7_i32_729 : i32
    %1250 = arith.index_cast %1249 : i32 to index
    %c14_730 = arith.constant 14 : index
    %1251 = memref.load %arg1[%1250, %c14_730] : memref<16x32xi32, #tpu.memory_space<smem>>
    %1252 = arith.index_cast %1251 : i32 to index
    %c0_731 = arith.constant 0 : index
    %1253 = vector.load %arg2[%1252, %c0_731] : memref<256x16xf32, #tpu.memory_space<vmem>>, vector<1x16xf32>
    %c7_i32_732 = arith.constant 7 : i32
    %1254 = arith.addi %0, %c7_i32_732 : i32
    %1255 = arith.index_cast %1254 : i32 to index
    %c15_733 = arith.constant 15 : index
    %1256 = memref.load %arg1[%1255, %c15_733] : memref<16x32xi32, #tpu.memory_space<smem>>
    %1257 = arith.index_cast %1256 : i32 to index
    %c0_734 = arith.constant 0 : index
    %1258 = vector.load %arg2[%1257, %c0_734] : memref<256x16xf32, #tpu.memory_space<vmem>>, vector<1x16xf32>
    %1259 = tpu.concatenate %1223, %1228, %1233, %1238, %1243, %1248, %1253, %1258 in 1 : vector<1x16xf32>, vector<1x16xf32>, vector<1x16xf32>, vector<1x16xf32>, vector<1x16xf32>, vector<1x16xf32>, vector<1x16xf32>, vector<1x16xf32> -> vector<1x128xf32>
    %c7_735 = arith.constant 7 : index
    %c128_736 = arith.constant 128 : index
    %1260 = vector.load %arg8[%c7_735, %c128_736] : memref<8x512xf32, #tpu.memory_space<vmem>>, vector<1x128xf32>
    tpu.vector_store %arg8[%c7_735, %c128_736], %1259 {strides = array<i32>} : memref<8x512xf32, #tpu.memory_space<vmem>>, vector<1x128xf32>,
    %c7_i32_737 = arith.constant 7 : i32
    %1261 = arith.addi %0, %c7_i32_737 : i32
    %1262 = arith.index_cast %1261 : i32 to index
    %c16_738 = arith.constant 16 : index
    %1263 = memref.load %arg1[%1262, %c16_738] : memref<16x32xi32, #tpu.memory_space<smem>>
    %1264 = arith.index_cast %1263 : i32 to index
    %c0_739 = arith.constant 0 : index
    %1265 = vector.load %arg2[%1264, %c0_739] : memref<256x16xf32, #tpu.memory_space<vmem>>, vector<1x16xf32>
    %c7_i32_740 = arith.constant 7 : i32
    %1266 = arith.addi %0, %c7_i32_740 : i32
    %1267 = arith.index_cast %1266 : i32 to index
    %c17_741 = arith.constant 17 : index
    %1268 = memref.load %arg1[%1267, %c17_741] : memref<16x32xi32, #tpu.memory_space<smem>>
    %1269 = arith.index_cast %1268 : i32 to index
    %c0_742 = arith.constant 0 : index
    %1270 = vector.load %arg2[%1269, %c0_742] : memref<256x16xf32, #tpu.memory_space<vmem>>, vector<1x16xf32>
    %c7_i32_743 = arith.constant 7 : i32
    %1271 = arith.addi %0, %c7_i32_743 : i32
    %1272 = arith.index_cast %1271 : i32 to index
    %c18_744 = arith.constant 18 : index
    %1273 = memref.load %arg1[%1272, %c18_744] : memref<16x32xi32, #tpu.memory_space<smem>>
    %1274 = arith.index_cast %1273 : i32 to index
    %c0_745 = arith.constant 0 : index
    %1275 = vector.load %arg2[%1274, %c0_745] : memref<256x16xf32, #tpu.memory_space<vmem>>, vector<1x16xf32>
    %c7_i32_746 = arith.constant 7 : i32
    %1276 = arith.addi %0, %c7_i32_746 : i32
    %1277 = arith.index_cast %1276 : i32 to index
    %c19_747 = arith.constant 19 : index
    %1278 = memref.load %arg1[%1277, %c19_747] : memref<16x32xi32, #tpu.memory_space<smem>>
    %1279 = arith.index_cast %1278 : i32 to index
    %c0_748 = arith.constant 0 : index
    %1280 = vector.load %arg2[%1279, %c0_748] : memref<256x16xf32, #tpu.memory_space<vmem>>, vector<1x16xf32>
    %c7_i32_749 = arith.constant 7 : i32
    %1281 = arith.addi %0, %c7_i32_749 : i32
    %1282 = arith.index_cast %1281 : i32 to index
    %c20_750 = arith.constant 20 : index
    %1283 = memref.load %arg1[%1282, %c20_750] : memref<16x32xi32, #tpu.memory_space<smem>>
    %1284 = arith.index_cast %1283 : i32 to index
    %c0_751 = arith.constant 0 : index
    %1285 = vector.load %arg2[%1284, %c0_751] : memref<256x16xf32, #tpu.memory_space<vmem>>, vector<1x16xf32>
    %c7_i32_752 = arith.constant 7 : i32
    %1286 = arith.addi %0, %c7_i32_752 : i32
    %1287 = arith.index_cast %1286 : i32 to index
    %c21_753 = arith.constant 21 : index
    %1288 = memref.load %arg1[%1287, %c21_753] : memref<16x32xi32, #tpu.memory_space<smem>>
    %1289 = arith.index_cast %1288 : i32 to index
    %c0_754 = arith.constant 0 : index
    %1290 = vector.load %arg2[%1289, %c0_754] : memref<256x16xf32, #tpu.memory_space<vmem>>, vector<1x16xf32>
    %c7_i32_755 = arith.constant 7 : i32
    %1291 = arith.addi %0, %c7_i32_755 : i32
    %1292 = arith.index_cast %1291 : i32 to index
    %c22_756 = arith.constant 22 : index
    %1293 = memref.load %arg1[%1292, %c22_756] : memref<16x32xi32, #tpu.memory_space<smem>>
    %1294 = arith.index_cast %1293 : i32 to index
    %c0_757 = arith.constant 0 : index
    %1295 = vector.load %arg2[%1294, %c0_757] : memref<256x16xf32, #tpu.memory_space<vmem>>, vector<1x16xf32>
    %c7_i32_758 = arith.constant 7 : i32
    %1296 = arith.addi %0, %c7_i32_758 : i32
    %1297 = arith.index_cast %1296 : i32 to index
    %c23_759 = arith.constant 23 : index
    %1298 = memref.load %arg1[%1297, %c23_759] : memref<16x32xi32, #tpu.memory_space<smem>>
    %1299 = arith.index_cast %1298 : i32 to index
    %c0_760 = arith.constant 0 : index
    %1300 = vector.load %arg2[%1299, %c0_760] : memref<256x16xf32, #tpu.memory_space<vmem>>, vector<1x16xf32>
    %1301 = tpu.concatenate %1265, %1270, %1275, %1280, %1285, %1290, %1295, %1300 in 1 : vector<1x16xf32>, vector<1x16xf32>, vector<1x16xf32>, vector<1x16xf32>, vector<1x16xf32>, vector<1x16xf32>, vector<1x16xf32>, vector<1x16xf32> -> vector<1x128xf32>
    %c7_761 = arith.constant 7 : index
    %c256_762 = arith.constant 256 : index
    %1302 = vector.load %arg8[%c7_761, %c256_762] : memref<8x512xf32, #tpu.memory_space<vmem>>, vector<1x128xf32>
    tpu.vector_store %arg8[%c7_761, %c256_762], %1301 {strides = array<i32>} : memref<8x512xf32, #tpu.memory_space<vmem>>, vector<1x128xf32>,
    %c7_i32_763 = arith.constant 7 : i32
    %1303 = arith.addi %0, %c7_i32_763 : i32
    %1304 = arith.index_cast %1303 : i32 to index
    %c24_764 = arith.constant 24 : index
    %1305 = memref.load %arg1[%1304, %c24_764] : memref<16x32xi32, #tpu.memory_space<smem>>
    %1306 = arith.index_cast %1305 : i32 to index
    %c0_765 = arith.constant 0 : index
    %1307 = vector.load %arg2[%1306, %c0_765] : memref<256x16xf32, #tpu.memory_space<vmem>>, vector<1x16xf32>
    %c7_i32_766 = arith.constant 7 : i32
    %1308 = arith.addi %0, %c7_i32_766 : i32
    %1309 = arith.index_cast %1308 : i32 to index
    %c25_767 = arith.constant 25 : index
    %1310 = memref.load %arg1[%1309, %c25_767] : memref<16x32xi32, #tpu.memory_space<smem>>
    %1311 = arith.index_cast %1310 : i32 to index
    %c0_768 = arith.constant 0 : index
    %1312 = vector.load %arg2[%1311, %c0_768] : memref<256x16xf32, #tpu.memory_space<vmem>>, vector<1x16xf32>
    %c7_i32_769 = arith.constant 7 : i32
    %1313 = arith.addi %0, %c7_i32_769 : i32
    %1314 = arith.index_cast %1313 : i32 to index
    %c26_770 = arith.constant 26 : index
    %1315 = memref.load %arg1[%1314, %c26_770] : memref<16x32xi32, #tpu.memory_space<smem>>
    %1316 = arith.index_cast %1315 : i32 to index
    %c0_771 = arith.constant 0 : index
    %1317 = vector.load %arg2[%1316, %c0_771] : memref<256x16xf32, #tpu.memory_space<vmem>>, vector<1x16xf32>
    %c7_i32_772 = arith.constant 7 : i32
    %1318 = arith.addi %0, %c7_i32_772 : i32
    %1319 = arith.index_cast %1318 : i32 to index
    %c27_773 = arith.constant 27 : index
    %1320 = memref.load %arg1[%1319, %c27_773] : memref<16x32xi32, #tpu.memory_space<smem>>
    %1321 = arith.index_cast %1320 : i32 to index
    %c0_774 = arith.constant 0 : index
    %1322 = vector.load %arg2[%1321, %c0_774] : memref<256x16xf32, #tpu.memory_space<vmem>>, vector<1x16xf32>
    %c7_i32_775 = arith.constant 7 : i32
    %1323 = arith.addi %0, %c7_i32_775 : i32
    %1324 = arith.index_cast %1323 : i32 to index
    %c28_776 = arith.constant 28 : index
    %1325 = memref.load %arg1[%1324, %c28_776] : memref<16x32xi32, #tpu.memory_space<smem>>
    %1326 = arith.index_cast %1325 : i32 to index
    %c0_777 = arith.constant 0 : index
    %1327 = vector.load %arg2[%1326, %c0_777] : memref<256x16xf32, #tpu.memory_space<vmem>>, vector<1x16xf32>
    %c7_i32_778 = arith.constant 7 : i32
    %1328 = arith.addi %0, %c7_i32_778 : i32
    %1329 = arith.index_cast %1328 : i32 to index
    %c29_779 = arith.constant 29 : index
    %1330 = memref.load %arg1[%1329, %c29_779] : memref<16x32xi32, #tpu.memory_space<smem>>
    %1331 = arith.index_cast %1330 : i32 to index
    %c0_780 = arith.constant 0 : index
    %1332 = vector.load %arg2[%1331, %c0_780] : memref<256x16xf32, #tpu.memory_space<vmem>>, vector<1x16xf32>
    %c7_i32_781 = arith.constant 7 : i32
    %1333 = arith.addi %0, %c7_i32_781 : i32
    %1334 = arith.index_cast %1333 : i32 to index
    %c30_782 = arith.constant 30 : index
    %1335 = memref.load %arg1[%1334, %c30_782] : memref<16x32xi32, #tpu.memory_space<smem>>
    %1336 = arith.index_cast %1335 : i32 to index
    %c0_783 = arith.constant 0 : index
    %1337 = vector.load %arg2[%1336, %c0_783] : memref<256x16xf32, #tpu.memory_space<vmem>>, vector<1x16xf32>
    %c7_i32_784 = arith.constant 7 : i32
    %1338 = arith.addi %0, %c7_i32_784 : i32
    %1339 = arith.index_cast %1338 : i32 to index
    %c31_785 = arith.constant 31 : index
    %1340 = memref.load %arg1[%1339, %c31_785] : memref<16x32xi32, #tpu.memory_space<smem>>
    %1341 = arith.index_cast %1340 : i32 to index
    %c0_786 = arith.constant 0 : index
    %1342 = vector.load %arg2[%1341, %c0_786] : memref<256x16xf32, #tpu.memory_space<vmem>>, vector<1x16xf32>
    %1343 = tpu.concatenate %1307, %1312, %1317, %1322, %1327, %1332, %1337, %1342 in 1 : vector<1x16xf32>, vector<1x16xf32>, vector<1x16xf32>, vector<1x16xf32>, vector<1x16xf32>, vector<1x16xf32>, vector<1x16xf32>, vector<1x16xf32> -> vector<1x128xf32>
    %c7_787 = arith.constant 7 : index
    %c384_788 = arith.constant 384 : index
    %1344 = vector.load %arg8[%c7_787, %c384_788] : memref<8x512xf32, #tpu.memory_space<vmem>>, vector<1x128xf32>
    tpu.vector_store %arg8[%c7_787, %c384_788], %1343 {strides = array<i32>} : memref<8x512xf32, #tpu.memory_space<vmem>>, vector<1x128xf32>,
    %c0_789 = arith.constant 0 : index
    %c0_790 = arith.constant 0 : index
    %1345 = vector.load %arg8[%c0_789, %c0_790] : memref<8x512xf32, #tpu.memory_space<vmem>>, vector<8x512xf32>
    %c0_791 = arith.constant 0 : index
    %c0_792 = arith.constant 0 : index
    %1346 = vector.load %arg3[%c0_791, %c0_792] : memref<512x128xf32, #tpu.memory_space<vmem>>, vector<512x128xf32>
    %cst = arith.constant dense<0.000000e+00> : vector<8x128xf32>
    %1347 = tpu.matmul %1345, %1346, %cst {dimension_numbers = #tpu.dot_dimension_numbers<[1], [0], [0], [1], [0, 0, 1, 1], [], []>} : vector<8x512xf32>, vector<512x128xf32>, vector<8x128xf32> -> vector<8x128xf32>
    %c0_793 = arith.constant 0 : index
    %c0_794 = arith.constant 0 : index
    %1348 = vector.load %arg4[%c0_793, %c0_794] : memref<1x128xf32, #tpu.memory_space<vmem>>, vector<1x128xf32>
    %1349 = vector.broadcast %1348 : vector<1x128xf32> to vector<8x128xf32>
    %1350 = arith.addf %1347, %1349 : vector<8x128xf32>
    %cst_795 = arith.constant 0.000000e+00 : f32
    %1351 = vector.broadcast %cst_795 : f32 to vector<8x128xf32>
    %1352 = arith.maximumf %1350, %1351 : vector<8x128xf32>
    %c0_796 = arith.constant 0 : index
    %c0_797 = arith.constant 0 : index
    %1353 = vector.load %arg5[%c0_796, %c0_797] : memref<1x128xf32, #tpu.memory_space<vmem>>, vector<1x128xf32>
    %1354 = vector.broadcast %1353 : vector<1x128xf32> to vector<8x128xf32>
    %1355 = arith.mulf %1352, %1354 : vector<8x128xf32>
    %cst_798 = arith.constant dense<0.000000e+00> : vector<8xf32>
    %1356 = vector.multi_reduction <add>, %1355, %cst_798 [1] : vector<8x128xf32> to vector<8xf32>
    %1357 = vector.shape_cast %1356 : vector<8xf32> to vector<8x1xf32>
    %c0_799 = arith.constant 0 : index
    %c0_800 = arith.constant 0 : index
    %1358 = memref.load %arg6[%c0_799, %c0_800] : memref<1x1xf32, #tpu.memory_space<smem>>
    %1359 = vector.broadcast %1358 : f32 to vector<8x1xf32>
    %1360 = arith.addf %1357, %1359 : vector<8x1xf32>
    %1361 = vector.shape_cast %1360 : vector<8x1xf32> to vector<8x1xf32>
    %1362 = vector.broadcast %1361 : vector<8x1xf32> to vector<8x128xf32>
    %c0_801 = arith.constant 0 : index
    %c0_802 = arith.constant 0 : index
    %1363 = vector.load %arg7[%c0_801, %c0_802] : memref<8x128xf32, #tpu.memory_space<vmem>>, vector<8x128xf32>
    tpu.vector_store %arg7[%c0_801, %c0_802], %1362 {strides = array<i32>} : memref<8x128xf32, #tpu.memory_space<vmem>>, vector<8x128xf32>,
    return
  }
  func.func @transform_0(%arg0: i32, %arg1: memref<16x32xi32, #tpu.memory_space<smem>>) -> (i32, i32) {
    %c0_i32 = arith.constant 0 : i32
    %c0_i32_0 = arith.constant 0 : i32
    %c0_i32_1 = arith.constant 0 : i32
    return %c0_i32, %c0_i32_0 : i32, i32
  }
  func.func @transform_1(%arg0: i32, %arg1: memref<16x32xi32, #tpu.memory_space<smem>>) -> (i32, i32) {
    %c0_i32 = arith.constant 0 : i32
    %c0_i32_0 = arith.constant 0 : i32
    %c0_i32_1 = arith.constant 0 : i32
    return %c0_i32, %c0_i32_0 : i32, i32
  }
  func.func @transform_2(%arg0: i32, %arg1: memref<16x32xi32, #tpu.memory_space<smem>>) -> (i32, i32) {
    %c0_i32 = arith.constant 0 : i32
    %c0_i32_0 = arith.constant 0 : i32
    %c0_i32_1 = arith.constant 0 : i32
    return %c0_i32, %c0_i32_0 : i32, i32
  }
  func.func @transform_3(%arg0: i32, %arg1: memref<16x32xi32, #tpu.memory_space<smem>>) -> (i32, i32) {
    %c0_i32 = arith.constant 0 : i32
    %c0_i32_0 = arith.constant 0 : i32
    %c0_i32_1 = arith.constant 0 : i32
    return %c0_i32, %c0_i32_0 : i32, i32
  }
  func.func @transform_4(%arg0: i32, %arg1: memref<16x32xi32, #tpu.memory_space<smem>>) -> (i32, i32) {
    %c0_i32 = arith.constant 0 : i32
    %c0_i32_0 = arith.constant 0 : i32
    %c0_i32_1 = arith.constant 0 : i32
    return %c0_i32, %c0_i32_0 : i32, i32
  }
  func.func @transform_5(%arg0: i32, %arg1: memref<16x32xi32, #tpu.memory_space<smem>>) -> (i32, i32) {
    %c0_i32 = arith.constant 0 : i32
    %c0_i32_0 = arith.constant 0 : i32
    return %arg0, %c0_i32 : i32, i32
  }
}

</mosaic_0001>

<llo_original>
// kernel: regression_forward.1
$region0: #{regression_forward.1}
  #allocation0 [shape = 'u32[]', space=smem, size = 0x4, offset = 0x4, fixed_abs, tag = 'smem constant byte address 0x4 - core index']
  #allocation1 [shape = 'u32[144,128]{1,0:T(1,128)}', space=vmem, size = 0x12000, scoped, tag = 'internal scratch']
  #allocation2 [shape = 'f32[8,512]{1,0:T(8,128)}', space=vmem, size = 0x4000, scoped, tag = 'scratch operand']
  #allocation3 [shape = 's32[1]{0}', space=sflag, size = 0x4, scoped, tag = 'scoped memory for regression_forward.1']
  #allocation4 [shape = 'u8[8192]{0}', space=smem, size = 0x2000, scoped, tag = 'prefetched SMEM operand 0']
  #allocation5 [shape = 'f32[1,1]{1,0:T(1,128)S(6)}', space=smem, size = 0x200, scoped, tag = 'scoped memory for regression_forward.1']
  %s0 = inlined_call_operand.vmem [shape: s32[16,32], index: 0, kind: input, shape index: {}]
  %s1 = inlined_call_operand.vmem [shape: f32[256,16], index: 1, kind: input, shape index: {}]
  %s2 = inlined_call_operand.hbm [shape: f32[512,128], index: 2, kind: input, shape index: {}]
  %s3 = inlined_call_operand.vmem [shape: f32[1,128], index: 3, kind: input, shape index: {}]
  %s4 = inlined_call_operand.vmem [shape: f32[1,128], index: 4, kind: input, shape index: {}]
  %s5 = inlined_call_operand.<no memory space> [shape: f32[1,1], index: 5, kind: input, shape index: {}]
  %s6 = inlined_call_operand.vmem [shape: f32[16,128], index: 6, kind: output, shape index: {}]
  %s7 = sld [smem:[#allocation0]]
  $region57: #{regression_forward.1} parent=0
    _
  %s9 = ssub.s32 1, %s7
  %s10 = scalar_select 0, %s9, %s7
  %s11 = sshll.u32 %s0, 4
  %s12 = int_to_ptr.vmem [resolvable:$true] %s11
  %14 = dma.vmem_to_smem %s12, 256, [#allocation4], [#allocation3]
  %15 = sst [smem:[#allocation5]] %s5
  %16 = dma.done [#allocation3], 256
  %17 = sfence
  $region1: #{regression_forward.1} parent=0
    #allocation6 [shape = 'u8[262144]{0}', space=vmem, size = 0x40000, scoped, tag = 'input window, operand 2, single buffered']
    #allocation7 [shape = 's32[2]{0}', space=sflag, size = 0x8, scoped, tag = 'scoped memory for regression_forward.1']
    %18 = vsyncpa [#allocation7], 0
    loop: start=0, step=1, limit=4
    $region2: #{regression_forward.1} parent=1 // loop_pre_header
      _
    $region3: #{regression_forward.1} parent=1 // loop_header
      %s20 = sphi 0, %s24
      %p21 = scmp.ge.s32.totalorder %s20, 4
      %s28 = sphi 0, %s28
      %s30 = sphi 0, %s28
      %s31 = sphi 0, %s30
      %s45 = sphi 0, %s31
      %s49 = sphi 0, %s49
      %s51 = sphi 0, %s49
      %s52 = sphi 0, %s51
      %s66 = sphi 0, %s52
      %s70 = sphi 0, %s70
      %s72 = sphi 0, %s70
      %s73 = sphi 0, %s72
      %s87 = sphi 0, %s73
      %s91 = sphi 0, %s91
      %s93 = sphi 0, %s91
      %s94 = sphi 0, %s93
      %s108 = sphi 0, %s94
      %s112 = sphi 0, %s112
      %s114 = sphi 0, %s112
      %s115 = sphi 0, %s114
      %s129 = sphi 0, %s115
      %s135 = sphi 0, %s137
      %s138 = sphi 0, %s135
      %s139 = sphi 0, %s138
      %s155 = sphi 0, %s139
    $region4: #{regression_forward.1} parent=1 // loop_header_branch
      %23 = sbr.rel (%p21) target = $region8
    $region5: #{regression_forward.1} parent=1 // loop_body
      %s25 = ssub.s32 %s20, 1
      %s26 = ssub.s32 %s20, 2
      %s27 = sadd.s32 %s20, 1
      %s29 = sadd.s32 %s28, 1
      %p32 = scmp.eq.s32.totalorder %s20, 1
      %p33 = scmp.ne.s32.totalorder %s28, %s30
      %p34 = scmp.eq.s32.totalorder %s20, 0
      %p35 = por %p33, %p34
      %p36 = scmp.ne.s32.totalorder %s28, %s30
      %p37 = scmp.eq.s32.totalorder %s25, 1
      %p38 = por %p36, %p37
      %p39 = scmp.ne.s32.totalorder %s30, %s31
      %p40 = scmp.eq.s32.totalorder %s25, 0
      %p41 = por %p39, %p40
      %p42 = scmp.ne.s32.totalorder %s30, %s31
      %p43 = scmp.eq.s32.totalorder %s26, 1
      %p44 = por %p42, %p43
      %p46 = scmp.ne.s32.totalorder %s31, %s45
      %p47 = scmp.eq.s32.totalorder %s26, 0
      %p48 = por %p46, %p47
      %s50 = sadd.s32 %s49, 1
      %p53 = scmp.eq.s32.totalorder %s20, 1
      %p54 = scmp.ne.s32.totalorder %s49, %s51
      %p55 = scmp.eq.s32.totalorder %s20, 0
      %p56 = por %p54, %p55
      %p57 = scmp.ne.s32.totalorder %s49, %s51
      %p58 = scmp.eq.s32.totalorder %s25, 1
      %p59 = por %p57, %p58
      %p60 = scmp.ne.s32.totalorder %s51, %s52
      %p61 = scmp.eq.s32.totalorder %s25, 0
      %p62 = por %p60, %p61
      %p63 = scmp.ne.s32.totalorder %s51, %s52
      %p64 = scmp.eq.s32.totalorder %s26, 1
      %p65 = por %p63, %p64
      %p67 = scmp.ne.s32.totalorder %s52, %s66
      %p68 = scmp.eq.s32.totalorder %s26, 0
      %p69 = por %p67, %p68
      %s71 = sadd.s32 %s70, 1
      %p74 = scmp.eq.s32.totalorder %s20, 1
      %p75 = scmp.ne.s32.totalorder %s70, %s72
      %p76 = scmp.eq.s32.totalorder %s20, 0
      %p77 = por %p75, %p76
      %p78 = scmp.ne.s32.totalorder %s70, %s72
      %p79 = scmp.eq.s32.totalorder %s25, 1
      %p80 = por %p78, %p79
      %p81 = scmp.ne.s32.totalorder %s72, %s73
      %p82 = scmp.eq.s32.totalorder %s25, 0
      %p83 = por %p81, %p82
      %p84 = scmp.ne.s32.totalorder %s72, %s73
      %p85 = scmp.eq.s32.totalorder %s26, 1
      %p86 = por %p84, %p85
      %p88 = scmp.ne.s32.totalorder %s73, %s87
      %p89 = scmp.eq.s32.totalorder %s26, 0
      %p90 = por %p88, %p89
      %s92 = sadd.s32 %s91, 1
      %p95 = scmp.eq.s32.totalorder %s20, 1
      %p96 = scmp.ne.s32.totalorder %s91, %s93
      %p97 = scmp.eq.s32.totalorder %s20, 0
      %p98 = por %p96, %p97
      %p99 = scmp.ne.s32.totalorder %s91, %s93
      %p100 = scmp.eq.s32.totalorder %s25, 1
      %p101 = por %p99, %p100
      %p102 = scmp.ne.s32.totalorder %s93, %s94
      %p103 = scmp.eq.s32.totalorder %s25, 0
      %p104 = por %p102, %p103
      %p105 = scmp.ne.s32.totalorder %s93, %s94
      %p106 = scmp.eq.s32.totalorder %s26, 1
      %p107 = por %p105, %p106
      %p109 = scmp.ne.s32.totalorder %s94, %s108
      %p110 = scmp.eq.s32.totalorder %s26, 0
      %p111 = por %p109, %p110
      %s113 = sadd.s32 %s112, 1
      %p116 = scmp.eq.s32.totalorder %s20, 1
      %p117 = scmp.ne.s32.totalorder %s112, %s114
      %p118 = scmp.eq.s32.totalorder %s20, 0
      %p119 = por %p117, %p118
      %p120 = scmp.ne.s32.totalorder %s112, %s114
      %p121 = scmp.eq.s32.totalorder %s25, 1
      %p122 = por %p120, %p121
      %p123 = scmp.ne.s32.totalorder %s114, %s115
      %p124 = scmp.eq.s32.totalorder %s25, 0
      %p125 = por %p123, %p124
      %p126 = scmp.ne.s32.totalorder %s114, %s115
      %p127 = scmp.eq.s32.totalorder %s26, 1
      %p128 = por %p126, %p127
      %p130 = scmp.ne.s32.totalorder %s115, %s129
      %p131 = scmp.eq.s32.totalorder %s26, 0
      %p132 = por %p130, %p131
      %s133 = ssub.s32 %s20, %s27
      %p134 = scmp.eq.s32.totalorder %s133, 0
      %s136 = sadd.s32 %s135, 1
      %s137 = scalar_select %p134, %s135, %s136
      %p140 = pneg %p134
      %p141 = scmp.eq.s32.totalorder %s20, 1
      %p142 = por %p140, %p141
      %p143 = scmp.ne.s32.totalorder %s135, %s138
      %p144 = scmp.eq.s32.totalorder %s20, 0
      %p145 = por %p143, %p144
      %p146 = scmp.ne.s32.totalorder %s135, %s138
      %p147 = scmp.eq.s32.totalorder %s25, 1
      %p148 = por %p146, %p147
      %p149 = scmp.ne.s32.totalorder %s138, %s139
      %p150 = scmp.eq.s32.totalorder %s25, 0
      %p151 = por %p149, %p150
      %p152 = scmp.ne.s32.totalorder %s138, %s139
      %p153 = scmp.eq.s32.totalorder %s26, 1
      %p154 = por %p152, %p153
      %p156 = scmp.ne.s32.totalorder %s139, %s155
      %p157 = scmp.eq.s32.totalorder %s26, 0
      %p158 = por %p156, %p157
      %p159 = scmp.le.s32.totalorder 1, %s20
      %p160 = scmp.lt.s32.totalorder %s20, 3
      %p161 = pnand %p159, %p160
      %p162 = pneg %p161
      // Predicated region
      $region9: #{regression_forward.1} parent=5 // pred_check
        _
      $region10: #{regression_forward.1} parent=5 // pred_check_branch
        %164 = sbr.rel (%p161) target = $region12
      $region11: #{regression_forward.1} parent=5 // pred_region
        %s165 = ssub.s32 %s20, 1
        // Predicated region
        $region13: #{regression_forward.1} parent=11 // pred_check
          %p166 = pneg %p41
        $region14: #{regression_forward.1} parent=11 // pred_check_branch
          %168 = sbr.rel (%p166) target = $region16
        $region15: #{regression_forward.1} parent=11 // pred_region
          _
        $region16: #{regression_forward.1} parent=11 // pred_fallthru
          _
        // Predicated region
        $region17: #{regression_forward.1} parent=11 // pred_check
          %p169 = pneg %p62
        $region18: #{regression_forward.1} parent=11 // pred_check_branch
          %171 = sbr.rel (%p169) target = $region20
        $region19: #{regression_forward.1} parent=11 // pred_region
          %s173 = ssub.s32 8192, 8192
          %174 = vsyncadd [#allocation7], %s173
          %s175 = sshll.u32 [#allocation6], 4
          %s176 = int_to_ptr.vmem [resolvable:$true] %s175
          %181 = dma.hbm_to_vmem [thread:$0]  %s2, 8192, %s176, [#allocation7], 128, 128, 8
        $region20: #{regression_forward.1} parent=11 // pred_fallthru
          _
        // Predicated region
        $region21: #{regression_forward.1} parent=11 // pred_check
          %p182 = pneg %p83
        $region22: #{regression_forward.1} parent=11 // pred_check_branch
          %184 = sbr.rel (%p182) target = $region24
        $region23: #{regression_forward.1} parent=11 // pred_region
          _
        $region24: #{regression_forward.1} parent=11 // pred_fallthru
          _
        // Predicated region
        $region25: #{regression_forward.1} parent=11 // pred_check
          %p185 = pneg %p104
        $region26: #{regression_forward.1} parent=11 // pred_check_branch
          %187 = sbr.rel (%p185) target = $region28
        $region27: #{regression_forward.1} parent=11 // pred_region
          _
        $region28: #{regression_forward.1} parent=11 // pred_fallthru
          _
        // Predicated region
        $region29: #{regression_forward.1} parent=11 // pred_check
          %p188 = pneg %p125
        $region30: #{regression_forward.1} parent=11 // pred_check_branch
          %190 = sbr.rel (%p188) target = $region32
        $region31: #{regression_forward.1} parent=11 // pred_region
          _
        $region32: #{regression_forward.1} parent=11 // pred_fallthru
          _
      $region12: #{regression_forward.1} parent=5 // pred_fallthru
        _
      %p191 = scmp.lt.s32.totalorder %s20, 2
      // Predicated region
      $region33: #{regression_forward.1} parent=5 // pred_check
        %p192 = pneg %p191
      $region34: #{regression_forward.1} parent=5 // pred_check_branch
        %194 = sbr.rel (%p192) target = $region36
      $region35: #{regression_forward.1} parent=5 // pred_region
        _
      $region36: #{regression_forward.1} parent=5 // pred_fallthru
        _
      %p195 = scmp.le.s32.totalorder 1, %s20
      %p196 = scmp.lt.s32.totalorder %s20, 3
      %p197 = pnand %p195, %p196
      %p198 = pneg %p197
      // Predicated region
      $region37: #{regression_forward.1} parent=5 // pred_check
        _
      $region38: #{regression_forward.1} parent=5 // pred_check_branch
        %200 = sbr.rel (%p197) target = $region40
      $region39: #{regression_forward.1} parent=5 // pred_region
        %s201 = ssub.s32 %s20, 1
        // Predicated region
        $region41: #{regression_forward.1} parent=39 // pred_check
          %p202 = pneg %p62
        $region42: #{regression_forward.1} parent=39 // pred_check_branch
          %204 = sbr.rel (%p202) target = $region44
        $region43: #{regression_forward.1} parent=39 // pred_region
          %205 = dma.done [#allocation7], 8192
        $region44: #{regression_forward.1} parent=39 // pred_fallthru
          _
        %p206 = pneg %p41
        %p207 = pneg %p38
        %p208 = pneg %p62
        %p209 = pneg %p59
        %p210 = pneg %p83
        %p211 = pneg %p80
        %p212 = pneg %p104
        %p213 = pneg %p101
        %p214 = pneg %p125
        %p215 = pneg %p122
        %p216 = pneg %p151
        %p217 = pneg %p148
        %p218 = scmp.lt.s32.totalorder %s25, 1
        %s219 = scalar_select %p218, %s25, 1
        %s220 = smul.addr %s219, 8
        %s221 = scalar_lea.vmem %s6, %s220
        %p222 = scmp.lt.s32.totalorder %s25, 1
        %s223 = scalar_select %p222, %s25, 1
        %s224 = smul.addr %s223, 8
        %s225 = scalar_lea.vmem %s6, %s224
        %s226 = smul.u32 %s25, 8
        %s227 = smul.u32 %s226, 128
        %s228 = sld [smem:[#allocation4 + %s227]]
        %s229 = scalar_lea.vmem %s1, %s228
        %v230 = vld [vmem:[%s229] sm:$0x1]
        %s231 = sadd.s32 %s227, 1
        %s232 = sld [smem:[#allocation4 + %s231]]
        %s233 = scalar_lea.vmem %s1, %s232
        %v234 = vld [vmem:[%s233] sm:$0x1]
        %s235 = sadd.s32 %s227, 2
        %s236 = sld [smem:[#allocation4 + %s235]]
        %s237 = scalar_lea.vmem %s1, %s236
        %v238 = vld [vmem:[%s237] sm:$0x1]
        %s239 = sadd.s32 %s227, 3
        %s240 = sld [smem:[#allocation4 + %s239]]
        %s241 = scalar_lea.vmem %s1, %s240
        %v242 = vld [vmem:[%s241] sm:$0x1]
        %s243 = sadd.s32 %s227, 4
        %s244 = sld [smem:[#allocation4 + %s243]]
        %s245 = scalar_lea.vmem %s1, %s244
        %v246 = vld [vmem:[%s245] sm:$0x1]
        %s247 = sadd.s32 %s227, 5
        %s248 = sld [smem:[#allocation4 + %s247]]
        %s249 = scalar_lea.vmem %s1, %s248
        %v250 = vld [vmem:[%s249] sm:$0x1]
        %s251 = sadd.s32 %s227, 6
        %s252 = sld [smem:[#allocation4 + %s251]]
        %s253 = scalar_lea.vmem %s1, %s252
        %v254 = vld [vmem:[%s253] sm:$0x1]
        %s255 = sadd.s32 %s227, 7
        %s256 = sld [smem:[#allocation4 + %s255]]
        %s257 = scalar_lea.vmem %s1, %s256
        %v258 = vld [vmem:[%s257] sm:$0x1]
        %260 = vrot.lane.b32.xlu0 %v234, 16
        %v261 = vpop.permute.xlu0 %260
        %264 = vrot.lane.b32.xlu0 %v238, 32
        %v265 = vpop.permute.xlu0 %264
        %268 = vrot.lane.b32.xlu0 %v242, 48
        %v269 = vpop.permute.xlu0 %268
        %272 = vrot.lane.b32.xlu0 %v246, 64
        %v273 = vpop.permute.xlu0 %272
        %276 = vrot.lane.b32.xlu0 %v250, 80
        %v277 = vpop.permute.xlu0 %276
        %280 = vrot.lane.b32.xlu0 %v254, 96
        %v281 = vpop.permute.xlu0 %280
        %284 = vrot.lane.b32.xlu0 %v258, 112
        %v285 = vpop.permute.xlu0 %284
        %vm287 = vcmask 130048
        %v288 = vsel %vm287, %v230, %v261
        %vm289 = vcmask 261120
        %v290 = vsel %vm289, %v288, %v265
        %vm291 = vcmask 392192
        %v292 = vsel %vm291, %v290, %v269
        %vm293 = vcmask 523264
        %v294 = vsel %vm293, %v292, %v273
        %vm295 = vcmask 654336
        %v296 = vsel %vm295, %v294, %v277
        %vm297 = vcmask 785408
        %v298 = vsel %vm297, %v296, %v281
        %vm299 = vcmask 916480
        %v300 = vsel %vm299, %v298, %v285
        %301 = vst [vmem:[#allocation2] sm:$0x1] %v300
        %s302 = sadd.s32 %s227, 8
        %s303 = sld [smem:[#allocation4 + %s302]]
        %s304 = scalar_lea.vmem %s1, %s303
        %v305 = vld [vmem:[%s304] sm:$0x1]
        %s306 = sadd.s32 %s227, 9
        %s307 = sld [smem:[#allocation4 + %s306]]
        %s308 = scalar_lea.vmem %s1, %s307
        %v309 = vld [vmem:[%s308] sm:$0x1]
        %s310 = sadd.s32 %s227, 10
        %s311 = sld [smem:[#allocation4 + %s310]]
        %s312 = scalar_lea.vmem %s1, %s311
        %v313 = vld [vmem:[%s312] sm:$0x1]
        %s314 = sadd.s32 %s227, 11
        %s315 = sld [smem:[#allocation4 + %s314]]
        %s316 = scalar_lea.vmem %s1, %s315
        %v317 = vld [vmem:[%s316] sm:$0x1]
        %s318 = sadd.s32 %s227, 12
        %s319 = sld [smem:[#allocation4 + %s318]]
        %s320 = scalar_lea.vmem %s1, %s319
        %v321 = vld [vmem:[%s320] sm:$0x1]
        %s322 = sadd.s32 %s227, 13
        %s323 = sld [smem:[#allocation4 + %s322]]
        %s324 = scalar_lea.vmem %s1, %s323
        %v325 = vld [vmem:[%s324] sm:$0x1]
        %s326 = sadd.s32 %s227, 14
        %s327 = sld [smem:[#allocation4 + %s326]]
        %s328 = scalar_lea.vmem %s1, %s327
        %v329 = vld [vmem:[%s328] sm:$0x1]
        %s330 = sadd.s32 %s227, 15
        %s331 = sld [smem:[#allocation4 + %s330]]
        %s332 = scalar_lea.vmem %s1, %s331
        %v333 = vld [vmem:[%s332] sm:$0x1]
        %335 = vrot.lane.b32.xlu0 %v309, 16
        %v336 = vpop.permute.xlu0 %335
        %339 = vrot.lane.b32.xlu0 %v313, 32
        %v340 = vpop.permute.xlu0 %339
        %343 = vrot.lane.b32.xlu0 %v317, 48
        %v344 = vpop.permute.xlu0 %343
        %347 = vrot.lane.b32.xlu0 %v321, 64
        %v348 = vpop.permute.xlu0 %347
        %351 = vrot.lane.b32.xlu0 %v325, 80
        %v352 = vpop.permute.xlu0 %351
        %355 = vrot.lane.b32.xlu0 %v329, 96
        %v356 = vpop.permute.xlu0 %355
        %359 = vrot.lane.b32.xlu0 %v333, 112
        %v360 = vpop.permute.xlu0 %359
        %v362 = vsel %vm287, %v305, %v336
        %v363 = vsel %vm289, %v362, %v340
        %v364 = vsel %vm291, %v363, %v344
        %v365 = vsel %vm293, %v364, %v348
        %v366 = vsel %vm295, %v365, %v352
        %v367 = vsel %vm297, %v366, %v356
        %v368 = vsel %vm299, %v367, %v360
        %369 = vst [vmem:[#allocation2 + $0x8] sm:$0x1] %v368
        %s370 = sadd.s32 %s227, 16
        %s371 = sld [smem:[#allocation4 + %s370]]
        %s372 = scalar_lea.vmem %s1, %s371
        %v373 = vld [vmem:[%s372] sm:$0x1]
        %s374 = sadd.s32 %s227, 17
        %s375 = sld [smem:[#allocation4 + %s374]]
        %s376 = scalar_lea.vmem %s1, %s375
        %v377 = vld [vmem:[%s376] sm:$0x1]
        %s378 = sadd.s32 %s227, 18
        %s379 = sld [smem:[#allocation4 + %s378]]
        %s380 = scalar_lea.vmem %s1, %s379
        %v381 = vld [vmem:[%s380] sm:$0x1]
        %s382 = sadd.s32 %s227, 19
        %s383 = sld [smem:[#allocation4 + %s382]]
        %s384 = scalar_lea.vmem %s1, %s383
        %v385 = vld [vmem:[%s384] sm:$0x1]
        %s386 = sadd.s32 %s227, 20
        %s387 = sld [smem:[#allocation4 + %s386]]
        %s388 = scalar_lea.vmem %s1, %s387
        %v389 = vld [vmem:[%s388] sm:$0x1]
        %s390 = sadd.s32 %s227, 21
        %s391 = sld [smem:[#allocation4 + %s390]]
        %s392 = scalar_lea.vmem %s1, %s391
        %v393 = vld [vmem:[%s392] sm:$0x1]
        %s394 = sadd.s32 %s227, 22
        %s395 = sld [smem:[#allocation4 + %s394]]
        %s396 = scalar_lea.vmem %s1, %s395
        %v397 = vld [vmem:[%s396] sm:$0x1]
        %s398 = sadd.s32 %s227, 23
        %s399 = sld [smem:[#allocation4 + %s398]]
        %s400 = scalar_lea.vmem %s1, %s399
        %v401 = vld [vmem:[%s400] sm:$0x1]
        %403 = vrot.lane.b32.xlu0 %v377, 16
        %v404 = vpop.permute.xlu0 %403
        %407 = vrot.lane.b32.xlu0 %v381, 32
        %v408 = vpop.permute.xlu0 %407
        %411 = vrot.lane.b32.xlu0 %v385, 48
        %v412 = vpop.permute.xlu0 %411
        %415 = vrot.lane.b32.xlu0 %v389, 64
        %v416 = vpop.permute.xlu0 %415
        %419 = vrot.lane.b32.xlu0 %v393, 80
        %v420 = vpop.permute.xlu0 %419
        %423 = vrot.lane.b32.xlu0 %v397, 96
        %v424 = vpop.permute.xlu0 %423
        %427 = vrot.lane.b32.xlu0 %v401, 112
        %v428 = vpop.permute.xlu0 %427
        %v430 = vsel %vm287, %v373, %v404
        %v431 = vsel %vm289, %v430, %v408
        %v432 = vsel %vm291, %v431, %v412
        %v433 = vsel %vm293, %v432, %v416
        %v434 = vsel %vm295, %v433, %v420
        %v435 = vsel %vm297, %v434, %v424
        %v436 = vsel %vm299, %v435, %v428
        %437 = vst [vmem:[#allocation2 + $0x10] sm:$0x1] %v436
        %s438 = sadd.s32 %s227, 24
        %s439 = sld [smem:[#allocation4 + %s438]]
        %s440 = scalar_lea.vmem %s1, %s439
        %v441 = vld [vmem:[%s440] sm:$0x1]
        %s442 = sadd.s32 %s227, 25
        %s443 = sld [smem:[#allocation4 + %s442]]
        %s444 = scalar_lea.vmem %s1, %s443
        %v445 = vld [vmem:[%s444] sm:$0x1]
        %s446 = sadd.s32 %s227, 26
        %s447 = sld [smem:[#allocation4 + %s446]]
        %s448 = scalar_lea.vmem %s1, %s447
        %v449 = vld [vmem:[%s448] sm:$0x1]
        %s450 = sadd.s32 %s227, 27
        %s451 = sld [smem:[#allocation4 + %s450]]
        %s452 = scalar_lea.vmem %s1, %s451
        %v453 = vld [vmem:[%s452] sm:$0x1]
        %s454 = sadd.s32 %s227, 28
        %s455 = sld [smem:[#allocation4 + %s454]]
        %s456 = scalar_lea.vmem %s1, %s455
        %v457 = vld [vmem:[%s456] sm:$0x1]
        %s458 = sadd.s32 %s227, 29
        %s459 = sld [smem:[#allocation4 + %s458]]
        %s460 = scalar_lea.vmem %s1, %s459
        %v461 = vld [vmem:[%s460] sm:$0x1]
        %s462 = sadd.s32 %s227, 30
        %s463 = sld [smem:[#allocation4 + %s462]]
        %s464 = scalar_lea.vmem %s1, %s463
        %v465 = vld [vmem:[%s464] sm:$0x1]
        %s466 = sadd.s32 %s227, 31
        %s467 = sld [smem:[#allocation4 + %s466]]
        %s468 = scalar_lea.vmem %s1, %s467
        %v469 = vld [vmem:[%s468] sm:$0x1]
        %471 = vrot.lane.b32.xlu0 %v445, 16
        %v472 = vpop.permute.xlu0 %471
        %475 = vrot.lane.b32.xlu0 %v449, 32
        %v476 = vpop.permute.xlu0 %475
        %479 = vrot.lane.b32.xlu0 %v453, 48
        %v480 = vpop.permute.xlu0 %479
        %483 = vrot.lane.b32.xlu0 %v457, 64
        %v484 = vpop.permute.xlu0 %483
        %487 = vrot.lane.b32.xlu0 %v461, 80
        %v488 = vpop.permute.xlu0 %487
        %491 = vrot.lane.b32.xlu0 %v465, 96
        %v492 = vpop.permute.xlu0 %491
        %495 = vrot.lane.b32.xlu0 %v469, 112
        %v496 = vpop.permute.xlu0 %495
        %v498 = vsel %vm287, %v441, %v472
        %v499 = vsel %vm289, %v498, %v476
        %v500 = vsel %vm291, %v499, %v480
        %v501 = vsel %vm293, %v500, %v484
        %v502 = vsel %vm295, %v501, %v488
        %v503 = vsel %vm297, %v502, %v492
        %v504 = vsel %vm299, %v503, %v496
        %505 = vst [vmem:[#allocation2 + $0x18] sm:$0x1] %v504
        %s506 = sadd.s32 %s226, 1
        %s507 = smul.u32 %s506, 128
        %s508 = sld [smem:[#allocation4 + %s507]]
        %s509 = scalar_lea.vmem %s1, %s508
        %v510 = vld [vmem:[%s509] sm:$0x1]
        %s511 = sadd.s32 %s507, 1
        %s512 = sld [smem:[#allocation4 + %s511]]
        %s513 = scalar_lea.vmem %s1, %s512
        %v514 = vld [vmem:[%s513] sm:$0x1]
        %s515 = sadd.s32 %s507, 2
        %s516 = sld [smem:[#allocation4 + %s515]]
        %s517 = scalar_lea.vmem %s1, %s516
        %v518 = vld [vmem:[%s517] sm:$0x1]
        %s519 = sadd.s32 %s507, 3
        %s520 = sld [smem:[#allocation4 + %s519]]
        %s521 = scalar_lea.vmem %s1, %s520
        %v522 = vld [vmem:[%s521] sm:$0x1]
        %s523 = sadd.s32 %s507, 4
        %s524 = sld [smem:[#allocation4 + %s523]]
        %s525 = scalar_lea.vmem %s1, %s524
        %v526 = vld [vmem:[%s525] sm:$0x1]
        %s527 = sadd.s32 %s507, 5
        %s528 = sld [smem:[#allocation4 + %s527]]
        %s529 = scalar_lea.vmem %s1, %s528
        %v530 = vld [vmem:[%s529] sm:$0x1]
        %s531 = sadd.s32 %s507, 6
        %s532 = sld [smem:[#allocation4 + %s531]]
        %s533 = scalar_lea.vmem %s1, %s532
        %v534 = vld [vmem:[%s533] sm:$0x1]
        %s535 = sadd.s32 %s507, 7
        %s536 = sld [smem:[#allocation4 + %s535]]
        %s537 = scalar_lea.vmem %s1, %s536
        %v538 = vld [vmem:[%s537] sm:$0x1]
        %540 = vrot.lane.b32.xlu0 %v514, 16
        %v541 = vpop.permute.xlu0 %540
        %544 = vrot.lane.b32.xlu0 %v518, 32
        %v545 = vpop.permute.xlu0 %544
        %548 = vrot.lane.b32.xlu0 %v522, 48
        %v549 = vpop.permute.xlu0 %548
        %552 = vrot.lane.b32.xlu0 %v526, 64
        %v553 = vpop.permute.xlu0 %552
        %556 = vrot.lane.b32.xlu0 %v530, 80
        %v557 = vpop.permute.xlu0 %556
        %560 = vrot.lane.b32.xlu0 %v534, 96
        %v561 = vpop.permute.xlu0 %560
        %564 = vrot.lane.b32.xlu0 %v538, 112
        %v565 = vpop.permute.xlu0 %564
        %v567 = vsel %vm287, %v510, %v541
        %v568 = vsel %vm289, %v567, %v545
        %v569 = vsel %vm291, %v568, %v549
        %v570 = vsel %vm293, %v569, %v553
        %v571 = vsel %vm295, %v570, %v557
        %v572 = vsel %vm297, %v571, %v561
        %v573 = vsel %vm299, %v572, %v565
        %574 = vst [vmem:[#allocation2 + $0x1] sm:$0x1] %v573
        %s575 = sadd.s32 %s507, 8
        %s576 = sld [smem:[#allocation4 + %s575]]
        %s577 = scalar_lea.vmem %s1, %s576
        %v578 = vld [vmem:[%s577] sm:$0x1]
        %s579 = sadd.s32 %s507, 9
        %s580 = sld [smem:[#allocation4 + %s579]]
        %s581 = scalar_lea.vmem %s1, %s580
        %v582 = vld [vmem:[%s581] sm:$0x1]
        %s583 = sadd.s32 %s507, 10
        %s584 = sld [smem:[#allocation4 + %s583]]
        %s585 = scalar_lea.vmem %s1, %s584
        %v586 = vld [vmem:[%s585] sm:$0x1]
        %s587 = sadd.s32 %s507, 11
        %s588 = sld [smem:[#allocation4 + %s587]]
        %s589 = scalar_lea.vmem %s1, %s588
        %v590 = vld [vmem:[%s589] sm:$0x1]
        %s591 = sadd.s32 %s507, 12
        %s592 = sld [smem:[#allocation4 + %s591]]
        %s593 = scalar_lea.vmem %s1, %s592
        %v594 = vld [vmem:[%s593] sm:$0x1]
        %s595 = sadd.s32 %s507, 13
        %s596 = sld [smem:[#allocation4 + %s595]]
        %s597 = scalar_lea.vmem %s1, %s596
        %v598 = vld [vmem:[%s597] sm:$0x1]
        %s599 = sadd.s32 %s507, 14
        %s600 = sld [smem:[#allocation4 + %s599]]
        %s601 = scalar_lea.vmem %s1, %s600
        %v602 = vld [vmem:[%s601] sm:$0x1]
        %s603 = sadd.s32 %s507, 15
        %s604 = sld [smem:[#allocation4 + %s603]]
        %s605 = scalar_lea.vmem %s1, %s604
        %v606 = vld [vmem:[%s605] sm:$0x1]
        %608 = vrot.lane.b32.xlu0 %v582, 16
        %v609 = vpop.permute.xlu0 %608
        %612 = vrot.lane.b32.xlu0 %v586, 32
        %v613 = vpop.permute.xlu0 %612
        %616 = vrot.lane.b32.xlu0 %v590, 48
        %v617 = vpop.permute.xlu0 %616
        %620 = vrot.lane.b32.xlu0 %v594, 64
        %v621 = vpop.permute.xlu0 %620
        %624 = vrot.lane.b32.xlu0 %v598, 80
        %v625 = vpop.permute.xlu0 %624
        %628 = vrot.lane.b32.xlu0 %v602, 96
        %v629 = vpop.permute.xlu0 %628
        %632 = vrot.lane.b32.xlu0 %v606, 112
        %v633 = vpop.permute.xlu0 %632
        %v635 = vsel %vm287, %v578, %v609
        %v636 = vsel %vm289, %v635, %v613
        %v637 = vsel %vm291, %v636, %v617
        %v638 = vsel %vm293, %v637, %v621
        %v639 = vsel %vm295, %v638, %v625
        %v640 = vsel %vm297, %v639, %v629
        %v641 = vsel %vm299, %v640, %v633
        %642 = vst [vmem:[#allocation2 + $0x9] sm:$0x1] %v641
        %s643 = sadd.s32 %s507, 16
        %s644 = sld [smem:[#allocation4 + %s643]]
        %s645 = scalar_lea.vmem %s1, %s644
        %v646 = vld [vmem:[%s645] sm:$0x1]
        %s647 = sadd.s32 %s507, 17
        %s648 = sld [smem:[#allocation4 + %s647]]
        %s649 = scalar_lea.vmem %s1, %s648
        %v650 = vld [vmem:[%s649] sm:$0x1]
        %s651 = sadd.s32 %s507, 18
        %s652 = sld [smem:[#allocation4 + %s651]]
        %s653 = scalar_lea.vmem %s1, %s652
        %v654 = vld [vmem:[%s653] sm:$0x1]
        %s655 = sadd.s32 %s507, 19
        %s656 = sld [smem:[#allocation4 + %s655]]
        %s657 = scalar_lea.vmem %s1, %s656
        %v658 = vld [vmem:[%s657] sm:$0x1]
        %s659 = sadd.s32 %s507, 20
        %s660 = sld [smem:[#allocation4 + %s659]]
        %s661 = scalar_lea.vmem %s1, %s660
        %v662 = vld [vmem:[%s661] sm:$0x1]
        %s663 = sadd.s32 %s507, 21
        %s664 = sld [smem:[#allocation4 + %s663]]
        %s665 = scalar_lea.vmem %s1, %s664
        %v666 = vld [vmem:[%s665] sm:$0x1]
        %s667 = sadd.s32 %s507, 22
        %s668 = sld [smem:[#allocation4 + %s667]]
        %s669 = scalar_lea.vmem %s1, %s668
        %v670 = vld [vmem:[%s669] sm:$0x1]
        %s671 = sadd.s32 %s507, 23
        %s672 = sld [smem:[#allocation4 + %s671]]
        %s673 = scalar_lea.vmem %s1, %s672
        %v674 = vld [vmem:[%s673] sm:$0x1]
        %676 = vrot.lane.b32.xlu0 %v650, 16
        %v677 = vpop.permute.xlu0 %676
        %680 = vrot.lane.b32.xlu0 %v654, 32
        %v681 = vpop.permute.xlu0 %680
        %684 = vrot.lane.b32.xlu0 %v658, 48
        %v685 = vpop.permute.xlu0 %684
        %688 = vrot.lane.b32.xlu0 %v662, 64
        %v689 = vpop.permute.xlu0 %688
        %692 = vrot.lane.b32.xlu0 %v666, 80
        %v693 = vpop.permute.xlu0 %692
        %696 = vrot.lane.b32.xlu0 %v670, 96
        %v697 = vpop.permute.xlu0 %696
        %700 = vrot.lane.b32.xlu0 %v674, 112
        %v701 = vpop.permute.xlu0 %700
        %v703 = vsel %vm287, %v646, %v677
        %v704 = vsel %vm289, %v703, %v681
        %v705 = vsel %vm291, %v704, %v685
        %v706 = vsel %vm293, %v705, %v689
        %v707 = vsel %vm295, %v706, %v693
        %v708 = vsel %vm297, %v707, %v697
        %v709 = vsel %vm299, %v708, %v701
        %710 = vst [vmem:[#allocation2 + $0x11] sm:$0x1] %v709
        %s711 = sadd.s32 %s507, 24
        %s712 = sld [smem:[#allocation4 + %s711]]
        %s713 = scalar_lea.vmem %s1, %s712
        %v714 = vld [vmem:[%s713] sm:$0x1]
        %s715 = sadd.s32 %s507, 25
        %s716 = sld [smem:[#allocation4 + %s715]]
        %s717 = scalar_lea.vmem %s1, %s716
        %v718 = vld [vmem:[%s717] sm:$0x1]
        %s719 = sadd.s32 %s507, 26
        %s720 = sld [smem:[#allocation4 + %s719]]
        %s721 = scalar_lea.vmem %s1, %s720
        %v722 = vld [vmem:[%s721] sm:$0x1]
        %s723 = sadd.s32 %s507, 27
        %s724 = sld [smem:[#allocation4 + %s723]]
        %s725 = scalar_lea.vmem %s1, %s724
        %v726 = vld [vmem:[%s725] sm:$0x1]
        %s727 = sadd.s32 %s507, 28
        %s728 = sld [smem:[#allocation4 + %s727]]
        %s729 = scalar_lea.vmem %s1, %s728
        %v730 = vld [vmem:[%s729] sm:$0x1]
        %s731 = sadd.s32 %s507, 29
        %s732 = sld [smem:[#allocation4 + %s731]]
        %s733 = scalar_lea.vmem %s1, %s732
        %v734 = vld [vmem:[%s733] sm:$0x1]
        %s735 = sadd.s32 %s507, 30
        %s736 = sld [smem:[#allocation4 + %s735]]
        %s737 = scalar_lea.vmem %s1, %s736
        %v738 = vld [vmem:[%s737] sm:$0x1]
        %s739 = sadd.s32 %s507, 31
        %s740 = sld [smem:[#allocation4 + %s739]]
        %s741 = scalar_lea.vmem %s1, %s740
        %v742 = vld [vmem:[%s741] sm:$0x1]
        %744 = vrot.lane.b32.xlu0 %v718, 16
        %v745 = vpop.permute.xlu0 %744
        %748 = vrot.lane.b32.xlu0 %v722, 32
        %v749 = vpop.permute.xlu0 %748
        %752 = vrot.lane.b32.xlu0 %v726, 48
        %v753 = vpop.permute.xlu0 %752
        %756 = vrot.lane.b32.xlu0 %v730, 64
        %v757 = vpop.permute.xlu0 %756
        %760 = vrot.lane.b32.xlu0 %v734, 80
        %v761 = vpop.permute.xlu0 %760
        %764 = vrot.lane.b32.xlu0 %v738, 96
        %v765 = vpop.permute.xlu0 %764
        %768 = vrot.lane.b32.xlu0 %v742, 112
        %v769 = vpop.permute.xlu0 %768
        %v771 = vsel %vm287, %v714, %v745
        %v772 = vsel %vm289, %v771, %v749
        %v773 = vsel %vm291, %v772, %v753
        %v774 = vsel %vm293, %v773, %v757
        %v775 = vsel %vm295, %v774, %v761
        %v776 = vsel %vm297, %v775, %v765
        %v777 = vsel %vm299, %v776, %v769
        %778 = vst [vmem:[#allocation2 + $0x19] sm:$0x1] %v777
        %s779 = sadd.s32 %s226, 2
        %s780 = smul.u32 %s779, 128
        %s781 = sld [smem:[#allocation4 + %s780]]
        %s782 = scalar_lea.vmem %s1, %s781
        %v783 = vld [vmem:[%s782] sm:$0x1]
        %s784 = sadd.s32 %s780, 1
        %s785 = sld [smem:[#allocation4 + %s784]]
        %s786 = scalar_lea.vmem %s1, %s785
        %v787 = vld [vmem:[%s786] sm:$0x1]
        %s788 = sadd.s32 %s780, 2
        %s789 = sld [smem:[#allocation4 + %s788]]
        %s790 = scalar_lea.vmem %s1, %s789
        %v791 = vld [vmem:[%s790] sm:$0x1]
        %s792 = sadd.s32 %s780, 3
        %s793 = sld [smem:[#allocation4 + %s792]]
        %s794 = scalar_lea.vmem %s1, %s793
        %v795 = vld [vmem:[%s794] sm:$0x1]
        %s796 = sadd.s32 %s780, 4
        %s797 = sld [smem:[#allocation4 + %s796]]
        %s798 = scalar_lea.vmem %s1, %s797
        %v799 = vld [vmem:[%s798] sm:$0x1]
        %s800 = sadd.s32 %s780, 5
        %s801 = sld [smem:[#allocation4 + %s800]]
        %s802 = scalar_lea.vmem %s1, %s801
        %v803 = vld [vmem:[%s802] sm:$0x1]
        %s804 = sadd.s32 %s780, 6
        %s805 = sld [smem:[#allocation4 + %s804]]
        %s806 = scalar_lea.vmem %s1, %s805
        %v807 = vld [vmem:[%s806] sm:$0x1]
        %s808 = sadd.s32 %s780, 7
        %s809 = sld [smem:[#allocation4 + %s808]]
        %s810 = scalar_lea.vmem %s1, %s809
        %v811 = vld [vmem:[%s810] sm:$0x1]
        %813 = vrot.lane.b32.xlu0 %v787, 16
        %v814 = vpop.permute.xlu0 %813
        %817 = vrot.lane.b32.xlu0 %v791, 32
        %v818 = vpop.permute.xlu0 %817
        %821 = vrot.lane.b32.xlu0 %v795, 48
        %v822 = vpop.permute.xlu0 %821
        %825 = vrot.lane.b32.xlu0 %v799, 64
        %v826 = vpop.permute.xlu0 %825
        %829 = vrot.lane.b32.xlu0 %v803, 80
        %v830 = vpop.permute.xlu0 %829
        %833 = vrot.lane.b32.xlu0 %v807, 96
        %v834 = vpop.permute.xlu0 %833
        %837 = vrot.lane.b32.xlu0 %v811, 112
        %v838 = vpop.permute.xlu0 %837
        %v840 = vsel %vm287, %v783, %v814
        %v841 = vsel %vm289, %v840, %v818
        %v842 = vsel %vm291, %v841, %v822
        %v843 = vsel %vm293, %v842, %v826
        %v844 = vsel %vm295, %v843, %v830
        %v845 = vsel %vm297, %v844, %v834
        %v846 = vsel %vm299, %v845, %v838
        %847 = vst [vmem:[#allocation2 + $0x2] sm:$0x1] %v846
        %s848 = sadd.s32 %s780, 8
        %s849 = sld [smem:[#allocation4 + %s848]]
        %s850 = scalar_lea.vmem %s1, %s849
        %v851 = vld [vmem:[%s850] sm:$0x1]
        %s852 = sadd.s32 %s780, 9
        %s853 = sld [smem:[#allocation4 + %s852]]
        %s854 = scalar_lea.vmem %s1, %s853
        %v855 = vld [vmem:[%s854] sm:$0x1]
        %s856 = sadd.s32 %s780, 10
        %s857 = sld [smem:[#allocation4 + %s856]]
        %s858 = scalar_lea.vmem %s1, %s857
        %v859 = vld [vmem:[%s858] sm:$0x1]
        %s860 = sadd.s32 %s780, 11
        %s861 = sld [smem:[#allocation4 + %s860]]
        %s862 = scalar_lea.vmem %s1, %s861
        %v863 = vld [vmem:[%s862] sm:$0x1]
        %s864 = sadd.s32 %s780, 12
        %s865 = sld [smem:[#allocation4 + %s864]]
        %s866 = scalar_lea.vmem %s1, %s865
        %v867 = vld [vmem:[%s866] sm:$0x1]
        %s868 = sadd.s32 %s780, 13
        %s869 = sld [smem:[#allocation4 + %s868]]
        %s870 = scalar_lea.vmem %s1, %s869
        %v871 = vld [vmem:[%s870] sm:$0x1]
        %s872 = sadd.s32 %s780, 14
        %s873 = sld [smem:[#allocation4 + %s872]]
        %s874 = scalar_lea.vmem %s1, %s873
        %v875 = vld [vmem:[%s874] sm:$0x1]
        %s876 = sadd.s32 %s780, 15
        %s877 = sld [smem:[#allocation4 + %s876]]
        %s878 = scalar_lea.vmem %s1, %s877
        %v879 = vld [vmem:[%s878] sm:$0x1]
        %881 = vrot.lane.b32.xlu0 %v855, 16
        %v882 = vpop.permute.xlu0 %881
        %885 = vrot.lane.b32.xlu0 %v859, 32
        %v886 = vpop.permute.xlu0 %885
        %889 = vrot.lane.b32.xlu0 %v863, 48
        %v890 = vpop.permute.xlu0 %889
        %893 = vrot.lane.b32.xlu0 %v867, 64
        %v894 = vpop.permute.xlu0 %893
        %897 = vrot.lane.b32.xlu0 %v871, 80
        %v898 = vpop.permute.xlu0 %897
        %901 = vrot.lane.b32.xlu0 %v875, 96
        %v902 = vpop.permute.xlu0 %901
        %905 = vrot.lane.b32.xlu0 %v879, 112
        %v906 = vpop.permute.xlu0 %905
        %v908 = vsel %vm287, %v851, %v882
        %v909 = vsel %vm289, %v908, %v886
        %v910 = vsel %vm291, %v909, %v890
        %v911 = vsel %vm293, %v910, %v894
        %v912 = vsel %vm295, %v911, %v898
        %v913 = vsel %vm297, %v912, %v902
        %v914 = vsel %vm299, %v913, %v906
        %915 = vst [vmem:[#allocation2 + $0xa] sm:$0x1] %v914
        %s916 = sadd.s32 %s780, 16
        %s917 = sld [smem:[#allocation4 + %s916]]
        %s918 = scalar_lea.vmem %s1, %s917
        %v919 = vld [vmem:[%s918] sm:$0x1]
        %s920 = sadd.s32 %s780, 17
        %s921 = sld [smem:[#allocation4 + %s920]]
        %s922 = scalar_lea.vmem %s1, %s921
        %v923 = vld [vmem:[%s922] sm:$0x1]
        %s924 = sadd.s32 %s780, 18
        %s925 = sld [smem:[#allocation4 + %s924]]
        %s926 = scalar_lea.vmem %s1, %s925
        %v927 = vld [vmem:[%s926] sm:$0x1]
        %s928 = sadd.s32 %s780, 19
        %s929 = sld [smem:[#allocation4 + %s928]]
        %s930 = scalar_lea.vmem %s1, %s929
        %v931 = vld [vmem:[%s930] sm:$0x1]
        %s932 = sadd.s32 %s780, 20
        %s933 = sld [smem:[#allocation4 + %s932]]
        %s934 = scalar_lea.vmem %s1, %s933
        %v935 = vld [vmem:[%s934] sm:$0x1]
        %s936 = sadd.s32 %s780, 21
        %s937 = sld [smem:[#allocation4 + %s936]]
        %s938 = scalar_lea.vmem %s1, %s937
        %v939 = vld [vmem:[%s938] sm:$0x1]
        %s940 = sadd.s32 %s780, 22
        %s941 = sld [smem:[#allocation4 + %s940]]
        %s942 = scalar_lea.vmem %s1, %s941
        %v943 = vld [vmem:[%s942] sm:$0x1]
        %s944 = sadd.s32 %s780, 23
        %s945 = sld [smem:[#allocation4 + %s944]]
        %s946 = scalar_lea.vmem %s1, %s945
        %v947 = vld [vmem:[%s946] sm:$0x1]
        %949 = vrot.lane.b32.xlu0 %v923, 16
        %v950 = vpop.permute.xlu0 %949
        %953 = vrot.lane.b32.xlu0 %v927, 32
        %v954 = vpop.permute.xlu0 %953
        %957 = vrot.lane.b32.xlu0 %v931, 48
        %v958 = vpop.permute.xlu0 %957
        %961 = vrot.lane.b32.xlu0 %v935, 64
        %v962 = vpop.permute.xlu0 %961
        %965 = vrot.lane.b32.xlu0 %v939, 80
        %v966 = vpop.permute.xlu0 %965
        %969 = vrot.lane.b32.xlu0 %v943, 96
        %v970 = vpop.permute.xlu0 %969
        %973 = vrot.lane.b32.xlu0 %v947, 112
        %v974 = vpop.permute.xlu0 %973
        %v976 = vsel %vm287, %v919, %v950
        %v977 = vsel %vm289, %v976, %v954
        %v978 = vsel %vm291, %v977, %v958
        %v979 = vsel %vm293, %v978, %v962
        %v980 = vsel %vm295, %v979, %v966
        %v981 = vsel %vm297, %v980, %v970
        %v982 = vsel %vm299, %v981, %v974
        %983 = vst [vmem:[#allocation2 + $0x12] sm:$0x1] %v982
        %s984 = sadd.s32 %s780, 24
        %s985 = sld [smem:[#allocation4 + %s984]]
        %s986 = scalar_lea.vmem %s1, %s985
        %v987 = vld [vmem:[%s986] sm:$0x1]
        %s988 = sadd.s32 %s780, 25
        %s989 = sld [smem:[#allocation4 + %s988]]
        %s990 = scalar_lea.vmem %s1, %s989
        %v991 = vld [vmem:[%s990] sm:$0x1]
        %s992 = sadd.s32 %s780, 26
        %s993 = sld [smem:[#allocation4 + %s992]]
        %s994 = scalar_lea.vmem %s1, %s993
        %v995 = vld [vmem:[%s994] sm:$0x1]
        %s996 = sadd.s32 %s780, 27
        %s997 = sld [smem:[#allocation4 + %s996]]
        %s998 = scalar_lea.vmem %s1, %s997
        %v999 = vld [vmem:[%s998] sm:$0x1]
        %s1000 = sadd.s32 %s780, 28
        %s1001 = sld [smem:[#allocation4 + %s1000]]
        %s1002 = scalar_lea.vmem %s1, %s1001
        %v1003 = vld [vmem:[%s1002] sm:$0x1]
        %s1004 = sadd.s32 %s780, 29
        %s1005 = sld [smem:[#allocation4 + %s1004]]
        %s1006 = scalar_lea.vmem %s1, %s1005
        %v1007 = vld [vmem:[%s1006] sm:$0x1]
        %s1008 = sadd.s32 %s780, 30
        %s1009 = sld [smem:[#allocation4 + %s1008]]
        %s1010 = scalar_lea.vmem %s1, %s1009
        %v1011 = vld [vmem:[%s1010] sm:$0x1]
        %s1012 = sadd.s32 %s780, 31
        %s1013 = sld [smem:[#allocation4 + %s1012]]
        %s1014 = scalar_lea.vmem %s1, %s1013
        %v1015 = vld [vmem:[%s1014] sm:$0x1]
        %1017 = vrot.lane.b32.xlu0 %v991, 16
        %v1018 = vpop.permute.xlu0 %1017
        %1021 = vrot.lane.b32.xlu0 %v995, 32
        %v1022 = vpop.permute.xlu0 %1021
        %1025 = vrot.lane.b32.xlu0 %v999, 48
        %v1026 = vpop.permute.xlu0 %1025
        %1029 = vrot.lane.b32.xlu0 %v1003, 64
        %v1030 = vpop.permute.xlu0 %1029
        %1033 = vrot.lane.b32.xlu0 %v1007, 80
        %v1034 = vpop.permute.xlu0 %1033
        %1037 = vrot.lane.b32.xlu0 %v1011, 96
        %v1038 = vpop.permute.xlu0 %1037
        %1041 = vrot.lane.b32.xlu0 %v1015, 112
        %v1042 = vpop.permute.xlu0 %1041
        %v1044 = vsel %vm287, %v987, %v1018
        %v1045 = vsel %vm289, %v1044, %v1022
        %v1046 = vsel %vm291, %v1045, %v1026
        %v1047 = vsel %vm293, %v1046, %v1030
        %v1048 = vsel %vm295, %v1047, %v1034
        %v1049 = vsel %vm297, %v1048, %v1038
        %v1050 = vsel %vm299, %v1049, %v1042
        %1051 = vst [vmem:[#allocation2 + $0x1a] sm:$0x1] %v1050
        %s1052 = sadd.s32 %s226, 3
        %s1053 = smul.u32 %s1052, 128
        %s1054 = sld [smem:[#allocation4 + %s1053]]
        %s1055 = scalar_lea.vmem %s1, %s1054
        %v1056 = vld [vmem:[%s1055] sm:$0x1]
        %s1057 = sadd.s32 %s1053, 1
        %s1058 = sld [smem:[#allocation4 + %s1057]]
        %s1059 = scalar_lea.vmem %s1, %s1058
        %v1060 = vld [vmem:[%s1059] sm:$0x1]
        %s1061 = sadd.s32 %s1053, 2
        %s1062 = sld [smem:[#allocation4 + %s1061]]
        %s1063 = scalar_lea.vmem %s1, %s1062
        %v1064 = vld [vmem:[%s1063] sm:$0x1]
        %s1065 = sadd.s32 %s1053, 3
        %s1066 = sld [smem:[#allocation4 + %s1065]]
        %s1067 = scalar_lea.vmem %s1, %s1066
        %v1068 = vld [vmem:[%s1067] sm:$0x1]
        %s1069 = sadd.s32 %s1053, 4
        %s1070 = sld [smem:[#allocation4 + %s1069]]
        %s1071 = scalar_lea.vmem %s1, %s1070
        %v1072 = vld [vmem:[%s1071] sm:$0x1]
        %s1073 = sadd.s32 %s1053, 5
        %s1074 = sld [smem:[#allocation4 + %s1073]]
        %s1075 = scalar_lea.vmem %s1, %s1074
        %v1076 = vld [vmem:[%s1075] sm:$0x1]
        %s1077 = sadd.s32 %s1053, 6
        %s1078 = sld [smem:[#allocation4 + %s1077]]
        %s1079 = scalar_lea.vmem %s1, %s1078
        %v1080 = vld [vmem:[%s1079] sm:$0x1]
        %s1081 = sadd.s32 %s1053, 7
        %s1082 = sld [smem:[#allocation4 + %s1081]]
        %s1083 = scalar_lea.vmem %s1, %s1082
        %v1084 = vld [vmem:[%s1083] sm:$0x1]
        %1086 = vrot.lane.b32.xlu0 %v1060, 16
        %v1087 = vpop.permute.xlu0 %1086
        %1090 = vrot.lane.b32.xlu0 %v1064, 32
        %v1091 = vpop.permute.xlu0 %1090
        %1094 = vrot.lane.b32.xlu0 %v1068, 48
        %v1095 = vpop.permute.xlu0 %1094
        %1098 = vrot.lane.b32.xlu0 %v1072, 64
        %v1099 = vpop.permute.xlu0 %1098
        %1102 = vrot.lane.b32.xlu0 %v1076, 80
        %v1103 = vpop.permute.xlu0 %1102
        %1106 = vrot.lane.b32.xlu0 %v1080, 96
        %v1107 = vpop.permute.xlu0 %1106
        %1110 = vrot.lane.b32.xlu0 %v1084, 112
        %v1111 = vpop.permute.xlu0 %1110
        %v1113 = vsel %vm287, %v1056, %v1087
        %v1114 = vsel %vm289, %v1113, %v1091
        %v1115 = vsel %vm291, %v1114, %v1095
        %v1116 = vsel %vm293, %v1115, %v1099
        %v1117 = vsel %vm295, %v1116, %v1103
        %v1118 = vsel %vm297, %v1117, %v1107
        %v1119 = vsel %vm299, %v1118, %v1111
        %1120 = vst [vmem:[#allocation2 + $0x3] sm:$0x1] %v1119
        %s1121 = sadd.s32 %s1053, 8
        %s1122 = sld [smem:[#allocation4 + %s1121]]
        %s1123 = scalar_lea.vmem %s1, %s1122
        %v1124 = vld [vmem:[%s1123] sm:$0x1]
        %s1125 = sadd.s32 %s1053, 9
        %s1126 = sld [smem:[#allocation4 + %s1125]]
        %s1127 = scalar_lea.vmem %s1, %s1126
        %v1128 = vld [vmem:[%s1127] sm:$0x1]
        %s1129 = sadd.s32 %s1053, 10
        %s1130 = sld [smem:[#allocation4 + %s1129]]
        %s1131 = scalar_lea.vmem %s1, %s1130
        %v1132 = vld [vmem:[%s1131] sm:$0x1]
        %s1133 = sadd.s32 %s1053, 11
        %s1134 = sld [smem:[#allocation4 + %s1133]]
        %s1135 = scalar_lea.vmem %s1, %s1134
        %v1136 = vld [vmem:[%s1135] sm:$0x1]
        %s1137 = sadd.s32 %s1053, 12
        %s1138 = sld [smem:[#allocation4 + %s1137]]
        %s1139 = scalar_lea.vmem %s1, %s1138
        %v1140 = vld [vmem:[%s1139] sm:$0x1]
        %s1141 = sadd.s32 %s1053, 13
        %s1142 = sld [smem:[#allocation4 + %s1141]]
        %s1143 = scalar_lea.vmem %s1, %s1142
        %v1144 = vld [vmem:[%s1143] sm:$0x1]
        %s1145 = sadd.s32 %s1053, 14
        %s1146 = sld [smem:[#allocation4 + %s1145]]
        %s1147 = scalar_lea.vmem %s1, %s1146
        %v1148 = vld [vmem:[%s1147] sm:$0x1]
        %s1149 = sadd.s32 %s1053, 15
        %s1150 = sld [smem:[#allocation4 + %s1149]]
        %s1151 = scalar_lea.vmem %s1, %s1150
        %v1152 = vld [vmem:[%s1151] sm:$0x1]
        %1154 = vrot.lane.b32.xlu0 %v1128, 16
        %v1155 = vpop.permute.xlu0 %1154
        %1158 = vrot.lane.b32.xlu0 %v1132, 32
        %v1159 = vpop.permute.xlu0 %1158
        %1162 = vrot.lane.b32.xlu0 %v1136, 48
        %v1163 = vpop.permute.xlu0 %1162
        %1166 = vrot.lane.b32.xlu0 %v1140, 64
        %v1167 = vpop.permute.xlu0 %1166
        %1170 = vrot.lane.b32.xlu0 %v1144, 80
        %v1171 = vpop.permute.xlu0 %1170
        %1174 = vrot.lane.b32.xlu0 %v1148, 96
        %v1175 = vpop.permute.xlu0 %1174
        %1178 = vrot.lane.b32.xlu0 %v1152, 112
        %v1179 = vpop.permute.xlu0 %1178
        %v1181 = vsel %vm287, %v1124, %v1155
        %v1182 = vsel %vm289, %v1181, %v1159
        %v1183 = vsel %vm291, %v1182, %v1163
        %v1184 = vsel %vm293, %v1183, %v1167
        %v1185 = vsel %vm295, %v1184, %v1171
        %v1186 = vsel %vm297, %v1185, %v1175
        %v1187 = vsel %vm299, %v1186, %v1179
        %1188 = vst [vmem:[#allocation2 + $0xb] sm:$0x1] %v1187
        %s1189 = sadd.s32 %s1053, 16
        %s1190 = sld [smem:[#allocation4 + %s1189]]
        %s1191 = scalar_lea.vmem %s1, %s1190
        %v1192 = vld [vmem:[%s1191] sm:$0x1]
        %s1193 = sadd.s32 %s1053, 17
        %s1194 = sld [smem:[#allocation4 + %s1193]]
        %s1195 = scalar_lea.vmem %s1, %s1194
        %v1196 = vld [vmem:[%s1195] sm:$0x1]
        %s1197 = sadd.s32 %s1053, 18
        %s1198 = sld [smem:[#allocation4 + %s1197]]
        %s1199 = scalar_lea.vmem %s1, %s1198
        %v1200 = vld [vmem:[%s1199] sm:$0x1]
        %s1201 = sadd.s32 %s1053, 19
        %s1202 = sld [smem:[#allocation4 + %s1201]]
        %s1203 = scalar_lea.vmem %s1, %s1202
        %v1204 = vld [vmem:[%s1203] sm:$0x1]
        %s1205 = sadd.s32 %s1053, 20
        %s1206 = sld [smem:[#allocation4 + %s1205]]
        %s1207 = scalar_lea.vmem %s1, %s1206
        %v1208 = vld [vmem:[%s1207] sm:$0x1]
        %s1209 = sadd.s32 %s1053, 21
        %s1210 = sld [smem:[#allocation4 + %s1209]]
        %s1211 = scalar_lea.vmem %s1, %s1210
        %v1212 = vld [vmem:[%s1211] sm:$0x1]
        %s1213 = sadd.s32 %s1053, 22
        %s1214 = sld [smem:[#allocation4 + %s1213]]
        %s1215 = scalar_lea.vmem %s1, %s1214
        %v1216 = vld [vmem:[%s1215] sm:$0x1]
        %s1217 = sadd.s32 %s1053, 23
        %s1218 = sld [smem:[#allocation4 + %s1217]]
        %s1219 = scalar_lea.vmem %s1, %s1218
        %v1220 = vld [vmem:[%s1219] sm:$0x1]
        %1222 = vrot.lane.b32.xlu0 %v1196, 16
        %v1223 = vpop.permute.xlu0 %1222
        %1226 = vrot.lane.b32.xlu0 %v1200, 32
        %v1227 = vpop.permute.xlu0 %1226
        %1230 = vrot.lane.b32.xlu0 %v1204, 48
        %v1231 = vpop.permute.xlu0 %1230
        %1234 = vrot.lane.b32.xlu0 %v1208, 64
        %v1235 = vpop.permute.xlu0 %1234
        %1238 = vrot.lane.b32.xlu0 %v1212, 80
        %v1239 = vpop.permute.xlu0 %1238
        %1242 = vrot.lane.b32.xlu0 %v1216, 96
        %v1243 = vpop.permute.xlu0 %1242
        %1246 = vrot.lane.b32.xlu0 %v1220, 112
        %v1247 = vpop.permute.xlu0 %1246
        %v1249 = vsel %vm287, %v1192, %v1223
        %v1250 = vsel %vm289, %v1249, %v1227
        %v1251 = vsel %vm291, %v1250, %v1231
        %v1252 = vsel %vm293, %v1251, %v1235
        %v1253 = vsel %vm295, %v1252, %v1239
        %v1254 = vsel %vm297, %v1253, %v1243
        %v1255 = vsel %vm299, %v1254, %v1247
        %1256 = vst [vmem:[#allocation2 + $0x13] sm:$0x1] %v1255
        %s1257 = sadd.s32 %s1053, 24
        %s1258 = sld [smem:[#allocation4 + %s1257]]
        %s1259 = scalar_lea.vmem %s1, %s1258
        %v1260 = vld [vmem:[%s1259] sm:$0x1]
        %s1261 = sadd.s32 %s1053, 25
        %s1262 = sld [smem:[#allocation4 + %s1261]]
        %s1263 = scalar_lea.vmem %s1, %s1262
        %v1264 = vld [vmem:[%s1263] sm:$0x1]
        %s1265 = sadd.s32 %s1053, 26
        %s1266 = sld [smem:[#allocation4 + %s1265]]
        %s1267 = scalar_lea.vmem %s1, %s1266
        %v1268 = vld [vmem:[%s1267] sm:$0x1]
        %s1269 = sadd.s32 %s1053, 27
        %s1270 = sld [smem:[#allocation4 + %s1269]]
        %s1271 = scalar_lea.vmem %s1, %s1270
        %v1272 = vld [vmem:[%s1271] sm:$0x1]
        %s1273 = sadd.s32 %s1053, 28
        %s1274 = sld [smem:[#allocation4 + %s1273]]
        %s1275 = scalar_lea.vmem %s1, %s1274
        %v1276 = vld [vmem:[%s1275] sm:$0x1]
        %s1277 = sadd.s32 %s1053, 29
        %s1278 = sld [smem:[#allocation4 + %s1277]]
        %s1279 = scalar_lea.vmem %s1, %s1278
        %v1280 = vld [vmem:[%s1279] sm:$0x1]
        %s1281 = sadd.s32 %s1053, 30
        %s1282 = sld [smem:[#allocation4 + %s1281]]
        %s1283 = scalar_lea.vmem %s1, %s1282
        %v1284 = vld [vmem:[%s1283] sm:$0x1]
        %s1285 = sadd.s32 %s1053, 31
        %s1286 = sld [smem:[#allocation4 + %s1285]]
        %s1287 = scalar_lea.vmem %s1, %s1286
        %v1288 = vld [vmem:[%s1287] sm:$0x1]
        %1290 = vrot.lane.b32.xlu0 %v1264, 16
        %v1291 = vpop.permute.xlu0 %1290
        %1294 = vrot.lane.b32.xlu0 %v1268, 32
        %v1295 = vpop.permute.xlu0 %1294
        %1298 = vrot.lane.b32.xlu0 %v1272, 48
        %v1299 = vpop.permute.xlu0 %1298
        %1302 = vrot.lane.b32.xlu0 %v1276, 64
        %v1303 = vpop.permute.xlu0 %1302
        %1306 = vrot.lane.b32.xlu0 %v1280, 80
        %v1307 = vpop.permute.xlu0 %1306
        %1310 = vrot.lane.b32.xlu0 %v1284, 96
        %v1311 = vpop.permute.xlu0 %1310
        %1314 = vrot.lane.b32.xlu0 %v1288, 112
        %v1315 = vpop.permute.xlu0 %1314
        %v1317 = vsel %vm287, %v1260, %v1291
        %v1318 = vsel %vm289, %v1317, %v1295
        %v1319 = vsel %vm291, %v1318, %v1299
        %v1320 = vsel %vm293, %v1319, %v1303
        %v1321 = vsel %vm295, %v1320, %v1307
        %v1322 = vsel %vm297, %v1321, %v1311
        %v1323 = vsel %vm299, %v1322, %v1315
        %1324 = vst [vmem:[#allocation2 + $0x1b] sm:$0x1] %v1323
        %s1325 = sadd.s32 %s226, 4
        %s1326 = smul.u32 %s1325, 128
        %s1327 = sld [smem:[#allocation4 + %s1326]]
        %s1328 = scalar_lea.vmem %s1, %s1327
        %v1329 = vld [vmem:[%s1328] sm:$0x1]
        %s1330 = sadd.s32 %s1326, 1
        %s1331 = sld [smem:[#allocation4 + %s1330]]
        %s1332 = scalar_lea.vmem %s1, %s1331
        %v1333 = vld [vmem:[%s1332] sm:$0x1]
        %s1334 = sadd.s32 %s1326, 2
        %s1335 = sld [smem:[#allocation4 + %s1334]]
        %s1336 = scalar_lea.vmem %s1, %s1335
        %v1337 = vld [vmem:[%s1336] sm:$0x1]
        %s1338 = sadd.s32 %s1326, 3
        %s1339 = sld [smem:[#allocation4 + %s1338]]
        %s1340 = scalar_lea.vmem %s1, %s1339
        %v1341 = vld [vmem:[%s1340] sm:$0x1]
        %s1342 = sadd.s32 %s1326, 4
        %s1343 = sld [smem:[#allocation4 + %s1342]]
        %s1344 = scalar_lea.vmem %s1, %s1343
        %v1345 = vld [vmem:[%s1344] sm:$0x1]
        %s1346 = sadd.s32 %s1326, 5
        %s1347 = sld [smem:[#allocation4 + %s1346]]
        %s1348 = scalar_lea.vmem %s1, %s1347
        %v1349 = vld [vmem:[%s1348] sm:$0x1]
        %s1350 = sadd.s32 %s1326, 6
        %s1351 = sld [smem:[#allocation4 + %s1350]]
        %s1352 = scalar_lea.vmem %s1, %s1351
        %v1353 = vld [vmem:[%s1352] sm:$0x1]
        %s1354 = sadd.s32 %s1326, 7
        %s1355 = sld [smem:[#allocation4 + %s1354]]
        %s1356 = scalar_lea.vmem %s1, %s1355
        %v1357 = vld [vmem:[%s1356] sm:$0x1]
        %1359 = vrot.lane.b32.xlu0 %v1333, 16
        %v1360 = vpop.permute.xlu0 %1359
        %1363 = vrot.lane.b32.xlu0 %v1337, 32
        %v1364 = vpop.permute.xlu0 %1363
        %1367 = vrot.lane.b32.xlu0 %v1341, 48
        %v1368 = vpop.permute.xlu0 %1367
        %1371 = vrot.lane.b32.xlu0 %v1345, 64
        %v1372 = vpop.permute.xlu0 %1371
        %1375 = vrot.lane.b32.xlu0 %v1349, 80
        %v1376 = vpop.permute.xlu0 %1375
        %1379 = vrot.lane.b32.xlu0 %v1353, 96
        %v1380 = vpop.permute.xlu0 %1379
        %1383 = vrot.lane.b32.xlu0 %v1357, 112
        %v1384 = vpop.permute.xlu0 %1383
        %v1386 = vsel %vm287, %v1329, %v1360
        %v1387 = vsel %vm289, %v1386, %v1364
        %v1388 = vsel %vm291, %v1387, %v1368
        %v1389 = vsel %vm293, %v1388, %v1372
        %v1390 = vsel %vm295, %v1389, %v1376
        %v1391 = vsel %vm297, %v1390, %v1380
        %v1392 = vsel %vm299, %v1391, %v1384
        %1393 = vst [vmem:[#allocation2 + $0x4] sm:$0x1] %v1392
        %s1394 = sadd.s32 %s1326, 8
        %s1395 = sld [smem:[#allocation4 + %s1394]]
        %s1396 = scalar_lea.vmem %s1, %s1395
        %v1397 = vld [vmem:[%s1396] sm:$0x1]
        %s1398 = sadd.s32 %s1326, 9
        %s1399 = sld [smem:[#allocation4 + %s1398]]
        %s1400 = scalar_lea.vmem %s1, %s1399
        %v1401 = vld [vmem:[%s1400] sm:$0x1]
        %s1402 = sadd.s32 %s1326, 10
        %s1403 = sld [smem:[#allocation4 + %s1402]]
        %s1404 = scalar_lea.vmem %s1, %s1403
        %v1405 = vld [vmem:[%s1404] sm:$0x1]
        %s1406 = sadd.s32 %s1326, 11
        %s1407 = sld [smem:[#allocation4 + %s1406]]
        %s1408 = scalar_lea.vmem %s1, %s1407
        %v1409 = vld [vmem:[%s1408] sm:$0x1]
        %s1410 = sadd.s32 %s1326, 12
        %s1411 = sld [smem:[#allocation4 + %s1410]]
        %s1412 = scalar_lea.vmem %s1, %s1411
        %v1413 = vld [vmem:[%s1412] sm:$0x1]
        %s1414 = sadd.s32 %s1326, 13
        %s1415 = sld [smem:[#allocation4 + %s1414]]
        %s1416 = scalar_lea.vmem %s1, %s1415
        %v1417 = vld [vmem:[%s1416] sm:$0x1]
        %s1418 = sadd.s32 %s1326, 14
        %s1419 = sld [smem:[#allocation4 + %s1418]]
        %s1420 = scalar_lea.vmem %s1, %s1419
        %v1421 = vld [vmem:[%s1420] sm:$0x1]
        %s1422 = sadd.s32 %s1326, 15
        %s1423 = sld [smem:[#allocation4 + %s1422]]
        %s1424 = scalar_lea.vmem %s1, %s1423
        %v1425 = vld [vmem:[%s1424] sm:$0x1]
        %1427 = vrot.lane.b32.xlu0 %v1401, 16
        %v1428 = vpop.permute.xlu0 %1427
        %1431 = vrot.lane.b32.xlu0 %v1405, 32
        %v1432 = vpop.permute.xlu0 %1431
        %1435 = vrot.lane.b32.xlu0 %v1409, 48
        %v1436 = vpop.permute.xlu0 %1435
        %1439 = vrot.lane.b32.xlu0 %v1413, 64
        %v1440 = vpop.permute.xlu0 %1439
        %1443 = vrot.lane.b32.xlu0 %v1417, 80
        %v1444 = vpop.permute.xlu0 %1443
        %1447 = vrot.lane.b32.xlu0 %v1421, 96
        %v1448 = vpop.permute.xlu0 %1447
        %1451 = vrot.lane.b32.xlu0 %v1425, 112
        %v1452 = vpop.permute.xlu0 %1451
        %v1454 = vsel %vm287, %v1397, %v1428
        %v1455 = vsel %vm289, %v1454, %v1432
        %v1456 = vsel %vm291, %v1455, %v1436
        %v1457 = vsel %vm293, %v1456, %v1440
        %v1458 = vsel %vm295, %v1457, %v1444
        %v1459 = vsel %vm297, %v1458, %v1448
        %v1460 = vsel %vm299, %v1459, %v1452
        %1461 = vst [vmem:[#allocation2 + $0xc] sm:$0x1] %v1460
        %s1462 = sadd.s32 %s1326, 16
        %s1463 = sld [smem:[#allocation4 + %s1462]]
        %s1464 = scalar_lea.vmem %s1, %s1463
        %v1465 = vld [vmem:[%s1464] sm:$0x1]
        %s1466 = sadd.s32 %s1326, 17
        %s1467 = sld [smem:[#allocation4 + %s1466]]
        %s1468 = scalar_lea.vmem %s1, %s1467
        %v1469 = vld [vmem:[%s1468] sm:$0x1]
        %s1470 = sadd.s32 %s1326, 18
        %s1471 = sld [smem:[#allocation4 + %s1470]]
        %s1472 = scalar_lea.vmem %s1, %s1471
        %v1473 = vld [vmem:[%s1472] sm:$0x1]
        %s1474 = sadd.s32 %s1326, 19
        %s1475 = sld [smem:[#allocation4 + %s1474]]
        %s1476 = scalar_lea.vmem %s1, %s1475
        %v1477 = vld [vmem:[%s1476] sm:$0x1]
        %s1478 = sadd.s32 %s1326, 20
        %s1479 = sld [smem:[#allocation4 + %s1478]]
        %s1480 = scalar_lea.vmem %s1, %s1479
        %v1481 = vld [vmem:[%s1480] sm:$0x1]
        %s1482 = sadd.s32 %s1326, 21
        %s1483 = sld [smem:[#allocation4 + %s1482]]
        %s1484 = scalar_lea.vmem %s1, %s1483
        %v1485 = vld [vmem:[%s1484] sm:$0x1]
        %s1486 = sadd.s32 %s1326, 22
        %s1487 = sld [smem:[#allocation4 + %s1486]]
        %s1488 = scalar_lea.vmem %s1, %s1487
        %v1489 = vld [vmem:[%s1488] sm:$0x1]
        %s1490 = sadd.s32 %s1326, 23
        %s1491 = sld [smem:[#allocation4 + %s1490]]
        %s1492 = scalar_lea.vmem %s1, %s1491
        %v1493 = vld [vmem:[%s1492] sm:$0x1]
        %1495 = vrot.lane.b32.xlu0 %v1469, 16
        %v1496 = vpop.permute.xlu0 %1495
        %1499 = vrot.lane.b32.xlu0 %v1473, 32
        %v1500 = vpop.permute.xlu0 %1499
        %1503 = vrot.lane.b32.xlu0 %v1477, 48
        %v1504 = vpop.permute.xlu0 %1503
        %1507 = vrot.lane.b32.xlu0 %v1481, 64
        %v1508 = vpop.permute.xlu0 %1507
        %1511 = vrot.lane.b32.xlu0 %v1485, 80
        %v1512 = vpop.permute.xlu0 %1511
        %1515 = vrot.lane.b32.xlu0 %v1489, 96
        %v1516 = vpop.permute.xlu0 %1515
        %1519 = vrot.lane.b32.xlu0 %v1493, 112
        %v1520 = vpop.permute.xlu0 %1519
        %v1522 = vsel %vm287, %v1465, %v1496
        %v1523 = vsel %vm289, %v1522, %v1500
        %v1524 = vsel %vm291, %v1523, %v1504
        %v1525 = vsel %vm293, %v1524, %v1508
        %v1526 = vsel %vm295, %v1525, %v1512
        %v1527 = vsel %vm297, %v1526, %v1516
        %v1528 = vsel %vm299, %v1527, %v1520
        %1529 = vst [vmem:[#allocation2 + $0x14] sm:$0x1] %v1528
        %s1530 = sadd.s32 %s1326, 24
        %s1531 = sld [smem:[#allocation4 + %s1530]]
        %s1532 = scalar_lea.vmem %s1, %s1531
        %v1533 = vld [vmem:[%s1532] sm:$0x1]
        %s1534 = sadd.s32 %s1326, 25
        %s1535 = sld [smem:[#allocation4 + %s1534]]
        %s1536 = scalar_lea.vmem %s1, %s1535
        %v1537 = vld [vmem:[%s1536] sm:$0x1]
        %s1538 = sadd.s32 %s1326, 26
        %s1539 = sld [smem:[#allocation4 + %s1538]]
        %s1540 = scalar_lea.vmem %s1, %s1539
        %v1541 = vld [vmem:[%s1540] sm:$0x1]
        %s1542 = sadd.s32 %s1326, 27
        %s1543 = sld [smem:[#allocation4 + %s1542]]
        %s1544 = scalar_lea.vmem %s1, %s1543
        %v1545 = vld [vmem:[%s1544] sm:$0x1]
        %s1546 = sadd.s32 %s1326, 28
        %s1547 = sld [smem:[#allocation4 + %s1546]]
        %s1548 = scalar_lea.vmem %s1, %s1547
        %v1549 = vld [vmem:[%s1548] sm:$0x1]
        %s1550 = sadd.s32 %s1326, 29
        %s1551 = sld [smem:[#allocation4 + %s1550]]
        %s1552 = scalar_lea.vmem %s1, %s1551
        %v1553 = vld [vmem:[%s1552] sm:$0x1]
        %s1554 = sadd.s32 %s1326, 30
        %s1555 = sld [smem:[#allocation4 + %s1554]]
        %s1556 = scalar_lea.vmem %s1, %s1555
        %v1557 = vld [vmem:[%s1556] sm:$0x1]
        %s1558 = sadd.s32 %s1326, 31
        %s1559 = sld [smem:[#allocation4 + %s1558]]
        %s1560 = scalar_lea.vmem %s1, %s1559
        %v1561 = vld [vmem:[%s1560] sm:$0x1]
        %1563 = vrot.lane.b32.xlu0 %v1537, 16
        %v1564 = vpop.permute.xlu0 %1563
        %1567 = vrot.lane.b32.xlu0 %v1541, 32
        %v1568 = vpop.permute.xlu0 %1567
        %1571 = vrot.lane.b32.xlu0 %v1545, 48
        %v1572 = vpop.permute.xlu0 %1571
        %1575 = vrot.lane.b32.xlu0 %v1549, 64
        %v1576 = vpop.permute.xlu0 %1575
        %1579 = vrot.lane.b32.xlu0 %v1553, 80
        %v1580 = vpop.permute.xlu0 %1579
        %1583 = vrot.lane.b32.xlu0 %v1557, 96
        %v1584 = vpop.permute.xlu0 %1583
        %1587 = vrot.lane.b32.xlu0 %v1561, 112
        %v1588 = vpop.permute.xlu0 %1587
        %v1590 = vsel %vm287, %v1533, %v1564
        %v1591 = vsel %vm289, %v1590, %v1568
        %v1592 = vsel %vm291, %v1591, %v1572
        %v1593 = vsel %vm293, %v1592, %v1576
        %v1594 = vsel %vm295, %v1593, %v1580
        %v1595 = vsel %vm297, %v1594, %v1584
        %v1596 = vsel %vm299, %v1595, %v1588
        %1597 = vst [vmem:[#allocation2 + $0x1c] sm:$0x1] %v1596
        %s1598 = sadd.s32 %s226, 5
        %s1599 = smul.u32 %s1598, 128
        %s1600 = sld [smem:[#allocation4 + %s1599]]
        %s1601 = scalar_lea.vmem %s1, %s1600
        %v1602 = vld [vmem:[%s1601] sm:$0x1]
        %s1603 = sadd.s32 %s1599, 1
        %s1604 = sld [smem:[#allocation4 + %s1603]]
        %s1605 = scalar_lea.vmem %s1, %s1604
        %v1606 = vld [vmem:[%s1605] sm:$0x1]
        %s1607 = sadd.s32 %s1599, 2
        %s1608 = sld [smem:[#allocation4 + %s1607]]
        %s1609 = scalar_lea.vmem %s1, %s1608
        %v1610 = vld [vmem:[%s1609] sm:$0x1]
        %s1611 = sadd.s32 %s1599, 3
        %s1612 = sld [smem:[#allocation4 + %s1611]]
        %s1613 = scalar_lea.vmem %s1, %s1612
        %v1614 = vld [vmem:[%s1613] sm:$0x1]
        %s1615 = sadd.s32 %s1599, 4
        %s1616 = sld [smem:[#allocation4 + %s1615]]
        %s1617 = scalar_lea.vmem %s1, %s1616
        %v1618 = vld [vmem:[%s1617] sm:$0x1]
        %s1619 = sadd.s32 %s1599, 5
        %s1620 = sld [smem:[#allocation4 + %s1619]]
        %s1621 = scalar_lea.vmem %s1, %s1620
        %v1622 = vld [vmem:[%s1621] sm:$0x1]
        %s1623 = sadd.s32 %s1599, 6
        %s1624 = sld [smem:[#allocation4 + %s1623]]
        %s1625 = scalar_lea.vmem %s1, %s1624
        %v1626 = vld [vmem:[%s1625] sm:$0x1]
        %s1627 = sadd.s32 %s1599, 7
        %s1628 = sld [smem:[#allocation4 + %s1627]]
        %s1629 = scalar_lea.vmem %s1, %s1628
        %v1630 = vld [vmem:[%s1629] sm:$0x1]
        %1632 = vrot.lane.b32.xlu0 %v1606, 16
        %v1633 = vpop.permute.xlu0 %1632
        %1636 = vrot.lane.b32.xlu0 %v1610, 32
        %v1637 = vpop.permute.xlu0 %1636
        %1640 = vrot.lane.b32.xlu0 %v1614, 48
        %v1641 = vpop.permute.xlu0 %1640
        %1644 = vrot.lane.b32.xlu0 %v1618, 64
        %v1645 = vpop.permute.xlu0 %1644
        %1648 = vrot.lane.b32.xlu0 %v1622, 80
        %v1649 = vpop.permute.xlu0 %1648
        %1652 = vrot.lane.b32.xlu0 %v1626, 96
        %v1653 = vpop.permute.xlu0 %1652
        %1656 = vrot.lane.b32.xlu0 %v1630, 112
        %v1657 = vpop.permute.xlu0 %1656
        %v1659 = vsel %vm287, %v1602, %v1633
        %v1660 = vsel %vm289, %v1659, %v1637
        %v1661 = vsel %vm291, %v1660, %v1641
        %v1662 = vsel %vm293, %v1661, %v1645
        %v1663 = vsel %vm295, %v1662, %v1649
        %v1664 = vsel %vm297, %v1663, %v1653
        %v1665 = vsel %vm299, %v1664, %v1657
        %1666 = vst [vmem:[#allocation2 + $0x5] sm:$0x1] %v1665
        %s1667 = sadd.s32 %s1599, 8
        %s1668 = sld [smem:[#allocation4 + %s1667]]
        %s1669 = scalar_lea.vmem %s1, %s1668
        %v1670 = vld [vmem:[%s1669] sm:$0x1]
        %s1671 = sadd.s32 %s1599, 9
        %s1672 = sld [smem:[#allocation4 + %s1671]]
        %s1673 = scalar_lea.vmem %s1, %s1672
        %v1674 = vld [vmem:[%s1673] sm:$0x1]
        %s1675 = sadd.s32 %s1599, 10
        %s1676 = sld [smem:[#allocation4 + %s1675]]
        %s1677 = scalar_lea.vmem %s1, %s1676
        %v1678 = vld [vmem:[%s1677] sm:$0x1]
        %s1679 = sadd.s32 %s1599, 11
        %s1680 = sld [smem:[#allocation4 + %s1679]]
        %s1681 = scalar_lea.vmem %s1, %s1680
        %v1682 = vld [vmem:[%s1681] sm:$0x1]
        %s1683 = sadd.s32 %s1599, 12
        %s1684 = sld [smem:[#allocation4 + %s1683]]
        %s1685 = scalar_lea.vmem %s1, %s1684
        %v1686 = vld [vmem:[%s1685] sm:$0x1]
        %s1687 = sadd.s32 %s1599, 13
        %s1688 = sld [smem:[#allocation4 + %s1687]]
        %s1689 = scalar_lea.vmem %s1, %s1688
        %v1690 = vld [vmem:[%s1689] sm:$0x1]
        %s1691 = sadd.s32 %s1599, 14
        %s1692 = sld [smem:[#allocation4 + %s1691]]
        %s1693 = scalar_lea.vmem %s1, %s1692
        %v1694 = vld [vmem:[%s1693] sm:$0x1]
        %s1695 = sadd.s32 %s1599, 15
        %s1696 = sld [smem:[#allocation4 + %s1695]]
        %s1697 = scalar_lea.vmem %s1, %s1696
        %v1698 = vld [vmem:[%s1697] sm:$0x1]
        %1700 = vrot.lane.b32.xlu0 %v1674, 16
        %v1701 = vpop.permute.xlu0 %1700
        %1704 = vrot.lane.b32.xlu0 %v1678, 32
        %v1705 = vpop.permute.xlu0 %1704
        %1708 = vrot.lane.b32.xlu0 %v1682, 48
        %v1709 = vpop.permute.xlu0 %1708
        %1712 = vrot.lane.b32.xlu0 %v1686, 64
        %v1713 = vpop.permute.xlu0 %1712
        %1716 = vrot.lane.b32.xlu0 %v1690, 80
        %v1717 = vpop.permute.xlu0 %1716
        %1720 = vrot.lane.b32.xlu0 %v1694, 96
        %v1721 = vpop.permute.xlu0 %1720
        %1724 = vrot.lane.b32.xlu0 %v1698, 112
        %v1725 = vpop.permute.xlu0 %1724
        %v1727 = vsel %vm287, %v1670, %v1701
        %v1728 = vsel %vm289, %v1727, %v1705
        %v1729 = vsel %vm291, %v1728, %v1709
        %v1730 = vsel %vm293, %v1729, %v1713
        %v1731 = vsel %vm295, %v1730, %v1717
        %v1732 = vsel %vm297, %v1731, %v1721
        %v1733 = vsel %vm299, %v1732, %v1725
        %1734 = vst [vmem:[#allocation2 + $0xd] sm:$0x1] %v1733
        %s1735 = sadd.s32 %s1599, 16
        %s1736 = sld [smem:[#allocation4 + %s1735]]
        %s1737 = scalar_lea.vmem %s1, %s1736
        %v1738 = vld [vmem:[%s1737] sm:$0x1]
        %s1739 = sadd.s32 %s1599, 17
        %s1740 = sld [smem:[#allocation4 + %s1739]]
        %s1741 = scalar_lea.vmem %s1, %s1740
        %v1742 = vld [vmem:[%s1741] sm:$0x1]
        %s1743 = sadd.s32 %s1599, 18
        %s1744 = sld [smem:[#allocation4 + %s1743]]
        %s1745 = scalar_lea.vmem %s1, %s1744
        %v1746 = vld [vmem:[%s1745] sm:$0x1]
        %s1747 = sadd.s32 %s1599, 19
        %s1748 = sld [smem:[#allocation4 + %s1747]]
        %s1749 = scalar_lea.vmem %s1, %s1748
        %v1750 = vld [vmem:[%s1749] sm:$0x1]
        %s1751 = sadd.s32 %s1599, 20
        %s1752 = sld [smem:[#allocation4 + %s1751]]
        %s1753 = scalar_lea.vmem %s1, %s1752
        %v1754 = vld [vmem:[%s1753] sm:$0x1]
        %s1755 = sadd.s32 %s1599, 21
        %s1756 = sld [smem:[#allocation4 + %s1755]]
        %s1757 = scalar_lea.vmem %s1, %s1756
        %v1758 = vld [vmem:[%s1757] sm:$0x1]
        %s1759 = sadd.s32 %s1599, 22
        %s1760 = sld [smem:[#allocation4 + %s1759]]
        %s1761 = scalar_lea.vmem %s1, %s1760
        %v1762 = vld [vmem:[%s1761] sm:$0x1]
        %s1763 = sadd.s32 %s1599, 23
        %s1764 = sld [smem:[#allocation4 + %s1763]]
        %s1765 = scalar_lea.vmem %s1, %s1764
        %v1766 = vld [vmem:[%s1765] sm:$0x1]
        %1768 = vrot.lane.b32.xlu0 %v1742, 16
        %v1769 = vpop.permute.xlu0 %1768
        %1772 = vrot.lane.b32.xlu0 %v1746, 32
        %v1773 = vpop.permute.xlu0 %1772
        %1776 = vrot.lane.b32.xlu0 %v1750, 48
        %v1777 = vpop.permute.xlu0 %1776
        %1780 = vrot.lane.b32.xlu0 %v1754, 64
        %v1781 = vpop.permute.xlu0 %1780
        %1784 = vrot.lane.b32.xlu0 %v1758, 80
        %v1785 = vpop.permute.xlu0 %1784
        %1788 = vrot.lane.b32.xlu0 %v1762, 96
        %v1789 = vpop.permute.xlu0 %1788
        %1792 = vrot.lane.b32.xlu0 %v1766, 112
        %v1793 = vpop.permute.xlu0 %1792
        %v1795 = vsel %vm287, %v1738, %v1769
        %v1796 = vsel %vm289, %v1795, %v1773
        %v1797 = vsel %vm291, %v1796, %v1777
        %v1798 = vsel %vm293, %v1797, %v1781
        %v1799 = vsel %vm295, %v1798, %v1785
        %v1800 = vsel %vm297, %v1799, %v1789
        %v1801 = vsel %vm299, %v1800, %v1793
        %1802 = vst [vmem:[#allocation2 + $0x15] sm:$0x1] %v1801
        %s1803 = sadd.s32 %s1599, 24
        %s1804 = sld [smem:[#allocation4 + %s1803]]
        %s1805 = scalar_lea.vmem %s1, %s1804
        %v1806 = vld [vmem:[%s1805] sm:$0x1]
        %s1807 = sadd.s32 %s1599, 25
        %s1808 = sld [smem:[#allocation4 + %s1807]]
        %s1809 = scalar_lea.vmem %s1, %s1808
        %v1810 = vld [vmem:[%s1809] sm:$0x1]
        %s1811 = sadd.s32 %s1599, 26
        %s1812 = sld [smem:[#allocation4 + %s1811]]
        %s1813 = scalar_lea.vmem %s1, %s1812
        %v1814 = vld [vmem:[%s1813] sm:$0x1]
        %s1815 = sadd.s32 %s1599, 27
        %s1816 = sld [smem:[#allocation4 + %s1815]]
        %s1817 = scalar_lea.vmem %s1, %s1816
        %v1818 = vld [vmem:[%s1817] sm:$0x1]
        %s1819 = sadd.s32 %s1599, 28
        %s1820 = sld [smem:[#allocation4 + %s1819]]
        %s1821 = scalar_lea.vmem %s1, %s1820
        %v1822 = vld [vmem:[%s1821] sm:$0x1]
        %s1823 = sadd.s32 %s1599, 29
        %s1824 = sld [smem:[#allocation4 + %s1823]]
        %s1825 = scalar_lea.vmem %s1, %s1824
        %v1826 = vld [vmem:[%s1825] sm:$0x1]
        %s1827 = sadd.s32 %s1599, 30
        %s1828 = sld [smem:[#allocation4 + %s1827]]
        %s1829 = scalar_lea.vmem %s1, %s1828
        %v1830 = vld [vmem:[%s1829] sm:$0x1]
        %s1831 = sadd.s32 %s1599, 31
        %s1832 = sld [smem:[#allocation4 + %s1831]]
        %s1833 = scalar_lea.vmem %s1, %s1832
        %v1834 = vld [vmem:[%s1833] sm:$0x1]
        %1836 = vrot.lane.b32.xlu0 %v1810, 16
        %v1837 = vpop.permute.xlu0 %1836
        %1840 = vrot.lane.b32.xlu0 %v1814, 32
        %v1841 = vpop.permute.xlu0 %1840
        %1844 = vrot.lane.b32.xlu0 %v1818, 48
        %v1845 = vpop.permute.xlu0 %1844
        %1848 = vrot.lane.b32.xlu0 %v1822, 64
        %v1849 = vpop.permute.xlu0 %1848
        %1852 = vrot.lane.b32.xlu0 %v1826, 80
        %v1853 = vpop.permute.xlu0 %1852
        %1856 = vrot.lane.b32.xlu0 %v1830, 96
        %v1857 = vpop.permute.xlu0 %1856
        %1860 = vrot.lane.b32.xlu0 %v1834, 112
        %v1861 = vpop.permute.xlu0 %1860
        %v1863 = vsel %vm287, %v1806, %v1837
        %v1864 = vsel %vm289, %v1863, %v1841
        %v1865 = vsel %vm291, %v1864, %v1845
        %v1866 = vsel %vm293, %v1865, %v1849
        %v1867 = vsel %vm295, %v1866, %v1853
        %v1868 = vsel %vm297, %v1867, %v1857
        %v1869 = vsel %vm299, %v1868, %v1861
        %1870 = vst [vmem:[#allocation2 + $0x1d] sm:$0x1] %v1869
        %s1871 = sadd.s32 %s226, 6
        %s1872 = smul.u32 %s1871, 128
        %s1873 = sld [smem:[#allocation4 + %s1872]]
        %s1874 = scalar_lea.vmem %s1, %s1873
        %v1875 = vld [vmem:[%s1874] sm:$0x1]
        %s1876 = sadd.s32 %s1872, 1
        %s1877 = sld [smem:[#allocation4 + %s1876]]
        %s1878 = scalar_lea.vmem %s1, %s1877
        %v1879 = vld [vmem:[%s1878] sm:$0x1]
        %s1880 = sadd.s32 %s1872, 2
        %s1881 = sld [smem:[#allocation4 + %s1880]]
        %s1882 = scalar_lea.vmem %s1, %s1881
        %v1883 = vld [vmem:[%s1882] sm:$0x1]
        %s1884 = sadd.s32 %s1872, 3
        %s1885 = sld [smem:[#allocation4 + %s1884]]
        %s1886 = scalar_lea.vmem %s1, %s1885
        %v1887 = vld [vmem:[%s1886] sm:$0x1]
        %s1888 = sadd.s32 %s1872, 4
        %s1889 = sld [smem:[#allocation4 + %s1888]]
        %s1890 = scalar_lea.vmem %s1, %s1889
        %v1891 = vld [vmem:[%s1890] sm:$0x1]
        %s1892 = sadd.s32 %s1872, 5
        %s1893 = sld [smem:[#allocation4 + %s1892]]
        %s1894 = scalar_lea.vmem %s1, %s1893
        %v1895 = vld [vmem:[%s1894] sm:$0x1]
        %s1896 = sadd.s32 %s1872, 6
        %s1897 = sld [smem:[#allocation4 + %s1896]]
        %s1898 = scalar_lea.vmem %s1, %s1897
        %v1899 = vld [vmem:[%s1898] sm:$0x1]
        %s1900 = sadd.s32 %s1872, 7
        %s1901 = sld [smem:[#allocation4 + %s1900]]
        %s1902 = scalar_lea.vmem %s1, %s1901
        %v1903 = vld [vmem:[%s1902] sm:$0x1]
        %1905 = vrot.lane.b32.xlu0 %v1879, 16
        %v1906 = vpop.permute.xlu0 %1905
        %1909 = vrot.lane.b32.xlu0 %v1883, 32
        %v1910 = vpop.permute.xlu0 %1909
        %1913 = vrot.lane.b32.xlu0 %v1887, 48
        %v1914 = vpop.permute.xlu0 %1913
        %1917 = vrot.lane.b32.xlu0 %v1891, 64
        %v1918 = vpop.permute.xlu0 %1917
        %1921 = vrot.lane.b32.xlu0 %v1895, 80
        %v1922 = vpop.permute.xlu0 %1921
        %1925 = vrot.lane.b32.xlu0 %v1899, 96
        %v1926 = vpop.permute.xlu0 %1925
        %1929 = vrot.lane.b32.xlu0 %v1903, 112
        %v1930 = vpop.permute.xlu0 %1929
        %v1932 = vsel %vm287, %v1875, %v1906
        %v1933 = vsel %vm289, %v1932, %v1910
        %v1934 = vsel %vm291, %v1933, %v1914
        %v1935 = vsel %vm293, %v1934, %v1918
        %v1936 = vsel %vm295, %v1935, %v1922
        %v1937 = vsel %vm297, %v1936, %v1926
        %v1938 = vsel %vm299, %v1937, %v1930
        %1939 = vst [vmem:[#allocation2 + $0x6] sm:$0x1] %v1938
        %s1940 = sadd.s32 %s1872, 8
        %s1941 = sld [smem:[#allocation4 + %s1940]]
        %s1942 = scalar_lea.vmem %s1, %s1941
        %v1943 = vld [vmem:[%s1942] sm:$0x1]
        %s1944 = sadd.s32 %s1872, 9
        %s1945 = sld [smem:[#allocation4 + %s1944]]
        %s1946 = scalar_lea.vmem %s1, %s1945
        %v1947 = vld [vmem:[%s1946] sm:$0x1]
        %s1948 = sadd.s32 %s1872, 10
        %s1949 = sld [smem:[#allocation4 + %s1948]]
        %s1950 = scalar_lea.vmem %s1, %s1949
        %v1951 = vld [vmem:[%s1950] sm:$0x1]
        %s1952 = sadd.s32 %s1872, 11
        %s1953 = sld [smem:[#allocation4 + %s1952]]
        %s1954 = scalar_lea.vmem %s1, %s1953
        %v1955 = vld [vmem:[%s1954] sm:$0x1]
        %s1956 = sadd.s32 %s1872, 12
        %s1957 = sld [smem:[#allocation4 + %s1956]]
        %s1958 = scalar_lea.vmem %s1, %s1957
        %v1959 = vld [vmem:[%s1958] sm:$0x1]
        %s1960 = sadd.s32 %s1872, 13
        %s1961 = sld [smem:[#allocation4 + %s1960]]
        %s1962 = scalar_lea.vmem %s1, %s1961
        %v1963 = vld [vmem:[%s1962] sm:$0x1]
        %s1964 = sadd.s32 %s1872, 14
        %s1965 = sld [smem:[#allocation4 + %s1964]]
        %s1966 = scalar_lea.vmem %s1, %s1965
        %v1967 = vld [vmem:[%s1966] sm:$0x1]
        %s1968 = sadd.s32 %s1872, 15
        %s1969 = sld [smem:[#allocation4 + %s1968]]
        %s1970 = scalar_lea.vmem %s1, %s1969
        %v1971 = vld [vmem:[%s1970] sm:$0x1]
        %1973 = vrot.lane.b32.xlu0 %v1947, 16
        %v1974 = vpop.permute.xlu0 %1973
        %1977 = vrot.lane.b32.xlu0 %v1951, 32
        %v1978 = vpop.permute.xlu0 %1977
        %1981 = vrot.lane.b32.xlu0 %v1955, 48
        %v1982 = vpop.permute.xlu0 %1981
        %1985 = vrot.lane.b32.xlu0 %v1959, 64
        %v1986 = vpop.permute.xlu0 %1985
        %1989 = vrot.lane.b32.xlu0 %v1963, 80
        %v1990 = vpop.permute.xlu0 %1989
        %1993 = vrot.lane.b32.xlu0 %v1967, 96
        %v1994 = vpop.permute.xlu0 %1993
        %1997 = vrot.lane.b32.xlu0 %v1971, 112
        %v1998 = vpop.permute.xlu0 %1997
        %v2000 = vsel %vm287, %v1943, %v1974
        %v2001 = vsel %vm289, %v2000, %v1978
        %v2002 = vsel %vm291, %v2001, %v1982
        %v2003 = vsel %vm293, %v2002, %v1986
        %v2004 = vsel %vm295, %v2003, %v1990
        %v2005 = vsel %vm297, %v2004, %v1994
        %v2006 = vsel %vm299, %v2005, %v1998
        %2007 = vst [vmem:[#allocation2 + $0xe] sm:$0x1] %v2006
        %s2008 = sadd.s32 %s1872, 16
        %s2009 = sld [smem:[#allocation4 + %s2008]]
        %s2010 = scalar_lea.vmem %s1, %s2009
        %v2011 = vld [vmem:[%s2010] sm:$0x1]
        %s2012 = sadd.s32 %s1872, 17
        %s2013 = sld [smem:[#allocation4 + %s2012]]
        %s2014 = scalar_lea.vmem %s1, %s2013
        %v2015 = vld [vmem:[%s2014] sm:$0x1]
        %s2016 = sadd.s32 %s1872, 18
        %s2017 = sld [smem:[#allocation4 + %s2016]]
        %s2018 = scalar_lea.vmem %s1, %s2017
        %v2019 = vld [vmem:[%s2018] sm:$0x1]
        %s2020 = sadd.s32 %s1872, 19
        %s2021 = sld [smem:[#allocation4 + %s2020]]
        %s2022 = scalar_lea.vmem %s1, %s2021
        %v2023 = vld [vmem:[%s2022] sm:$0x1]
        %s2024 = sadd.s32 %s1872, 20
        %s2025 = sld [smem:[#allocation4 + %s2024]]
        %s2026 = scalar_lea.vmem %s1, %s2025
        %v2027 = vld [vmem:[%s2026] sm:$0x1]
        %s2028 = sadd.s32 %s1872, 21
        %s2029 = sld [smem:[#allocation4 + %s2028]]
        %s2030 = scalar_lea.vmem %s1, %s2029
        %v2031 = vld [vmem:[%s2030] sm:$0x1]
        %s2032 = sadd.s32 %s1872, 22
        %s2033 = sld [smem:[#allocation4 + %s2032]]
        %s2034 = scalar_lea.vmem %s1, %s2033
        %v2035 = vld [vmem:[%s2034] sm:$0x1]
        %s2036 = sadd.s32 %s1872, 23
        %s2037 = sld [smem:[#allocation4 + %s2036]]
        %s2038 = scalar_lea.vmem %s1, %s2037
        %v2039 = vld [vmem:[%s2038] sm:$0x1]
        %2041 = vrot.lane.b32.xlu0 %v2015, 16
        %v2042 = vpop.permute.xlu0 %2041
        %2045 = vrot.lane.b32.xlu0 %v2019, 32
        %v2046 = vpop.permute.xlu0 %2045
        %2049 = vrot.lane.b32.xlu0 %v2023, 48
        %v2050 = vpop.permute.xlu0 %2049
        %2053 = vrot.lane.b32.xlu0 %v2027, 64
        %v2054 = vpop.permute.xlu0 %2053
        %2057 = vrot.lane.b32.xlu0 %v2031, 80
        %v2058 = vpop.permute.xlu0 %2057
        %2061 = vrot.lane.b32.xlu0 %v2035, 96
        %v2062 = vpop.permute.xlu0 %2061
        %2065 = vrot.lane.b32.xlu0 %v2039, 112
        %v2066 = vpop.permute.xlu0 %2065
        %v2068 = vsel %vm287, %v2011, %v2042
        %v2069 = vsel %vm289, %v2068, %v2046
        %v2070 = vsel %vm291, %v2069, %v2050
        %v2071 = vsel %vm293, %v2070, %v2054
        %v2072 = vsel %vm295, %v2071, %v2058
        %v2073 = vsel %vm297, %v2072, %v2062
        %v2074 = vsel %vm299, %v2073, %v2066
        %2075 = vst [vmem:[#allocation2 + $0x16] sm:$0x1] %v2074
        %s2076 = sadd.s32 %s1872, 24
        %s2077 = sld [smem:[#allocation4 + %s2076]]
        %s2078 = scalar_lea.vmem %s1, %s2077
        %v2079 = vld [vmem:[%s2078] sm:$0x1]
        %s2080 = sadd.s32 %s1872, 25
        %s2081 = sld [smem:[#allocation4 + %s2080]]
        %s2082 = scalar_lea.vmem %s1, %s2081
        %v2083 = vld [vmem:[%s2082] sm:$0x1]
        %s2084 = sadd.s32 %s1872, 26
        %s2085 = sld [smem:[#allocation4 + %s2084]]
        %s2086 = scalar_lea.vmem %s1, %s2085
        %v2087 = vld [vmem:[%s2086] sm:$0x1]
        %s2088 = sadd.s32 %s1872, 27
        %s2089 = sld [smem:[#allocation4 + %s2088]]
        %s2090 = scalar_lea.vmem %s1, %s2089
        %v2091 = vld [vmem:[%s2090] sm:$0x1]
        %s2092 = sadd.s32 %s1872, 28
        %s2093 = sld [smem:[#allocation4 + %s2092]]
        %s2094 = scalar_lea.vmem %s1, %s2093
        %v2095 = vld [vmem:[%s2094] sm:$0x1]
        %s2096 = sadd.s32 %s1872, 29
        %s2097 = sld [smem:[#allocation4 + %s2096]]
        %s2098 = scalar_lea.vmem %s1, %s2097
        %v2099 = vld [vmem:[%s2098] sm:$0x1]
        %s2100 = sadd.s32 %s1872, 30
        %s2101 = sld [smem:[#allocation4 + %s2100]]
        %s2102 = scalar_lea.vmem %s1, %s2101
        %v2103 = vld [vmem:[%s2102] sm:$0x1]
        %s2104 = sadd.s32 %s1872, 31
        %s2105 = sld [smem:[#allocation4 + %s2104]]
        %s2106 = scalar_lea.vmem %s1, %s2105
        %v2107 = vld [vmem:[%s2106] sm:$0x1]
        %2109 = vrot.lane.b32.xlu0 %v2083, 16
        %v2110 = vpop.permute.xlu0 %2109
        %2113 = vrot.lane.b32.xlu0 %v2087, 32
        %v2114 = vpop.permute.xlu0 %2113
        %2117 = vrot.lane.b32.xlu0 %v2091, 48
        %v2118 = vpop.permute.xlu0 %2117
        %2121 = vrot.lane.b32.xlu0 %v2095, 64
        %v2122 = vpop.permute.xlu0 %2121
        %2125 = vrot.lane.b32.xlu0 %v2099, 80
        %v2126 = vpop.permute.xlu0 %2125
        %2129 = vrot.lane.b32.xlu0 %v2103, 96
        %v2130 = vpop.permute.xlu0 %2129
        %2133 = vrot.lane.b32.xlu0 %v2107, 112
        %v2134 = vpop.permute.xlu0 %2133
        %v2136 = vsel %vm287, %v2079, %v2110
        %v2137 = vsel %vm289, %v2136, %v2114
        %v2138 = vsel %vm291, %v2137, %v2118
        %v2139 = vsel %vm293, %v2138, %v2122
        %v2140 = vsel %vm295, %v2139, %v2126
        %v2141 = vsel %vm297, %v2140, %v2130
        %v2142 = vsel %vm299, %v2141, %v2134
        %2143 = vst [vmem:[#allocation2 + $0x1e] sm:$0x1] %v2142
        %s2144 = sadd.s32 %s226, 7
        %s2145 = smul.u32 %s2144, 128
        %s2146 = sld [smem:[#allocation4 + %s2145]]
        %s2147 = scalar_lea.vmem %s1, %s2146
        %v2148 = vld [vmem:[%s2147] sm:$0x1]
        %s2149 = sadd.s32 %s2145, 1
        %s2150 = sld [smem:[#allocation4 + %s2149]]
        %s2151 = scalar_lea.vmem %s1, %s2150
        %v2152 = vld [vmem:[%s2151] sm:$0x1]
        %s2153 = sadd.s32 %s2145, 2
        %s2154 = sld [smem:[#allocation4 + %s2153]]
        %s2155 = scalar_lea.vmem %s1, %s2154
        %v2156 = vld [vmem:[%s2155] sm:$0x1]
        %s2157 = sadd.s32 %s2145, 3
        %s2158 = sld [smem:[#allocation4 + %s2157]]
        %s2159 = scalar_lea.vmem %s1, %s2158
        %v2160 = vld [vmem:[%s2159] sm:$0x1]
        %s2161 = sadd.s32 %s2145, 4
        %s2162 = sld [smem:[#allocation4 + %s2161]]
        %s2163 = scalar_lea.vmem %s1, %s2162
        %v2164 = vld [vmem:[%s2163] sm:$0x1]
        %s2165 = sadd.s32 %s2145, 5
        %s2166 = sld [smem:[#allocation4 + %s2165]]
        %s2167 = scalar_lea.vmem %s1, %s2166
        %v2168 = vld [vmem:[%s2167] sm:$0x1]
        %s2169 = sadd.s32 %s2145, 6
        %s2170 = sld [smem:[#allocation4 + %s2169]]
        %s2171 = scalar_lea.vmem %s1, %s2170
        %v2172 = vld [vmem:[%s2171] sm:$0x1]
        %s2173 = sadd.s32 %s2145, 7
        %s2174 = sld [smem:[#allocation4 + %s2173]]
        %s2175 = scalar_lea.vmem %s1, %s2174
        %v2176 = vld [vmem:[%s2175] sm:$0x1]
        %2178 = vrot.lane.b32.xlu0 %v2152, 16
        %v2179 = vpop.permute.xlu0 %2178
        %2182 = vrot.lane.b32.xlu0 %v2156, 32
        %v2183 = vpop.permute.xlu0 %2182
        %2186 = vrot.lane.b32.xlu0 %v2160, 48
        %v2187 = vpop.permute.xlu0 %2186
        %2190 = vrot.lane.b32.xlu0 %v2164, 64
        %v2191 = vpop.permute.xlu0 %2190
        %2194 = vrot.lane.b32.xlu0 %v2168, 80
        %v2195 = vpop.permute.xlu0 %2194
        %2198 = vrot.lane.b32.xlu0 %v2172, 96
        %v2199 = vpop.permute.xlu0 %2198
        %2202 = vrot.lane.b32.xlu0 %v2176, 112
        %v2203 = vpop.permute.xlu0 %2202
        %v2205 = vsel %vm287, %v2148, %v2179
        %v2206 = vsel %vm289, %v2205, %v2183
        %v2207 = vsel %vm291, %v2206, %v2187
        %v2208 = vsel %vm293, %v2207, %v2191
        %v2209 = vsel %vm295, %v2208, %v2195
        %v2210 = vsel %vm297, %v2209, %v2199
        %v2211 = vsel %vm299, %v2210, %v2203
        %2212 = vst [vmem:[#allocation2 + $0x7] sm:$0x1] %v2211
        %s2213 = sadd.s32 %s2145, 8
        %s2214 = sld [smem:[#allocation4 + %s2213]]
        %s2215 = scalar_lea.vmem %s1, %s2214
        %v2216 = vld [vmem:[%s2215] sm:$0x1]
        %s2217 = sadd.s32 %s2145, 9
        %s2218 = sld [smem:[#allocation4 + %s2217]]
        %s2219 = scalar_lea.vmem %s1, %s2218
        %v2220 = vld [vmem:[%s2219] sm:$0x1]
        %s2221 = sadd.s32 %s2145, 10
        %s2222 = sld [smem:[#allocation4 + %s2221]]
        %s2223 = scalar_lea.vmem %s1, %s2222
        %v2224 = vld [vmem:[%s2223] sm:$0x1]
        %s2225 = sadd.s32 %s2145, 11
        %s2226 = sld [smem:[#allocation4 + %s2225]]
        %s2227 = scalar_lea.vmem %s1, %s2226
        %v2228 = vld [vmem:[%s2227] sm:$0x1]
        %s2229 = sadd.s32 %s2145, 12
        %s2230 = sld [smem:[#allocation4 + %s2229]]
        %s2231 = scalar_lea.vmem %s1, %s2230
        %v2232 = vld [vmem:[%s2231] sm:$0x1]
        %s2233 = sadd.s32 %s2145, 13
        %s2234 = sld [smem:[#allocation4 + %s2233]]
        %s2235 = scalar_lea.vmem %s1, %s2234
        %v2236 = vld [vmem:[%s2235] sm:$0x1]
        %s2237 = sadd.s32 %s2145, 14
        %s2238 = sld [smem:[#allocation4 + %s2237]]
        %s2239 = scalar_lea.vmem %s1, %s2238
        %v2240 = vld [vmem:[%s2239] sm:$0x1]
        %s2241 = sadd.s32 %s2145, 15
        %s2242 = sld [smem:[#allocation4 + %s2241]]
        %s2243 = scalar_lea.vmem %s1, %s2242
        %v2244 = vld [vmem:[%s2243] sm:$0x1]
        %2246 = vrot.lane.b32.xlu0 %v2220, 16
        %v2247 = vpop.permute.xlu0 %2246
        %2250 = vrot.lane.b32.xlu0 %v2224, 32
        %v2251 = vpop.permute.xlu0 %2250
        %2254 = vrot.lane.b32.xlu0 %v2228, 48
        %v2255 = vpop.permute.xlu0 %2254
        %2258 = vrot.lane.b32.xlu0 %v2232, 64
        %v2259 = vpop.permute.xlu0 %2258
        %2262 = vrot.lane.b32.xlu0 %v2236, 80
        %v2263 = vpop.permute.xlu0 %2262
        %2266 = vrot.lane.b32.xlu0 %v2240, 96
        %v2267 = vpop.permute.xlu0 %2266
        %2270 = vrot.lane.b32.xlu0 %v2244, 112
        %v2271 = vpop.permute.xlu0 %2270
        %v2273 = vsel %vm287, %v2216, %v2247
        %v2274 = vsel %vm289, %v2273, %v2251
        %v2275 = vsel %vm291, %v2274, %v2255
        %v2276 = vsel %vm293, %v2275, %v2259
        %v2277 = vsel %vm295, %v2276, %v2263
        %v2278 = vsel %vm297, %v2277, %v2267
        %v2279 = vsel %vm299, %v2278, %v2271
        %2280 = vst [vmem:[#allocation2 + $0xf] sm:$0x1] %v2279
        %s2281 = sadd.s32 %s2145, 16
        %s2282 = sld [smem:[#allocation4 + %s2281]]
        %s2283 = scalar_lea.vmem %s1, %s2282
        %v2284 = vld [vmem:[%s2283] sm:$0x1]
        %s2285 = sadd.s32 %s2145, 17
        %s2286 = sld [smem:[#allocation4 + %s2285]]
        %s2287 = scalar_lea.vmem %s1, %s2286
        %v2288 = vld [vmem:[%s2287] sm:$0x1]
        %s2289 = sadd.s32 %s2145, 18
        %s2290 = sld [smem:[#allocation4 + %s2289]]
        %s2291 = scalar_lea.vmem %s1, %s2290
        %v2292 = vld [vmem:[%s2291] sm:$0x1]
        %s2293 = sadd.s32 %s2145, 19
        %s2294 = sld [smem:[#allocation4 + %s2293]]
        %s2295 = scalar_lea.vmem %s1, %s2294
        %v2296 = vld [vmem:[%s2295] sm:$0x1]
        %s2297 = sadd.s32 %s2145, 20
        %s2298 = sld [smem:[#allocation4 + %s2297]]
        %s2299 = scalar_lea.vmem %s1, %s2298
        %v2300 = vld [vmem:[%s2299] sm:$0x1]
        %s2301 = sadd.s32 %s2145, 21
        %s2302 = sld [smem:[#allocation4 + %s2301]]
        %s2303 = scalar_lea.vmem %s1, %s2302
        %v2304 = vld [vmem:[%s2303] sm:$0x1]
        %s2305 = sadd.s32 %s2145, 22
        %s2306 = sld [smem:[#allocation4 + %s2305]]
        %s2307 = scalar_lea.vmem %s1, %s2306
        %v2308 = vld [vmem:[%s2307] sm:$0x1]
        %s2309 = sadd.s32 %s2145, 23
        %s2310 = sld [smem:[#allocation4 + %s2309]]
        %s2311 = scalar_lea.vmem %s1, %s2310
        %v2312 = vld [vmem:[%s2311] sm:$0x1]
        %2314 = vrot.lane.b32.xlu0 %v2288, 16
        %v2315 = vpop.permute.xlu0 %2314
        %2318 = vrot.lane.b32.xlu0 %v2292, 32
        %v2319 = vpop.permute.xlu0 %2318
        %2322 = vrot.lane.b32.xlu0 %v2296, 48
        %v2323 = vpop.permute.xlu0 %2322
        %2326 = vrot.lane.b32.xlu0 %v2300, 64
        %v2327 = vpop.permute.xlu0 %2326
        %2330 = vrot.lane.b32.xlu0 %v2304, 80
        %v2331 = vpop.permute.xlu0 %2330
        %2334 = vrot.lane.b32.xlu0 %v2308, 96
        %v2335 = vpop.permute.xlu0 %2334
        %2338 = vrot.lane.b32.xlu0 %v2312, 112
        %v2339 = vpop.permute.xlu0 %2338
        %v2341 = vsel %vm287, %v2284, %v2315
        %v2342 = vsel %vm289, %v2341, %v2319
        %v2343 = vsel %vm291, %v2342, %v2323
        %v2344 = vsel %vm293, %v2343, %v2327
        %v2345 = vsel %vm295, %v2344, %v2331
        %v2346 = vsel %vm297, %v2345, %v2335
        %v2347 = vsel %vm299, %v2346, %v2339
        %2348 = vst [vmem:[#allocation2 + $0x17] sm:$0x1] %v2347
        %s2349 = sadd.s32 %s2145, 24
        %s2350 = sld [smem:[#allocation4 + %s2349]]
        %s2351 = scalar_lea.vmem %s1, %s2350
        %v2352 = vld [vmem:[%s2351] sm:$0x1]
        %s2353 = sadd.s32 %s2145, 25
        %s2354 = sld [smem:[#allocation4 + %s2353]]
        %s2355 = scalar_lea.vmem %s1, %s2354
        %v2356 = vld [vmem:[%s2355] sm:$0x1]
        %s2357 = sadd.s32 %s2145, 26
        %s2358 = sld [smem:[#allocation4 + %s2357]]
        %s2359 = scalar_lea.vmem %s1, %s2358
        %v2360 = vld [vmem:[%s2359] sm:$0x1]
        %s2361 = sadd.s32 %s2145, 27
        %s2362 = sld [smem:[#allocation4 + %s2361]]
        %s2363 = scalar_lea.vmem %s1, %s2362
        %v2364 = vld [vmem:[%s2363] sm:$0x1]
        %s2365 = sadd.s32 %s2145, 28
        %s2366 = sld [smem:[#allocation4 + %s2365]]
        %s2367 = scalar_lea.vmem %s1, %s2366
        %v2368 = vld [vmem:[%s2367] sm:$0x1]
        %s2369 = sadd.s32 %s2145, 29
        %s2370 = sld [smem:[#allocation4 + %s2369]]
        %s2371 = scalar_lea.vmem %s1, %s2370
        %v2372 = vld [vmem:[%s2371] sm:$0x1]
        %s2373 = sadd.s32 %s2145, 30
        %s2374 = sld [smem:[#allocation4 + %s2373]]
        %s2375 = scalar_lea.vmem %s1, %s2374
        %v2376 = vld [vmem:[%s2375] sm:$0x1]
        %s2377 = sadd.s32 %s2145, 31
        %s2378 = sld [smem:[#allocation4 + %s2377]]
        %s2379 = scalar_lea.vmem %s1, %s2378
        %v2380 = vld [vmem:[%s2379] sm:$0x1]
        %2382 = vrot.lane.b32.xlu0 %v2356, 16
        %v2383 = vpop.permute.xlu0 %2382
        %2386 = vrot.lane.b32.xlu0 %v2360, 32
        %v2387 = vpop.permute.xlu0 %2386
        %2390 = vrot.lane.b32.xlu0 %v2364, 48
        %v2391 = vpop.permute.xlu0 %2390
        %2394 = vrot.lane.b32.xlu0 %v2368, 64
        %v2395 = vpop.permute.xlu0 %2394
        %2398 = vrot.lane.b32.xlu0 %v2372, 80
        %v2399 = vpop.permute.xlu0 %2398
        %2402 = vrot.lane.b32.xlu0 %v2376, 96
        %v2403 = vpop.permute.xlu0 %2402
        %2406 = vrot.lane.b32.xlu0 %v2380, 112
        %v2407 = vpop.permute.xlu0 %2406
        %v2409 = vsel %vm287, %v2352, %v2383
        %v2410 = vsel %vm289, %v2409, %v2387
        %v2411 = vsel %vm291, %v2410, %v2391
        %v2412 = vsel %vm293, %v2411, %v2395
        %v2413 = vsel %vm295, %v2412, %v2399
        %v2414 = vsel %vm297, %v2413, %v2403
        %v2415 = vsel %vm299, %v2414, %v2407
        %2416 = vst [vmem:[#allocation2 + $0x1f] sm:$0x1] %v2415
        %v2417 = vld [vmem:[#allocation2] sm:$0xff]
        %v2418 = vld [vmem:[#allocation2 + $0x8] sm:$0xff]
        %v2419 = vld [vmem:[#allocation2 + $0x10] sm:$0xff]
        %v2420 = vld [vmem:[#allocation2 + $0x18] sm:$0xff]
        %v2421 = vld [vmem:[#allocation6] sm:$0xff]
        %v2422 = vld [vmem:[#allocation6 + $0x8] sm:$0xff]
        %v2423 = vld [vmem:[#allocation6 + $0x10] sm:$0xff]
        %v2424 = vld [vmem:[#allocation6 + $0x18] sm:$0xff]
        %v2425 = vld [vmem:[#allocation6 + $0x20] sm:$0xff]
        %v2426 = vld [vmem:[#allocation6 + $0x28] sm:$0xff]
        %v2427 = vld [vmem:[#allocation6 + $0x30] sm:$0xff]
        %v2428 = vld [vmem:[#allocation6 + $0x38] sm:$0xff]
        %v2429 = vld [vmem:[#allocation6 + $0x40] sm:$0xff]
        %v2430 = vld [vmem:[#allocation6 + $0x48] sm:$0xff]
        %v2431 = vld [vmem:[#allocation6 + $0x50] sm:$0xff]
        %v2432 = vld [vmem:[#allocation6 + $0x58] sm:$0xff]
        %v2433 = vld [vmem:[#allocation6 + $0x60] sm:$0xff]
        %v2434 = vld [vmem:[#allocation6 + $0x68] sm:$0xff]
        %v2435 = vld [vmem:[#allocation6 + $0x70] sm:$0xff]
        %v2436 = vld [vmem:[#allocation6 + $0x78] sm:$0xff]
        %v2437 = vld [vmem:[#allocation6 + $0x80] sm:$0xff]
        %v2438 = vld [vmem:[#allocation6 + $0x88] sm:$0xff]
        %v2439 = vld [vmem:[#allocation6 + $0x90] sm:$0xff]
        %v2440 = vld [vmem:[#allocation6 + $0x98] sm:$0xff]
        %v2441 = vld [vmem:[#allocation6 + $0xa0] sm:$0xff]
        %v2442 = vld [vmem:[#allocation6 + $0xa8] sm:$0xff]
        %v2443 = vld [vmem:[#allocation6 + $0xb0] sm:$0xff]
        %v2444 = vld [vmem:[#allocation6 + $0xb8] sm:$0xff]
        %v2445 = vld [vmem:[#allocation6 + $0xc0] sm:$0xff]
        %v2446 = vld [vmem:[#allocation6 + $0xc8] sm:$0xff]
        %v2447 = vld [vmem:[#allocation6 + $0xd0] sm:$0xff]
        %v2448 = vld [vmem:[#allocation6 + $0xd8] sm:$0xff]
        %v2449 = vld [vmem:[#allocation6 + $0xe0] sm:$0xff]
        %v2450 = vld [vmem:[#allocation6 + $0xe8] sm:$0xff]
        %v2451 = vld [vmem:[#allocation6 + $0xf0] sm:$0xff]
        %v2452 = vld [vmem:[#allocation6 + $0xf8] sm:$0xff]
        %v2453 = vld [vmem:[#allocation6 + $0x100] sm:$0xff]
        %v2454 = vld [vmem:[#allocation6 + $0x108] sm:$0xff]
        %v2455 = vld [vmem:[#allocation6 + $0x110] sm:$0xff]
        %v2456 = vld [vmem:[#allocation6 + $0x118] sm:$0xff]
        %v2457 = vld [vmem:[#allocation6 + $0x120] sm:$0xff]
        %v2458 = vld [vmem:[#allocation6 + $0x128] sm:$0xff]
        %v2459 = vld [vmem:[#allocation6 + $0x130] sm:$0xff]
        %v2460 = vld [vmem:[#allocation6 + $0x138] sm:$0xff]
        %v2461 = vld [vmem:[#allocation6 + $0x140] sm:$0xff]
        %v2462 = vld [vmem:[#allocation6 + $0x148] sm:$0xff]
        %v2463 = vld [vmem:[#allocation6 + $0x150] sm:$0xff]
        %v2464 = vld [vmem:[#allocation6 + $0x158] sm:$0xff]
        %v2465 = vld [vmem:[#allocation6 + $0x160] sm:$0xff]
        %v2466 = vld [vmem:[#allocation6 + $0x168] sm:$0xff]
        %v2467 = vld [vmem:[#allocation6 + $0x170] sm:$0xff]
        %v2468 = vld [vmem:[#allocation6 + $0x178] sm:$0xff]
        %v2469 = vld [vmem:[#allocation6 + $0x180] sm:$0xff]
        %v2470 = vld [vmem:[#allocation6 + $0x188] sm:$0xff]
        %v2471 = vld [vmem:[#allocation6 + $0x190] sm:$0xff]
        %v2472 = vld [vmem:[#allocation6 + $0x198] sm:$0xff]
        %v2473 = vld [vmem:[#allocation6 + $0x1a0] sm:$0xff]
        %v2474 = vld [vmem:[#allocation6 + $0x1a8] sm:$0xff]
        %v2475 = vld [vmem:[#allocation6 + $0x1b0] sm:$0xff]
        %v2476 = vld [vmem:[#allocation6 + $0x1b8] sm:$0xff]
        %v2477 = vld [vmem:[#allocation6 + $0x1c0] sm:$0xff]
        %v2478 = vld [vmem:[#allocation6 + $0x1c8] sm:$0xff]
        %v2479 = vld [vmem:[#allocation6 + $0x1d0] sm:$0xff]
        %v2480 = vld [vmem:[#allocation6 + $0x1d8] sm:$0xff]
        %v2481 = vld [vmem:[#allocation6 + $0x1e0] sm:$0xff]
        %v2482 = vld [vmem:[#allocation6 + $0x1e8] sm:$0xff]
        %v2483 = vld [vmem:[#allocation6 + $0x1f0] sm:$0xff]
        %v2484 = vld [vmem:[#allocation6 + $0x1f8] sm:$0xff]
        %v2485 = vld [vmem:[%s3] sm:$0x1]
        %v2487 = vlaneseq
        %v2488 = vshrl.u32 %v2487, 7
        %v2489 = vsub.s32 0, %v2488
        %v2490 = vrot.slane %v2485, %v2489
        %2492 = vmatprep.subr.mxu0 0.0
        %2493 = vmatpush1.msra.mxu0 %v2421
        %2494 = vmatprep.subr.mxu0 0.0
        %2495 = vmatpush1.msra.mxu0 %v2422
        %2496 = vmatprep.subr.mxu0 0.0
        %2497 = vmatpush1.msra.mxu0 %v2423
        %2498 = vmatprep.subr.mxu0 0.0
        %2499 = vmatpush1.msra.mxu0 %v2424
        %2500 = vmatprep.subr.mxu0 0.0
        %2501 = vmatpush1.msra.mxu0 %v2425
        %2502 = vmatprep.subr.mxu0 0.0
        %2503 = vmatpush1.msra.mxu0 %v2426
        %2504 = vmatprep.subr.mxu0 0.0
        %2505 = vmatpush1.msra.mxu0 %v2427
        %2506 = vmatprep.subr.mxu0 0.0
        %2507 = vmatpush1.msra.mxu0 %v2428
        %2508 = vmatprep.subr.mxu0 0.0
        %2509 = vmatpush1.msra.mxu0 %v2429
        %2510 = vmatprep.subr.mxu0 0.0
        %2511 = vmatpush1.msra.mxu0 %v2430
        %2512 = vmatprep.subr.mxu0 0.0
        %2513 = vmatpush1.msra.mxu0 %v2431
        %2514 = vmatprep.subr.mxu0 0.0
        %2515 = vmatpush1.msra.mxu0 %v2432
        %2516 = vmatprep.subr.mxu0 0.0
        %2517 = vmatpush1.msra.mxu0 %v2433
        %2518 = vmatprep.subr.mxu0 0.0
        %2519 = vmatpush1.msra.mxu0 %v2434
        %2520 = vmatprep.subr.mxu0 0.0
        %2521 = vmatpush1.msra.mxu0 %v2435
        %2522 = vmatprep.subr.mxu0 0.0
        %2523 = vmatpush1.msra.mxu0 %v2436
        %2524 = vmatprep.subr.mxu0 0.0
        %2525 = vmatpush1.msra.mxu0 %v2437
        %2526 = vmatprep.subr.mxu0 0.0
        %2527 = vmatpush1.msra.mxu0 %v2438
        %2528 = vmatprep.subr.mxu0 0.0
        %2529 = vmatpush1.msra.mxu0 %v2439
        %2530 = vmatprep.subr.mxu0 0.0
        %2531 = vmatpush1.msra.mxu0 %v2440
        %2532 = vmatprep.subr.mxu0 0.0
        %2533 = vmatpush1.msra.mxu0 %v2441
        %2534 = vmatprep.subr.mxu0 0.0
        %2535 = vmatpush1.msra.mxu0 %v2442
        %2536 = vmatprep.subr.mxu0 0.0
        %2537 = vmatpush1.msra.mxu0 %v2443
        %2538 = vmatprep.subr.mxu0 0.0
        %2539 = vmatpush1.msra.mxu0 %v2444
        %2540 = vmatprep.subr.mxu0 0.0
        %2541 = vmatpush1.msra.mxu0 %v2445
        %2542 = vmatprep.subr.mxu0 0.0
        %2543 = vmatpush1.msra.mxu0 %v2446
        %2544 = vmatprep.subr.mxu0 0.0
        %2545 = vmatpush1.msra.mxu0 %v2447
        %2546 = vmatprep.subr.mxu0 0.0
        %2547 = vmatpush1.msra.mxu0 %v2448
        %2548 = vmatprep.subr.mxu0 0.0
        %2549 = vmatpush1.msra.mxu0 %v2449
        %2550 = vmatprep.subr.mxu0 0.0
        %2551 = vmatpush1.msra.mxu0 %v2450
        %2552 = vmatprep.subr.mxu0 0.0
        %2553 = vmatpush1.msra.mxu0 %v2451
        %2554 = vmatprep.subr.mxu0 0.0
        %2555 = vmatpush1.msra.mxu0 %v2452
        %2556 = vmatprep.mubr.f32.mxu0 %v2418
        %2557 = vmatmul.mubr.f32.gmra.mrb[0].mxu0 %v2417
        %v2558 = vpop.f32.mrb[0].mxu0
        %v2559 = vadd.f32 %v2490, %v2558
        %v2560 = vpop.f32.mrb[0].mxu0
        %2561 = vdwg.mxu0
        %2562 = vmatprep.subr.mxu0 0.0
        %2563 = vmatpush1.msra.mxu0 %v2453
        %2564 = vmatprep.subr.mxu0 0.0
        %2565 = vmatpush1.msra.mxu0 %v2454
        %2566 = vmatprep.subr.mxu0 0.0
        %2567 = vmatpush1.msra.mxu0 %v2455
        %2568 = vmatprep.subr.mxu0 0.0
        %2569 = vmatpush1.msra.mxu0 %v2456
        %2570 = vmatprep.subr.mxu0 0.0
        %2571 = vmatpush1.msra.mxu0 %v2457
        %2572 = vmatprep.subr.mxu0 0.0
        %2573 = vmatpush1.msra.mxu0 %v2458
        %2574 = vmatprep.subr.mxu0 0.0
        %2575 = vmatpush1.msra.mxu0 %v2459
        %2576 = vmatprep.subr.mxu0 0.0
        %2577 = vmatpush1.msra.mxu0 %v2460
        %2578 = vmatprep.subr.mxu0 0.0
        %2579 = vmatpush1.msra.mxu0 %v2461
        %2580 = vmatprep.subr.mxu0 0.0
        %2581 = vmatpush1.msra.mxu0 %v2462
        %2582 = vmatprep.subr.mxu0 0.0
        %2583 = vmatpush1.msra.mxu0 %v2463
        %2584 = vmatprep.subr.mxu0 0.0
        %2585 = vmatpush1.msra.mxu0 %v2464
        %2586 = vmatprep.subr.mxu0 0.0
        %2587 = vmatpush1.msra.mxu0 %v2465
        %2588 = vmatprep.subr.mxu0 0.0
        %2589 = vmatpush1.msra.mxu0 %v2466
        %2590 = vmatprep.subr.mxu0 0.0
        %2591 = vmatpush1.msra.mxu0 %v2467
        %2592 = vmatprep.subr.mxu0 0.0
        %2593 = vmatpush1.msra.mxu0 %v2468
        %2594 = vmatprep.subr.mxu0 0.0
        %2595 = vmatpush1.msra.mxu0 %v2469
        %2596 = vmatprep.subr.mxu0 0.0
        %2597 = vmatpush1.msra.mxu0 %v2470
        %2598 = vmatprep.subr.mxu0 0.0
        %2599 = vmatpush1.msra.mxu0 %v2471
        %2600 = vmatprep.subr.mxu0 0.0
        %2601 = vmatpush1.msra.mxu0 %v2472
        %2602 = vmatprep.subr.mxu0 0.0
        %2603 = vmatpush1.msra.mxu0 %v2473
        %2604 = vmatprep.subr.mxu0 0.0
        %2605 = vmatpush1.msra.mxu0 %v2474
        %2606 = vmatprep.subr.mxu0 0.0
        %2607 = vmatpush1.msra.mxu0 %v2475
        %2608 = vmatprep.subr.mxu0 0.0
        %2609 = vmatpush1.msra.mxu0 %v2476
        %2610 = vmatprep.subr.mxu0 0.0
        %2611 = vmatpush1.msra.mxu0 %v2477
        %2612 = vmatprep.subr.mxu0 0.0
        %2613 = vmatpush1.msra.mxu0 %v2478
        %2614 = vmatprep.subr.mxu0 0.0
        %2615 = vmatpush1.msra.mxu0 %v2479
        %2616 = vmatprep.subr.mxu0 0.0
        %2617 = vmatpush1.msra.mxu0 %v2480
        %2618 = vmatprep.subr.mxu0 0.0
        %2619 = vmatpush1.msra.mxu0 %v2481
        %2620 = vmatprep.subr.mxu0 0.0
        %2621 = vmatpush1.msra.mxu0 %v2482
        %2622 = vmatprep.subr.mxu0 0.0
        %2623 = vmatpush1.msra.mxu0 %v2483
        %2624 = vmatprep.subr.mxu0 0.0
        %2625 = vmatpush1.msra.mxu0 %v2484
        %2626 = vmatprep.mubr.f32.mxu0 %v2420
        %2627 = vmatmul.mubr.f32.gmra.mrb[0].mxu0 %v2419
        %v2628 = vpop.f32.mrb[0].mxu0
        %v2629 = vadd.f32 %v2559, %v2628
        %v2630 = vpop.f32.mrb[0].mxu0
        %2631 = vdwg.mxu0
        %v2632 = vmax.f32 %v2629, 0.0
        %v2633 = vld [vmem:[%s4] sm:$0x1]
        %v2635 = vlaneseq
        %v2636 = vshrl.u32 %v2635, 7
        %v2637 = vsub.s32 0, %v2636
        %v2638 = vrot.slane %v2633, %v2637
        %v2640 = vmul.f32 %v2632, %v2638
        %2641 = vadd.xlane.f32.xlu0 %v2640
        %v2642 = vpop.xlane.xlu0 %2641
        %s2643 = sld [smem:[#allocation5]]
        %v2644 = vstv %s2643
        %v2645 = vadd.f32 %v2642, %v2644
        %2646 = vst [vmem:[%s225] sm:$0xff] %v2645
        %p2647 = scmp.lt.s32.totalorder %s25, 1
        %s2648 = scalar_select %p2647, %s25, 1
        %s2649 = smul.addr %s2648, 8
        %s2650 = scalar_lea.vmem %s6, %s2649
        // Predicated region
        $region45: #{regression_forward.1} parent=39 // pred_check
          %p2651 = pneg %p148
        $region46: #{regression_forward.1} parent=39 // pred_check_branch
          %2653 = sbr.rel (%p2651) target = $region48
        $region47: #{regression_forward.1} parent=39 // pred_region
          _
        $region48: #{regression_forward.1} parent=39 // pred_fallthru
          _
      $region40: #{regression_forward.1} parent=5 // pred_fallthru
        _
      %p2654 = scmp.le.s32.totalorder 2, %s20
      // Predicated region
      $region49: #{regression_forward.1} parent=5 // pred_check
        %p2655 = pneg %p2654
      $region50: #{regression_forward.1} parent=5 // pred_check_branch
        %2657 = sbr.rel (%p2655) target = $region52
      $region51: #{regression_forward.1} parent=5 // pred_region
        %s2658 = ssub.s32 %s20, 2
        // Predicated region
        $region53: #{regression_forward.1} parent=51 // pred_check
          %p2659 = pneg %p154
        $region54: #{regression_forward.1} parent=51 // pred_check_branch
          %2661 = sbr.rel (%p2659) target = $region56
        $region55: #{regression_forward.1} parent=51 // pred_region
          %p2662 = scmp.lt.s32.totalorder %s26, 1
          %s2663 = scalar_select %p2662, %s26, 1
          %s2664 = smul.addr %s2663, 8
          %s2665 = scalar_lea.vmem %s6, %s2664
        $region56: #{regression_forward.1} parent=51 // pred_fallthru
          _
      $region52: #{regression_forward.1} parent=5 // pred_fallthru
        _
    $region6: #{regression_forward.1} parent=1 // loop_footer
      %s24 = sadd.s32 1, %s20
    $region7: #{regression_forward.1} parent=1 // loop_footer_branch
      %19 = sbr.rel target = $region3
    $region8: #{regression_forward.1} parent=1 // loop_exit
      _
    %2666 = vsyncpa [#allocation7], 1
    %s2667 = scalar_lea.sflag [#allocation7], 1
    %2668 = vsyncpa %s2667, 1

</llo_original>
